<compile_context>
chip_gen: v6e
topology: v6e:2x2x1
jax: 0.10.0
libtpu: 0.0.40
codegen_flags: <defaults>
</compile_context>

<pallas_src>
import functools
import jax
import jax.numpy as jnp
from jax.experimental import pallas as pl
from jax.experimental.pallas import tpu as pltpu  # noqa: F401  (TPU backend)

LN_EPS = 1e-5          # nn.LayerNorm default
LEAKY_SLOPE = 0.2      # nn.LeakyReLU(0.2)


# ----------------------------- in-kernel helpers -----------------------------

def _layernorm(x, g, b):
    mu = jnp.mean(x, axis=-1, keepdims=True)
    xc = x - mu
    var = jnp.mean(xc * xc, axis=-1, keepdims=True)
    return xc * jax.lax.rsqrt(var + LN_EPS) * g + b


def _leaky_relu(x):
    return jnp.where(x > 0, x, LEAKY_SLOPE * x)


def _softmax(x):
    m = jnp.max(x, axis=-1, keepdims=True)
    e = jnp.exp(x - m)
    denom = jnp.sum(e, axis=-1, keepdims=True)
    return e * pl.reciprocal(denom, approx=True)


# ------------------------------- fused Pallas kernel --------------------------

def trans_stack_kernel(depth, n_head, B, S,
                       x_ref,
                       ln1_g_ref, ln1_b_ref, wqkv_ref, bqkv_ref,
                       wof_ref, bof_ref, fc2_w_ref, fc2_b_ref,
                       ln2_g_ref, ln2_b_ref, w1_ref, b1_ref, w2_ref, b2_ref,
                       o_ref):
    """Entire depth-layer transformer stack for the whole (B*S, D) slab."""
    N = B * S
    x = x_ref[...]                                     # (N, D) f32

    for d in range(depth):                             # static unroll over layers
        # ------------- Residual(PreNormDrop(MultiHead_self)) -------------
        xn = _layernorm(x, ln1_g_ref[d], ln1_b_ref[d])

        # fused q/k/v projection: (wq@iq | wk@ik | wv@iv) folded & concatenated
        qkv = jnp.dot(xn, wqkv_ref[d],
                      preferred_element_type=jnp.float32) + bqkv_ref[d]   # (N, 3E)
        E = qkv.shape[-1] // 3
        hd = E // n_head
        scale = 1.0 / (hd ** 0.5)

        qp = qkv[:, 0 * E:1 * E].reshape(B, S, E)
        kp = qkv[:, 1 * E:2 * E].reshape(B, S, E)
        vp = qkv[:, 2 * E:3 * E].reshape(B, S, E)

        head_outs = []
        for h in range(n_head):                        # static head loop, batched over B
            lo, hi = h * hd, (h + 1) * hd
            s = jnp.einsum('bqd,bkd->bqk',
                           qp[:, :, lo:hi] * scale, kp[:, :, lo:hi],
                           preferred_element_type=jnp.float32)            # (B, S, S)
            p = _softmax(s)
            head_outs.append(jnp.einsum('bqk,bkd->bqd', p, vp[:, :, lo:hi],
                                        preferred_element_type=jnp.float32))
        attn = jnp.concatenate(head_outs, axis=-1).reshape(N, E)

        # folded (out_proj -> fc1) + LeakyReLU, then fc2; residual add
        h1 = _leaky_relu(
            jnp.dot(attn, wof_ref[d], preferred_element_type=jnp.float32) + bof_ref[d])
        x = x + jnp.dot(h1, fc2_w_ref[d],
                        preferred_element_type=jnp.float32) + fc2_b_ref[d]

        # --------------- Residual(PreNormDrop(FeedForward)) ---------------
        xn2 = _layernorm(x, ln2_g_ref[d], ln2_b_ref[d])
        hh = _leaky_relu(
            jnp.dot(xn2, w1_ref[d], preferred_element_type=jnp.float32) + b1_ref[d])
        x = x + jnp.dot(hh, w2_ref[d],
                        preferred_element_type=jnp.float32) + b2_ref[d]

    o_ref[...] = x


# ------------------------------ host-side wrapper ------------------------------

_PARAM_ORDER = ('ln1_g', 'ln1_b', 'wqkv', 'bqkv', 'wof', 'bof',
                'fc2_w', 'fc2_b', 'ln2_g', 'ln2_b', 'w1', 'b1', 'w2', 'b2')


def fold_and_stack(params):
    """Fold back-to-back linear layers and stack per-layer params along axis 0."""
    hp = jax.lax.Precision.HIGHEST
    acc = {k: [] for k in _PARAM_ORDER}
    for p_att, p_ff in params:
        wq_f = jnp.dot(p_att['wq'], p_att['iq'], precision=hp)
        wk_f = jnp.dot(p_att['wk'], p_att['ik'], precision=hp)
        wv_f = jnp.dot(p_att['wv'], p_att['iv'], precision=hp)
        acc['ln1_g'].append(p_att['ln_g'])
        acc['ln1_b'].append(p_att['ln_b'])
        acc['wqkv'].append(jnp.concatenate([wq_f, wk_f, wv_f], axis=1))
        acc['bqkv'].append(jnp.concatenate([p_att['bq'], p_att['bk'], p_att['bv']],
                                           axis=1))
        acc['wof'].append(jnp.dot(p_att['ow'], p_att['fc1_w'], precision=hp))
        acc['bof'].append(jnp.dot(p_att['ob'], p_att['fc1_w'], precision=hp)
                          + p_att['fc1_b'])
        acc['fc2_w'].append(p_att['fc2_w'])
        acc['fc2_b'].append(p_att['fc2_b'])
        acc['ln2_g'].append(p_ff['ln_g'])
        acc['ln2_b'].append(p_ff['ln_b'])
        acc['w1'].append(p_ff['w1'])
        acc['b1'].append(p_ff['b1'])
        acc['w2'].append(p_ff['w2'])
        acc['b2'].append(p_ff['b2'])
    return {k: jnp.stack(v) for k, v in acc.items()}


def trans_one_forward(x, stacked, n_head):
    B, S, D = x.shape
    N = B * S
    depth = stacked['wqkv'].shape[0]
    E = stacked['wqkv'].shape[-1] // 3
    Dff = stacked['w1'].shape[-1]
    hd = E // n_head

    args = [stacked[k] for k in _PARAM_ORDER]
    nbytes_params = sum(int(a.size) * a.dtype.itemsize for a in args)

    mm_per_layer = (2 * N * D * 3 * E                       # fused qkv projection
                    + 2 * B * n_head * 2 * S * S * hd       # attention QK^T + PV
                    + 2 * N * E * E                         # folded out_proj->fc1
                    + 2 * N * E * D                         # fc2
                    + 2 * 2 * N * D * Dff)                  # feed-forward MLP
    cost = pl.CostEstimate(
        flops=depth * mm_per_layer,
        transcendentals=depth * (B * n_head * S * S + 4 * N),
        bytes_accessed=nbytes_params + 2 * N * D * 4,
    )

    kernel = functools.partial(trans_stack_kernel, depth, n_head, B, S)
    # Single invocation, no grid: every operand is placed whole in VMEM
    # (total footprint << 16 MiB scoped limit on every TPU generation).
    out = pl.pallas_call(
        kernel,
        out_shape=jax.ShapeDtypeStruct((N, D), x.dtype),
        cost_estimate=cost,
    )(x.reshape(N, D), *args)
    return out.reshape(B, S, D)


# ------------------------------ pure-JAX reference ----------------------------
# Uses the ORIGINAL (unfolded) weights so the folding itself is validated.

def _ref_attn(x, p, n_head):
    xn = _layernorm(x, p['ln_g'], p['ln_b'])
    q = xn @ p['wq']
    k = xn @ p['wk']
    v = xn @ p['wv']
    qp = q @ p['iq'] + p['bq']
    kp = k @ p['ik'] + p['bk']
    vp = v @ p['iv'] + p['bv']
    B, S, E = qp.shape
    hd = E // n_head
    scale = 1.0 / (hd ** 0.5)
    qh = qp.reshape(B, S, n_head, hd).transpose(0, 2, 1, 3) * scale
    kh = kp.reshape(B, S, n_head, hd).transpose(0, 2, 1, 3)
    vh = vp.reshape(B, S, n_head, hd).transpose(0, 2, 1, 3)
    s = jnp.einsum('bhqd,bhkd->bhqk', qh, kh)
    pw = jax.nn.softmax(s, axis=-1)
    a = jnp.einsum('bhqk,bhkd->bhqd', pw, vh).transpose(0, 2, 1, 3).reshape(B, S, E)
    a = a @ p['ow'] + p['ob']
    h1 = _leaky_relu(a @ p['fc1_w'] + p['fc1_b'])
    return x + (h1 @ p['fc2_w'] + p['fc2_b'])


def _ref_ff(x, p):
    xn = _layernorm(x, p['ln_g'], p['ln_b'])
    h = _leaky_relu(xn @ p['w1'] + p['b1'])
    return x + (h @ p['w2'] + p['b2'])


def ref_forward(x, params, n_head):
    for p_att, p_ff in params:
        x = _ref_attn(x, p_att, n_head)
        x = _ref_ff(x, p_ff)
    return x


# ----------------------------------- params -----------------------------------

def init_params(key, depth, D, E, D_ff):
    def nrm(k, shape):
        return jax.random.normal(k, shape, jnp.float32) * 0.05

    params = []
    for d in range(depth):
        keys = jax.random.split(jax.random.fold_in(key, d), 19)
        p_att = dict(
            ln_g=jnp.ones((1, D), jnp.float32), ln_b=jnp.zeros((1, D), jnp.float32),
            wq=nrm(keys[0], (D, E)), wk=nrm(keys[1], (D, E)), wv=nrm(keys[2], (D, E)),
            iq=nrm(keys[3], (E, E)), ik=nrm(keys[4], (E, E)), iv=nrm(keys[5], (E, E)),
            bq=nrm(keys[6], (1, E)), bk=nrm(keys[7], (1, E)), bv=nrm(keys[8], (1, E)),
            ow=nrm(keys[9], (E, E)), ob=nrm(keys[10], (1, E)),
            fc1_w=nrm(keys[11], (E, E)), fc1_b=nrm(keys[12], (1, E)),
            fc2_w=nrm(keys[13], (E, D)), fc2_b=nrm(keys[14], (1, D)),
        )
        p_ff = dict(
            ln_g=jnp.ones((1, D), jnp.float32), ln_b=jnp.zeros((1, D), jnp.float32),
            w1=nrm(keys[15], (D, D_ff)), b1=nrm(keys[16], (1, D_ff)),
            w2=nrm(keys[17], (D_ff, D)), b2=nrm(keys[18], (1, D)),
        )
        params.append((p_att, p_ff))
    return params


# ------------------------------------ main -------------------------------------

if __name__ == "__main__":
    # Trans_one(depth=2, dim=32, head=4, d_q=32, d_v=32); input (B=2, S=8, dim=32).
    # Note: nn.MultiheadAttention(d_v, head) requires d_q == d_v for the PyTorch
    # module to run, so we keep them equal here.
    B, S, D = 2, 8, 32
    depth, n_head, d_q, d_v = 2, 4, 32, 32

    key = jax.random.PRNGKey(0)
    kx, kp = jax.random.split(key)
    x = jax.random.normal(kx, (B, S, D), jnp.float32)
    params = init_params(kp, depth, D, d_v, 2 * D)
    stacked = fold_and_stack(params)

    out = trans_one_forward(x, stacked, n_head)
    out = jax.block_until_ready(out)

    ref = ref_forward(x, params, n_head)
    assert out.shape == (B, S, D)
    # Tolerance 5e-4: covers f32-ULP differences from host-side weight folding
    # and the approximate (EUP) softmax reciprocal; real bugs are >> 1e-3.
    assert jnp.allclose(out, ref, rtol=5e-4, atol=5e-4), "mismatch vs pure-JAX reference"

    print("KERNEL_OK")
</pallas_src>

<mosaic_0001>
module attributes {stable_mosaic.version = 11 : i64} {
  func.func @trans_stack_kernel(%arg0: memref<16x32xf32, #tpu.memory_space<vmem>>, %arg1: memref<2x1x32xf32, #tpu.memory_space<vmem>>, %arg2: memref<2x1x32xf32, #tpu.memory_space<vmem>>, %arg3: memref<2x32x96xf32, #tpu.memory_space<vmem>>, %arg4: memref<2x1x96xf32, #tpu.memory_space<vmem>>, %arg5: memref<2x32x32xf32, #tpu.memory_space<vmem>>, %arg6: memref<2x1x32xf32, #tpu.memory_space<vmem>>, %arg7: memref<2x32x32xf32, #tpu.memory_space<vmem>>, %arg8: memref<2x1x32xf32, #tpu.memory_space<vmem>>, %arg9: memref<2x1x32xf32, #tpu.memory_space<vmem>>, %arg10: memref<2x1x32xf32, #tpu.memory_space<vmem>>, %arg11: memref<2x32x64xf32, #tpu.memory_space<vmem>>, %arg12: memref<2x1x64xf32, #tpu.memory_space<vmem>>, %arg13: memref<2x64x32xf32, #tpu.memory_space<vmem>>, %arg14: memref<2x1x32xf32, #tpu.memory_space<vmem>>, %arg15: memref<16x32xf32, #tpu.memory_space<vmem>>) attributes {dimension_semantics = [], scalar_prefetch = 0 : i64, scratch_operands = 0 : i64, tpu.core_type = #tpu.core_type<tc>} {
    %c0 = arith.constant 0 : index
    %c0_0 = arith.constant 0 : index
    %0 = vector.load %arg0[%c0, %c0_0] : memref<16x32xf32, #tpu.memory_space<vmem>>, vector<16x32xf32>
    %c0_1 = arith.constant 0 : index
    %c0_2 = arith.constant 0 : index
    %c0_3 = arith.constant 0 : index
    %1 = vector.load %arg1[%c0_1, %c0_2, %c0_3] : memref<2x1x32xf32, #tpu.memory_space<vmem>>, vector<1x1x32xf32>
    %2 = vector.shape_cast %1 : vector<1x1x32xf32> to vector<1x32xf32>
    %c0_4 = arith.constant 0 : index
    %c0_5 = arith.constant 0 : index
    %c0_6 = arith.constant 0 : index
    %3 = vector.load %arg2[%c0_4, %c0_5, %c0_6] : memref<2x1x32xf32, #tpu.memory_space<vmem>>, vector<1x1x32xf32>
    %4 = vector.shape_cast %3 : vector<1x1x32xf32> to vector<1x32xf32>
    %cst = arith.constant dense<0.000000e+00> : vector<16xf32>
    %5 = vector.multi_reduction <add>, %0, %cst [1] : vector<16x32xf32> to vector<16xf32>
    %6 = vector.shape_cast %5 : vector<16xf32> to vector<16x1xf32>
    %cst_7 = arith.constant 3.200000e+01 : f32
    %7 = vector.broadcast %cst_7 : f32 to vector<16x1xf32>
    %8 = arith.divf %6, %7 : vector<16x1xf32>
    %9 = vector.broadcast %8 : vector<16x1xf32> to vector<16x32xf32>
    %10 = arith.subf %0, %9 : vector<16x32xf32>
    %11 = arith.mulf %10, %10 : vector<16x32xf32>
    %cst_8 = arith.constant dense<0.000000e+00> : vector<16xf32>
    %12 = vector.multi_reduction <add>, %11, %cst_8 [1] : vector<16x32xf32> to vector<16xf32>
    %13 = vector.shape_cast %12 : vector<16xf32> to vector<16x1xf32>
    %cst_9 = arith.constant 3.200000e+01 : f32
    %14 = vector.broadcast %cst_9 : f32 to vector<16x1xf32>
    %15 = arith.divf %13, %14 : vector<16x1xf32>
    %cst_10 = arith.constant 9.99999974E-6 : f32
    %16 = vector.broadcast %cst_10 : f32 to vector<16x1xf32>
    %17 = arith.addf %15, %16 : vector<16x1xf32>
    %18 = math.rsqrt %17 : vector<16x1xf32>
    %19 = vector.broadcast %18 : vector<16x1xf32> to vector<16x32xf32>
    %20 = arith.mulf %10, %19 : vector<16x32xf32>
    %21 = vector.broadcast %2 : vector<1x32xf32> to vector<16x32xf32>
    %22 = arith.mulf %20, %21 : vector<16x32xf32>
    %23 = vector.broadcast %4 : vector<1x32xf32> to vector<16x32xf32>
    %24 = arith.addf %22, %23 : vector<16x32xf32>
    %c0_11 = arith.constant 0 : index
    %c0_12 = arith.constant 0 : index
    %c0_13 = arith.constant 0 : index
    %25 = vector.load %arg3[%c0_11, %c0_12, %c0_13] : memref<2x32x96xf32, #tpu.memory_space<vmem>>, vector<1x32x96xf32>
    %26 = vector.shape_cast %25 : vector<1x32x96xf32> to vector<32x96xf32>
    %cst_14 = arith.constant dense<0.000000e+00> : vector<16x96xf32>
    %27 = tpu.matmul %24, %26, %cst_14 {dimension_numbers = #tpu.dot_dimension_numbers<[1], [0], [0], [1], [0, 0, 1, 1], [], []>} : vector<16x32xf32>, vector<32x96xf32>, vector<16x96xf32> -> vector<16x96xf32>
    %c0_15 = arith.constant 0 : index
    %c0_16 = arith.constant 0 : index
    %c0_17 = arith.constant 0 : index
    %28 = vector.load %arg4[%c0_15, %c0_16, %c0_17] : memref<2x1x96xf32, #tpu.memory_space<vmem>>, vector<1x1x96xf32>
    %29 = vector.shape_cast %28 : vector<1x1x96xf32> to vector<1x96xf32>
    %30 = vector.broadcast %29 : vector<1x96xf32> to vector<16x96xf32>
    %31 = arith.addf %27, %30 : vector<16x96xf32>
    %32 = vector.extract_strided_slice %31 {offsets = [0, 0], sizes = [16, 32], strides = [1, 1]} : vector<16x96xf32> to vector<16x32xf32>
    %33 = vector.shape_cast %32 : vector<16x32xf32> to vector<2x8x32xf32>
    %34 = vector.extract_strided_slice %31 {offsets = [0, 32], sizes = [16, 32], strides = [1, 1]} : vector<16x96xf32> to vector<16x32xf32>
    %35 = vector.shape_cast %34 : vector<16x32xf32> to vector<2x8x32xf32>
    %36 = vector.extract_strided_slice %31 {offsets = [0, 64], sizes = [16, 32], strides = [1, 1]} : vector<16x96xf32> to vector<16x32xf32>
    %37 = vector.shape_cast %36 : vector<16x32xf32> to vector<2x8x32xf32>
    %38 = vector.extract_strided_slice %33 {offsets = [0, 0, 0], sizes = [2, 8, 8], strides = [1, 1, 1]} : vector<2x8x32xf32> to vector<2x8x8xf32>
    %cst_18 = arith.constant 0.353553385 : f32
    %39 = vector.broadcast %cst_18 : f32 to vector<2x8x8xf32>
    %40 = arith.mulf %38, %39 : vector<2x8x8xf32>
    %41 = vector.extract_strided_slice %35 {offsets = [0, 0, 0], sizes = [2, 8, 8], strides = [1, 1, 1]} : vector<2x8x32xf32> to vector<2x8x8xf32>
    "tpu.trace_start"() <{level = 10 : i32, message = "bqd,bkd->bqk"}> : () -> ()
    %cst_19 = arith.constant dense<0.000000e+00> : vector<2x8x8xf32>
    %42 = tpu.matmul %40, %41, %cst_19 {dimension_numbers = #tpu.dot_dimension_numbers<[2], [2], [1], [1], [0, 0, 0, 1, 1, 1], [0], [0]>} : vector<2x8x8xf32>, vector<2x8x8xf32>, vector<2x8x8xf32> -> vector<2x8x8xf32>
    "tpu.trace_stop"() : () -> ()
    %cst_20 = arith.constant dense<0xFF800000> : vector<2x8xf32>
    %43 = vector.multi_reduction <maximumf>, %42, %cst_20 [2] : vector<2x8x8xf32> to vector<2x8xf32>
    %44 = vector.shape_cast %43 : vector<2x8xf32> to vector<2x8x1xf32>
    %45 = vector.broadcast %44 : vector<2x8x1xf32> to vector<2x8x8xf32>
    %46 = arith.subf %42, %45 : vector<2x8x8xf32>
    %47 = math.exp %46 : vector<2x8x8xf32>
    %cst_21 = arith.constant dense<0.000000e+00> : vector<2x8xf32>
    %48 = vector.multi_reduction <add>, %47, %cst_21 [2] : vector<2x8x8xf32> to vector<2x8xf32>
    %49 = vector.shape_cast %48 : vector<2x8xf32> to vector<2x8x1xf32>
    %50 = tpu.reciprocal %49 {approx = true} : vector<2x8x1xf32> -> vector<2x8x1xf32>
    %51 = vector.broadcast %50 : vector<2x8x1xf32> to vector<2x8x8xf32>
    %52 = arith.mulf %47, %51 : vector<2x8x8xf32>
    %53 = vector.extract_strided_slice %37 {offsets = [0, 0, 0], sizes = [2, 8, 8], strides = [1, 1, 1]} : vector<2x8x32xf32> to vector<2x8x8xf32>
    "tpu.trace_start"() <{level = 10 : i32, message = "bqk,bkd->bqd"}> : () -> ()
    %cst_22 = arith.constant dense<0.000000e+00> : vector<2x8x8xf32>
    %54 = tpu.matmul %52, %53, %cst_22 {dimension_numbers = #tpu.dot_dimension_numbers<[2], [1], [1], [2], [0, 0, 0, 1, 1, 2], [0], [0]>} : vector<2x8x8xf32>, vector<2x8x8xf32>, vector<2x8x8xf32> -> vector<2x8x8xf32>
    "tpu.trace_stop"() : () -> ()
    %55 = vector.extract_strided_slice %33 {offsets = [0, 0, 8], sizes = [2, 8, 8], strides = [1, 1, 1]} : vector<2x8x32xf32> to vector<2x8x8xf32>
    %cst_23 = arith.constant 0.353553385 : f32
    %56 = vector.broadcast %cst_23 : f32 to vector<2x8x8xf32>
    %57 = arith.mulf %55, %56 : vector<2x8x8xf32>
    %58 = vector.extract_strided_slice %35 {offsets = [0, 0, 8], sizes = [2, 8, 8], strides = [1, 1, 1]} : vector<2x8x32xf32> to vector<2x8x8xf32>
    "tpu.trace_start"() <{level = 10 : i32, message = "bqd,bkd->bqk"}> : () -> ()
    %cst_24 = arith.constant dense<0.000000e+00> : vector<2x8x8xf32>
    %59 = tpu.matmul %57, %58, %cst_24 {dimension_numbers = #tpu.dot_dimension_numbers<[2], [2], [1], [1], [0, 0, 0, 1, 1, 1], [0], [0]>} : vector<2x8x8xf32>, vector<2x8x8xf32>, vector<2x8x8xf32> -> vector<2x8x8xf32>
    "tpu.trace_stop"() : () -> ()
    %cst_25 = arith.constant dense<0xFF800000> : vector<2x8xf32>
    %60 = vector.multi_reduction <maximumf>, %59, %cst_25 [2] : vector<2x8x8xf32> to vector<2x8xf32>
    %61 = vector.shape_cast %60 : vector<2x8xf32> to vector<2x8x1xf32>
    %62 = vector.broadcast %61 : vector<2x8x1xf32> to vector<2x8x8xf32>
    %63 = arith.subf %59, %62 : vector<2x8x8xf32>
    %64 = math.exp %63 : vector<2x8x8xf32>
    %cst_26 = arith.constant dense<0.000000e+00> : vector<2x8xf32>
    %65 = vector.multi_reduction <add>, %64, %cst_26 [2] : vector<2x8x8xf32> to vector<2x8xf32>
    %66 = vector.shape_cast %65 : vector<2x8xf32> to vector<2x8x1xf32>
    %67 = tpu.reciprocal %66 {approx = true} : vector<2x8x1xf32> -> vector<2x8x1xf32>
    %68 = vector.broadcast %67 : vector<2x8x1xf32> to vector<2x8x8xf32>
    %69 = arith.mulf %64, %68 : vector<2x8x8xf32>
    %70 = vector.extract_strided_slice %37 {offsets = [0, 0, 8], sizes = [2, 8, 8], strides = [1, 1, 1]} : vector<2x8x32xf32> to vector<2x8x8xf32>
    "tpu.trace_start"() <{level = 10 : i32, message = "bqk,bkd->bqd"}> : () -> ()
    %cst_27 = arith.constant dense<0.000000e+00> : vector<2x8x8xf32>
    %71 = tpu.matmul %69, %70, %cst_27 {dimension_numbers = #tpu.dot_dimension_numbers<[2], [1], [1], [2], [0, 0, 0, 1, 1, 2], [0], [0]>} : vector<2x8x8xf32>, vector<2x8x8xf32>, vector<2x8x8xf32> -> vector<2x8x8xf32>
    "tpu.trace_stop"() : () -> ()
    %72 = vector.extract_strided_slice %33 {offsets = [0, 0, 16], sizes = [2, 8, 8], strides = [1, 1, 1]} : vector<2x8x32xf32> to vector<2x8x8xf32>
    %cst_28 = arith.constant 0.353553385 : f32
    %73 = vector.broadcast %cst_28 : f32 to vector<2x8x8xf32>
    %74 = arith.mulf %72, %73 : vector<2x8x8xf32>
    %75 = vector.extract_strided_slice %35 {offsets = [0, 0, 16], sizes = [2, 8, 8], strides = [1, 1, 1]} : vector<2x8x32xf32> to vector<2x8x8xf32>
    "tpu.trace_start"() <{level = 10 : i32, message = "bqd,bkd->bqk"}> : () -> ()
    %cst_29 = arith.constant dense<0.000000e+00> : vector<2x8x8xf32>
    %76 = tpu.matmul %74, %75, %cst_29 {dimension_numbers = #tpu.dot_dimension_numbers<[2], [2], [1], [1], [0, 0, 0, 1, 1, 1], [0], [0]>} : vector<2x8x8xf32>, vector<2x8x8xf32>, vector<2x8x8xf32> -> vector<2x8x8xf32>
    "tpu.trace_stop"() : () -> ()
    %cst_30 = arith.constant dense<0xFF800000> : vector<2x8xf32>
    %77 = vector.multi_reduction <maximumf>, %76, %cst_30 [2] : vector<2x8x8xf32> to vector<2x8xf32>
    %78 = vector.shape_cast %77 : vector<2x8xf32> to vector<2x8x1xf32>
    %79 = vector.broadcast %78 : vector<2x8x1xf32> to vector<2x8x8xf32>
    %80 = arith.subf %76, %79 : vector<2x8x8xf32>
    %81 = math.exp %80 : vector<2x8x8xf32>
    %cst_31 = arith.constant dense<0.000000e+00> : vector<2x8xf32>
    %82 = vector.multi_reduction <add>, %81, %cst_31 [2] : vector<2x8x8xf32> to vector<2x8xf32>
    %83 = vector.shape_cast %82 : vector<2x8xf32> to vector<2x8x1xf32>
    %84 = tpu.reciprocal %83 {approx = true} : vector<2x8x1xf32> -> vector<2x8x1xf32>
    %85 = vector.broadcast %84 : vector<2x8x1xf32> to vector<2x8x8xf32>
    %86 = arith.mulf %81, %85 : vector<2x8x8xf32>
    %87 = vector.extract_strided_slice %37 {offsets = [0, 0, 16], sizes = [2, 8, 8], strides = [1, 1, 1]} : vector<2x8x32xf32> to vector<2x8x8xf32>
    "tpu.trace_start"() <{level = 10 : i32, message = "bqk,bkd->bqd"}> : () -> ()
    %cst_32 = arith.constant dense<0.000000e+00> : vector<2x8x8xf32>
    %88 = tpu.matmul %86, %87, %cst_32 {dimension_numbers = #tpu.dot_dimension_numbers<[2], [1], [1], [2], [0, 0, 0, 1, 1, 2], [0], [0]>} : vector<2x8x8xf32>, vector<2x8x8xf32>, vector<2x8x8xf32> -> vector<2x8x8xf32>
    "tpu.trace_stop"() : () -> ()
    %89 = vector.extract_strided_slice %33 {offsets = [0, 0, 24], sizes = [2, 8, 8], strides = [1, 1, 1]} : vector<2x8x32xf32> to vector<2x8x8xf32>
    %cst_33 = arith.constant 0.353553385 : f32
    %90 = vector.broadcast %cst_33 : f32 to vector<2x8x8xf32>
    %91 = arith.mulf %89, %90 : vector<2x8x8xf32>
    %92 = vector.extract_strided_slice %35 {offsets = [0, 0, 24], sizes = [2, 8, 8], strides = [1, 1, 1]} : vector<2x8x32xf32> to vector<2x8x8xf32>
    "tpu.trace_start"() <{level = 10 : i32, message = "bqd,bkd->bqk"}> : () -> ()
    %cst_34 = arith.constant dense<0.000000e+00> : vector<2x8x8xf32>
    %93 = tpu.matmul %91, %92, %cst_34 {dimension_numbers = #tpu.dot_dimension_numbers<[2], [2], [1], [1], [0, 0, 0, 1, 1, 1], [0], [0]>} : vector<2x8x8xf32>, vector<2x8x8xf32>, vector<2x8x8xf32> -> vector<2x8x8xf32>
    "tpu.trace_stop"() : () -> ()
    %cst_35 = arith.constant dense<0xFF800000> : vector<2x8xf32>
    %94 = vector.multi_reduction <maximumf>, %93, %cst_35 [2] : vector<2x8x8xf32> to vector<2x8xf32>
    %95 = vector.shape_cast %94 : vector<2x8xf32> to vector<2x8x1xf32>
    %96 = vector.broadcast %95 : vector<2x8x1xf32> to vector<2x8x8xf32>
    %97 = arith.subf %93, %96 : vector<2x8x8xf32>
    %98 = math.exp %97 : vector<2x8x8xf32>
    %cst_36 = arith.constant dense<0.000000e+00> : vector<2x8xf32>
    %99 = vector.multi_reduction <add>, %98, %cst_36 [2] : vector<2x8x8xf32> to vector<2x8xf32>
    %100 = vector.shape_cast %99 : vector<2x8xf32> to vector<2x8x1xf32>
    %101 = tpu.reciprocal %100 {approx = true} : vector<2x8x1xf32> -> vector<2x8x1xf32>
    %102 = vector.broadcast %101 : vector<2x8x1xf32> to vector<2x8x8xf32>
    %103 = arith.mulf %98, %102 : vector<2x8x8xf32>
    %104 = vector.extract_strided_slice %37 {offsets = [0, 0, 24], sizes = [2, 8, 8], strides = [1, 1, 1]} : vector<2x8x32xf32> to vector<2x8x8xf32>
    "tpu.trace_start"() <{level = 10 : i32, message = "bqk,bkd->bqd"}> : () -> ()
    %cst_37 = arith.constant dense<0.000000e+00> : vector<2x8x8xf32>
    %105 = tpu.matmul %103, %104, %cst_37 {dimension_numbers = #tpu.dot_dimension_numbers<[2], [1], [1], [2], [0, 0, 0, 1, 1, 2], [0], [0]>} : vector<2x8x8xf32>, vector<2x8x8xf32>, vector<2x8x8xf32> -> vector<2x8x8xf32>
    "tpu.trace_stop"() : () -> ()
    %106 = tpu.concatenate %54, %71, %88, %105 in 2 : vector<2x8x8xf32>, vector<2x8x8xf32>, vector<2x8x8xf32>, vector<2x8x8xf32> -> vector<2x8x32xf32>
    %107 = vector.shape_cast %106 : vector<2x8x32xf32> to vector<16x32xf32>
    %c0_38 = arith.constant 0 : index
    %c0_39 = arith.constant 0 : index
    %c0_40 = arith.constant 0 : index
    %108 = vector.load %arg5[%c0_38, %c0_39, %c0_40] : memref<2x32x32xf32, #tpu.memory_space<vmem>>, vector<1x32x32xf32>
    %109 = vector.shape_cast %108 : vector<1x32x32xf32> to vector<32x32xf32>
    %cst_41 = arith.constant dense<0.000000e+00> : vector<16x32xf32>
    %110 = tpu.matmul %107, %109, %cst_41 {dimension_numbers = #tpu.dot_dimension_numbers<[1], [0], [0], [1], [0, 0, 1, 1], [], []>} : vector<16x32xf32>, vector<32x32xf32>, vector<16x32xf32> -> vector<16x32xf32>
    %c0_42 = arith.constant 0 : index
    %c0_43 = arith.constant 0 : index
    %c0_44 = arith.constant 0 : index
    %111 = vector.load %arg6[%c0_42, %c0_43, %c0_44] : memref<2x1x32xf32, #tpu.memory_space<vmem>>, vector<1x1x32xf32>
    %112 = vector.shape_cast %111 : vector<1x1x32xf32> to vector<1x32xf32>
    %113 = vector.broadcast %112 : vector<1x32xf32> to vector<16x32xf32>
    %114 = arith.addf %110, %113 : vector<16x32xf32>
    %cst_45 = arith.constant 0.000000e+00 : f32
    %115 = vector.broadcast %cst_45 : f32 to vector<16x32xf32>
    %116 = arith.cmpf ogt, %114, %115 : vector<16x32xf32>
    %cst_46 = arith.constant 2.000000e-01 : f32
    %117 = vector.broadcast %cst_46 : f32 to vector<16x32xf32>
    %118 = arith.mulf %117, %114 : vector<16x32xf32>
    %119 = arith.select %116, %114, %118 : vector<16x32xi1>, vector<16x32xf32>
    %c0_47 = arith.constant 0 : index
    %c0_48 = arith.constant 0 : index
    %c0_49 = arith.constant 0 : index
    %120 = vector.load %arg7[%c0_47, %c0_48, %c0_49] : memref<2x32x32xf32, #tpu.memory_space<vmem>>, vector<1x32x32xf32>
    %121 = vector.shape_cast %120 : vector<1x32x32xf32> to vector<32x32xf32>
    %cst_50 = arith.constant dense<0.000000e+00> : vector<16x32xf32>
    %122 = tpu.matmul %119, %121, %cst_50 {dimension_numbers = #tpu.dot_dimension_numbers<[1], [0], [0], [1], [0, 0, 1, 1], [], []>} : vector<16x32xf32>, vector<32x32xf32>, vector<16x32xf32> -> vector<16x32xf32>
    %123 = arith.addf %0, %122 : vector<16x32xf32>
    %c0_51 = arith.constant 0 : index
    %c0_52 = arith.constant 0 : index
    %c0_53 = arith.constant 0 : index
    %124 = vector.load %arg8[%c0_51, %c0_52, %c0_53] : memref<2x1x32xf32, #tpu.memory_space<vmem>>, vector<1x1x32xf32>
    %125 = vector.shape_cast %124 : vector<1x1x32xf32> to vector<1x32xf32>
    %126 = vector.broadcast %125 : vector<1x32xf32> to vector<16x32xf32>
    %127 = arith.addf %123, %126 : vector<16x32xf32>
    %c0_54 = arith.constant 0 : index
    %c0_55 = arith.constant 0 : index
    %c0_56 = arith.constant 0 : index
    %128 = vector.load %arg9[%c0_54, %c0_55, %c0_56] : memref<2x1x32xf32, #tpu.memory_space<vmem>>, vector<1x1x32xf32>
    %129 = vector.shape_cast %128 : vector<1x1x32xf32> to vector<1x32xf32>
    %c0_57 = arith.constant 0 : index
    %c0_58 = arith.constant 0 : index
    %c0_59 = arith.constant 0 : index
    %130 = vector.load %arg10[%c0_57, %c0_58, %c0_59] : memref<2x1x32xf32, #tpu.memory_space<vmem>>, vector<1x1x32xf32>
    %131 = vector.shape_cast %130 : vector<1x1x32xf32> to vector<1x32xf32>
    %cst_60 = arith.constant dense<0.000000e+00> : vector<16xf32>
    %132 = vector.multi_reduction <add>, %127, %cst_60 [1] : vector<16x32xf32> to vector<16xf32>
    %133 = vector.shape_cast %132 : vector<16xf32> to vector<16x1xf32>
    %cst_61 = arith.constant 3.200000e+01 : f32
    %134 = vector.broadcast %cst_61 : f32 to vector<16x1xf32>
    %135 = arith.divf %133, %134 : vector<16x1xf32>
    %136 = vector.broadcast %135 : vector<16x1xf32> to vector<16x32xf32>
    %137 = arith.subf %127, %136 : vector<16x32xf32>
    %138 = arith.mulf %137, %137 : vector<16x32xf32>
    %cst_62 = arith.constant dense<0.000000e+00> : vector<16xf32>
    %139 = vector.multi_reduction <add>, %138, %cst_62 [1] : vector<16x32xf32> to vector<16xf32>
    %140 = vector.shape_cast %139 : vector<16xf32> to vector<16x1xf32>
    %cst_63 = arith.constant 3.200000e+01 : f32
    %141 = vector.broadcast %cst_63 : f32 to vector<16x1xf32>
    %142 = arith.divf %140, %141 : vector<16x1xf32>
    %cst_64 = arith.constant 9.99999974E-6 : f32
    %143 = vector.broadcast %cst_64 : f32 to vector<16x1xf32>
    %144 = arith.addf %142, %143 : vector<16x1xf32>
    %145 = math.rsqrt %144 : vector<16x1xf32>
    %146 = vector.broadcast %145 : vector<16x1xf32> to vector<16x32xf32>
    %147 = arith.mulf %137, %146 : vector<16x32xf32>
    %148 = vector.broadcast %129 : vector<1x32xf32> to vector<16x32xf32>
    %149 = arith.mulf %147, %148 : vector<16x32xf32>
    %150 = vector.broadcast %131 : vector<1x32xf32> to vector<16x32xf32>
    %151 = arith.addf %149, %150 : vector<16x32xf32>
    %c0_65 = arith.constant 0 : index
    %c0_66 = arith.constant 0 : index
    %c0_67 = arith.constant 0 : index
    %152 = vector.load %arg11[%c0_65, %c0_66, %c0_67] : memref<2x32x64xf32, #tpu.memory_space<vmem>>, vector<1x32x64xf32>
    %153 = vector.shape_cast %152 : vector<1x32x64xf32> to vector<32x64xf32>
    %cst_68 = arith.constant dense<0.000000e+00> : vector<16x64xf32>
    %154 = tpu.matmul %151, %153, %cst_68 {dimension_numbers = #tpu.dot_dimension_numbers<[1], [0], [0], [1], [0, 0, 1, 1], [], []>} : vector<16x32xf32>, vector<32x64xf32>, vector<16x64xf32> -> vector<16x64xf32>
    %c0_69 = arith.constant 0 : index
    %c0_70 = arith.constant 0 : index
    %c0_71 = arith.constant 0 : index
    %155 = vector.load %arg12[%c0_69, %c0_70, %c0_71] : memref<2x1x64xf32, #tpu.memory_space<vmem>>, vector<1x1x64xf32>
    %156 = vector.shape_cast %155 : vector<1x1x64xf32> to vector<1x64xf32>
    %157 = vector.broadcast %156 : vector<1x64xf32> to vector<16x64xf32>
    %158 = arith.addf %154, %157 : vector<16x64xf32>
    %cst_72 = arith.constant 0.000000e+00 : f32
    %159 = vector.broadcast %cst_72 : f32 to vector<16x64xf32>
    %160 = arith.cmpf ogt, %158, %159 : vector<16x64xf32>
    %cst_73 = arith.constant 2.000000e-01 : f32
    %161 = vector.broadcast %cst_73 : f32 to vector<16x64xf32>
    %162 = arith.mulf %161, %158 : vector<16x64xf32>
    %163 = arith.select %160, %158, %162 : vector<16x64xi1>, vector<16x64xf32>
    %c0_74 = arith.constant 0 : index
    %c0_75 = arith.constant 0 : index
    %c0_76 = arith.constant 0 : index
    %164 = vector.load %arg13[%c0_74, %c0_75, %c0_76] : memref<2x64x32xf32, #tpu.memory_space<vmem>>, vector<1x64x32xf32>
    %165 = vector.shape_cast %164 : vector<1x64x32xf32> to vector<64x32xf32>
    %cst_77 = arith.constant dense<0.000000e+00> : vector<16x32xf32>
    %166 = tpu.matmul %163, %165, %cst_77 {dimension_numbers = #tpu.dot_dimension_numbers<[1], [0], [0], [1], [0, 0, 1, 1], [], []>} : vector<16x64xf32>, vector<64x32xf32>, vector<16x32xf32> -> vector<16x32xf32>
    %167 = arith.addf %127, %166 : vector<16x32xf32>
    %c0_78 = arith.constant 0 : index
    %c0_79 = arith.constant 0 : index
    %c0_80 = arith.constant 0 : index
    %168 = vector.load %arg14[%c0_78, %c0_79, %c0_80] : memref<2x1x32xf32, #tpu.memory_space<vmem>>, vector<1x1x32xf32>
    %169 = vector.shape_cast %168 : vector<1x1x32xf32> to vector<1x32xf32>
    %170 = vector.broadcast %169 : vector<1x32xf32> to vector<16x32xf32>
    %171 = arith.addf %167, %170 : vector<16x32xf32>
    %c1 = arith.constant 1 : index
    %c0_81 = arith.constant 0 : index
    %c0_82 = arith.constant 0 : index
    %172 = vector.load %arg1[%c1, %c0_81, %c0_82] : memref<2x1x32xf32, #tpu.memory_space<vmem>>, vector<1x1x32xf32>
    %173 = vector.shape_cast %172 : vector<1x1x32xf32> to vector<1x32xf32>
    %c1_83 = arith.constant 1 : index
    %c0_84 = arith.constant 0 : index
    %c0_85 = arith.constant 0 : index
    %174 = vector.load %arg2[%c1_83, %c0_84, %c0_85] : memref<2x1x32xf32, #tpu.memory_space<vmem>>, vector<1x1x32xf32>
    %175 = vector.shape_cast %174 : vector<1x1x32xf32> to vector<1x32xf32>
    %cst_86 = arith.constant dense<0.000000e+00> : vector<16xf32>
    %176 = vector.multi_reduction <add>, %171, %cst_86 [1] : vector<16x32xf32> to vector<16xf32>
    %177 = vector.shape_cast %176 : vector<16xf32> to vector<16x1xf32>
    %cst_87 = arith.constant 3.200000e+01 : f32
    %178 = vector.broadcast %cst_87 : f32 to vector<16x1xf32>
    %179 = arith.divf %177, %178 : vector<16x1xf32>
    %180 = vector.broadcast %179 : vector<16x1xf32> to vector<16x32xf32>
    %181 = arith.subf %171, %180 : vector<16x32xf32>
    %182 = arith.mulf %181, %181 : vector<16x32xf32>
    %cst_88 = arith.constant dense<0.000000e+00> : vector<16xf32>
    %183 = vector.multi_reduction <add>, %182, %cst_88 [1] : vector<16x32xf32> to vector<16xf32>
    %184 = vector.shape_cast %183 : vector<16xf32> to vector<16x1xf32>
    %cst_89 = arith.constant 3.200000e+01 : f32
    %185 = vector.broadcast %cst_89 : f32 to vector<16x1xf32>
    %186 = arith.divf %184, %185 : vector<16x1xf32>
    %cst_90 = arith.constant 9.99999974E-6 : f32
    %187 = vector.broadcast %cst_90 : f32 to vector<16x1xf32>
    %188 = arith.addf %186, %187 : vector<16x1xf32>
    %189 = math.rsqrt %188 : vector<16x1xf32>
    %190 = vector.broadcast %189 : vector<16x1xf32> to vector<16x32xf32>
    %191 = arith.mulf %181, %190 : vector<16x32xf32>
    %192 = vector.broadcast %173 : vector<1x32xf32> to vector<16x32xf32>
    %193 = arith.mulf %191, %192 : vector<16x32xf32>
    %194 = vector.broadcast %175 : vector<1x32xf32> to vector<16x32xf32>
    %195 = arith.addf %193, %194 : vector<16x32xf32>
    %c1_91 = arith.constant 1 : index
    %c0_92 = arith.constant 0 : index
    %c0_93 = arith.constant 0 : index
    %196 = vector.load %arg3[%c1_91, %c0_92, %c0_93] : memref<2x32x96xf32, #tpu.memory_space<vmem>>, vector<1x32x96xf32>
    %197 = vector.shape_cast %196 : vector<1x32x96xf32> to vector<32x96xf32>
    %cst_94 = arith.constant dense<0.000000e+00> : vector<16x96xf32>
    %198 = tpu.matmul %195, %197, %cst_94 {dimension_numbers = #tpu.dot_dimension_numbers<[1], [0], [0], [1], [0, 0, 1, 1], [], []>} : vector<16x32xf32>, vector<32x96xf32>, vector<16x96xf32> -> vector<16x96xf32>
    %c1_95 = arith.constant 1 : index
    %c0_96 = arith.constant 0 : index
    %c0_97 = arith.constant 0 : index
    %199 = vector.load %arg4[%c1_95, %c0_96, %c0_97] : memref<2x1x96xf32, #tpu.memory_space<vmem>>, vector<1x1x96xf32>
    %200 = vector.shape_cast %199 : vector<1x1x96xf32> to vector<1x96xf32>
    %201 = vector.broadcast %200 : vector<1x96xf32> to vector<16x96xf32>
    %202 = arith.addf %198, %201 : vector<16x96xf32>
    %203 = vector.extract_strided_slice %202 {offsets = [0, 0], sizes = [16, 32], strides = [1, 1]} : vector<16x96xf32> to vector<16x32xf32>
    %204 = vector.shape_cast %203 : vector<16x32xf32> to vector<2x8x32xf32>
    %205 = vector.extract_strided_slice %202 {offsets = [0, 32], sizes = [16, 32], strides = [1, 1]} : vector<16x96xf32> to vector<16x32xf32>
    %206 = vector.shape_cast %205 : vector<16x32xf32> to vector<2x8x32xf32>
    %207 = vector.extract_strided_slice %202 {offsets = [0, 64], sizes = [16, 32], strides = [1, 1]} : vector<16x96xf32> to vector<16x32xf32>
    %208 = vector.shape_cast %207 : vector<16x32xf32> to vector<2x8x32xf32>
    %209 = vector.extract_strided_slice %204 {offsets = [0, 0, 0], sizes = [2, 8, 8], strides = [1, 1, 1]} : vector<2x8x32xf32> to vector<2x8x8xf32>
    %cst_98 = arith.constant 0.353553385 : f32
    %210 = vector.broadcast %cst_98 : f32 to vector<2x8x8xf32>
    %211 = arith.mulf %209, %210 : vector<2x8x8xf32>
    %212 = vector.extract_strided_slice %206 {offsets = [0, 0, 0], sizes = [2, 8, 8], strides = [1, 1, 1]} : vector<2x8x32xf32> to vector<2x8x8xf32>
    "tpu.trace_start"() <{level = 10 : i32, message = "bqd,bkd->bqk"}> : () -> ()
    %cst_99 = arith.constant dense<0.000000e+00> : vector<2x8x8xf32>
    %213 = tpu.matmul %211, %212, %cst_99 {dimension_numbers = #tpu.dot_dimension_numbers<[2], [2], [1], [1], [0, 0, 0, 1, 1, 1], [0], [0]>} : vector<2x8x8xf32>, vector<2x8x8xf32>, vector<2x8x8xf32> -> vector<2x8x8xf32>
    "tpu.trace_stop"() : () -> ()
    %cst_100 = arith.constant dense<0xFF800000> : vector<2x8xf32>
    %214 = vector.multi_reduction <maximumf>, %213, %cst_100 [2] : vector<2x8x8xf32> to vector<2x8xf32>
    %215 = vector.shape_cast %214 : vector<2x8xf32> to vector<2x8x1xf32>
    %216 = vector.broadcast %215 : vector<2x8x1xf32> to vector<2x8x8xf32>
    %217 = arith.subf %213, %216 : vector<2x8x8xf32>
    %218 = math.exp %217 : vector<2x8x8xf32>
    %cst_101 = arith.constant dense<0.000000e+00> : vector<2x8xf32>
    %219 = vector.multi_reduction <add>, %218, %cst_101 [2] : vector<2x8x8xf32> to vector<2x8xf32>
    %220 = vector.shape_cast %219 : vector<2x8xf32> to vector<2x8x1xf32>
    %221 = tpu.reciprocal %220 {approx = true} : vector<2x8x1xf32> -> vector<2x8x1xf32>
    %222 = vector.broadcast %221 : vector<2x8x1xf32> to vector<2x8x8xf32>
    %223 = arith.mulf %218, %222 : vector<2x8x8xf32>
    %224 = vector.extract_strided_slice %208 {offsets = [0, 0, 0], sizes = [2, 8, 8], strides = [1, 1, 1]} : vector<2x8x32xf32> to vector<2x8x8xf32>
    "tpu.trace_start"() <{level = 10 : i32, message = "bqk,bkd->bqd"}> : () -> ()
    %cst_102 = arith.constant dense<0.000000e+00> : vector<2x8x8xf32>
    %225 = tpu.matmul %223, %224, %cst_102 {dimension_numbers = #tpu.dot_dimension_numbers<[2], [1], [1], [2], [0, 0, 0, 1, 1, 2], [0], [0]>} : vector<2x8x8xf32>, vector<2x8x8xf32>, vector<2x8x8xf32> -> vector<2x8x8xf32>
    "tpu.trace_stop"() : () -> ()
    %226 = vector.extract_strided_slice %204 {offsets = [0, 0, 8], sizes = [2, 8, 8], strides = [1, 1, 1]} : vector<2x8x32xf32> to vector<2x8x8xf32>
    %cst_103 = arith.constant 0.353553385 : f32
    %227 = vector.broadcast %cst_103 : f32 to vector<2x8x8xf32>
    %228 = arith.mulf %226, %227 : vector<2x8x8xf32>
    %229 = vector.extract_strided_slice %206 {offsets = [0, 0, 8], sizes = [2, 8, 8], strides = [1, 1, 1]} : vector<2x8x32xf32> to vector<2x8x8xf32>
    "tpu.trace_start"() <{level = 10 : i32, message = "bqd,bkd->bqk"}> : () -> ()
    %cst_104 = arith.constant dense<0.000000e+00> : vector<2x8x8xf32>
    %230 = tpu.matmul %228, %229, %cst_104 {dimension_numbers = #tpu.dot_dimension_numbers<[2], [2], [1], [1], [0, 0, 0, 1, 1, 1], [0], [0]>} : vector<2x8x8xf32>, vector<2x8x8xf32>, vector<2x8x8xf32> -> vector<2x8x8xf32>
    "tpu.trace_stop"() : () -> ()
    %cst_105 = arith.constant dense<0xFF800000> : vector<2x8xf32>
    %231 = vector.multi_reduction <maximumf>, %230, %cst_105 [2] : vector<2x8x8xf32> to vector<2x8xf32>
    %232 = vector.shape_cast %231 : vector<2x8xf32> to vector<2x8x1xf32>
    %233 = vector.broadcast %232 : vector<2x8x1xf32> to vector<2x8x8xf32>
    %234 = arith.subf %230, %233 : vector<2x8x8xf32>
    %235 = math.exp %234 : vector<2x8x8xf32>
    %cst_106 = arith.constant dense<0.000000e+00> : vector<2x8xf32>
    %236 = vector.multi_reduction <add>, %235, %cst_106 [2] : vector<2x8x8xf32> to vector<2x8xf32>
    %237 = vector.shape_cast %236 : vector<2x8xf32> to vector<2x8x1xf32>
    %238 = tpu.reciprocal %237 {approx = true} : vector<2x8x1xf32> -> vector<2x8x1xf32>
    %239 = vector.broadcast %238 : vector<2x8x1xf32> to vector<2x8x8xf32>
    %240 = arith.mulf %235, %239 : vector<2x8x8xf32>
    %241 = vector.extract_strided_slice %208 {offsets = [0, 0, 8], sizes = [2, 8, 8], strides = [1, 1, 1]} : vector<2x8x32xf32> to vector<2x8x8xf32>
    "tpu.trace_start"() <{level = 10 : i32, message = "bqk,bkd->bqd"}> : () -> ()
    %cst_107 = arith.constant dense<0.000000e+00> : vector<2x8x8xf32>
    %242 = tpu.matmul %240, %241, %cst_107 {dimension_numbers = #tpu.dot_dimension_numbers<[2], [1], [1], [2], [0, 0, 0, 1, 1, 2], [0], [0]>} : vector<2x8x8xf32>, vector<2x8x8xf32>, vector<2x8x8xf32> -> vector<2x8x8xf32>
    "tpu.trace_stop"() : () -> ()
    %243 = vector.extract_strided_slice %204 {offsets = [0, 0, 16], sizes = [2, 8, 8], strides = [1, 1, 1]} : vector<2x8x32xf32> to vector<2x8x8xf32>
    %cst_108 = arith.constant 0.353553385 : f32
    %244 = vector.broadcast %cst_108 : f32 to vector<2x8x8xf32>
    %245 = arith.mulf %243, %244 : vector<2x8x8xf32>
    %246 = vector.extract_strided_slice %206 {offsets = [0, 0, 16], sizes = [2, 8, 8], strides = [1, 1, 1]} : vector<2x8x32xf32> to vector<2x8x8xf32>
    "tpu.trace_start"() <{level = 10 : i32, message = "bqd,bkd->bqk"}> : () -> ()
    %cst_109 = arith.constant dense<0.000000e+00> : vector<2x8x8xf32>
    %247 = tpu.matmul %245, %246, %cst_109 {dimension_numbers = #tpu.dot_dimension_numbers<[2], [2], [1], [1], [0, 0, 0, 1, 1, 1], [0], [0]>} : vector<2x8x8xf32>, vector<2x8x8xf32>, vector<2x8x8xf32> -> vector<2x8x8xf32>
    "tpu.trace_stop"() : () -> ()
    %cst_110 = arith.constant dense<0xFF800000> : vector<2x8xf32>
    %248 = vector.multi_reduction <maximumf>, %247, %cst_110 [2] : vector<2x8x8xf32> to vector<2x8xf32>
    %249 = vector.shape_cast %248 : vector<2x8xf32> to vector<2x8x1xf32>
    %250 = vector.broadcast %249 : vector<2x8x1xf32> to vector<2x8x8xf32>
    %251 = arith.subf %247, %250 : vector<2x8x8xf32>
    %252 = math.exp %251 : vector<2x8x8xf32>
    %cst_111 = arith.constant dense<0.000000e+00> : vector<2x8xf32>
    %253 = vector.multi_reduction <add>, %252, %cst_111 [2] : vector<2x8x8xf32> to vector<2x8xf32>
    %254 = vector.shape_cast %253 : vector<2x8xf32> to vector<2x8x1xf32>
    %255 = tpu.reciprocal %254 {approx = true} : vector<2x8x1xf32> -> vector<2x8x1xf32>
    %256 = vector.broadcast %255 : vector<2x8x1xf32> to vector<2x8x8xf32>
    %257 = arith.mulf %252, %256 : vector<2x8x8xf32>
    %258 = vector.extract_strided_slice %208 {offsets = [0, 0, 16], sizes = [2, 8, 8], strides = [1, 1, 1]} : vector<2x8x32xf32> to vector<2x8x8xf32>
    "tpu.trace_start"() <{level = 10 : i32, message = "bqk,bkd->bqd"}> : () -> ()
    %cst_112 = arith.constant dense<0.000000e+00> : vector<2x8x8xf32>
    %259 = tpu.matmul %257, %258, %cst_112 {dimension_numbers = #tpu.dot_dimension_numbers<[2], [1], [1], [2], [0, 0, 0, 1, 1, 2], [0], [0]>} : vector<2x8x8xf32>, vector<2x8x8xf32>, vector<2x8x8xf32> -> vector<2x8x8xf32>
    "tpu.trace_stop"() : () -> ()
    %260 = vector.extract_strided_slice %204 {offsets = [0, 0, 24], sizes = [2, 8, 8], strides = [1, 1, 1]} : vector<2x8x32xf32> to vector<2x8x8xf32>
    %cst_113 = arith.constant 0.353553385 : f32
    %261 = vector.broadcast %cst_113 : f32 to vector<2x8x8xf32>
    %262 = arith.mulf %260, %261 : vector<2x8x8xf32>
    %263 = vector.extract_strided_slice %206 {offsets = [0, 0, 24], sizes = [2, 8, 8], strides = [1, 1, 1]} : vector<2x8x32xf32> to vector<2x8x8xf32>
    "tpu.trace_start"() <{level = 10 : i32, message = "bqd,bkd->bqk"}> : () -> ()
    %cst_114 = arith.constant dense<0.000000e+00> : vector<2x8x8xf32>
    %264 = tpu.matmul %262, %263, %cst_114 {dimension_numbers = #tpu.dot_dimension_numbers<[2], [2], [1], [1], [0, 0, 0, 1, 1, 1], [0], [0]>} : vector<2x8x8xf32>, vector<2x8x8xf32>, vector<2x8x8xf32> -> vector<2x8x8xf32>
    "tpu.trace_stop"() : () -> ()
    %cst_115 = arith.constant dense<0xFF800000> : vector<2x8xf32>
    %265 = vector.multi_reduction <maximumf>, %264, %cst_115 [2] : vector<2x8x8xf32> to vector<2x8xf32>
    %266 = vector.shape_cast %265 : vector<2x8xf32> to vector<2x8x1xf32>
    %267 = vector.broadcast %266 : vector<2x8x1xf32> to vector<2x8x8xf32>
    %268 = arith.subf %264, %267 : vector<2x8x8xf32>
    %269 = math.exp %268 : vector<2x8x8xf32>
    %cst_116 = arith.constant dense<0.000000e+00> : vector<2x8xf32>
    %270 = vector.multi_reduction <add>, %269, %cst_116 [2] : vector<2x8x8xf32> to vector<2x8xf32>
    %271 = vector.shape_cast %270 : vector<2x8xf32> to vector<2x8x1xf32>
    %272 = tpu.reciprocal %271 {approx = true} : vector<2x8x1xf32> -> vector<2x8x1xf32>
    %273 = vector.broadcast %272 : vector<2x8x1xf32> to vector<2x8x8xf32>
    %274 = arith.mulf %269, %273 : vector<2x8x8xf32>
    %275 = vector.extract_strided_slice %208 {offsets = [0, 0, 24], sizes = [2, 8, 8], strides = [1, 1, 1]} : vector<2x8x32xf32> to vector<2x8x8xf32>
    "tpu.trace_start"() <{level = 10 : i32, message = "bqk,bkd->bqd"}> : () -> ()
    %cst_117 = arith.constant dense<0.000000e+00> : vector<2x8x8xf32>
    %276 = tpu.matmul %274, %275, %cst_117 {dimension_numbers = #tpu.dot_dimension_numbers<[2], [1], [1], [2], [0, 0, 0, 1, 1, 2], [0], [0]>} : vector<2x8x8xf32>, vector<2x8x8xf32>, vector<2x8x8xf32> -> vector<2x8x8xf32>
    "tpu.trace_stop"() : () -> ()
    %277 = tpu.concatenate %225, %242, %259, %276 in 2 : vector<2x8x8xf32>, vector<2x8x8xf32>, vector<2x8x8xf32>, vector<2x8x8xf32> -> vector<2x8x32xf32>
    %278 = vector.shape_cast %277 : vector<2x8x32xf32> to vector<16x32xf32>
    %c1_118 = arith.constant 1 : index
    %c0_119 = arith.constant 0 : index
    %c0_120 = arith.constant 0 : index
    %279 = vector.load %arg5[%c1_118, %c0_119, %c0_120] : memref<2x32x32xf32, #tpu.memory_space<vmem>>, vector<1x32x32xf32>
    %280 = vector.shape_cast %279 : vector<1x32x32xf32> to vector<32x32xf32>
    %cst_121 = arith.constant dense<0.000000e+00> : vector<16x32xf32>
    %281 = tpu.matmul %278, %280, %cst_121 {dimension_numbers = #tpu.dot_dimension_numbers<[1], [0], [0], [1], [0, 0, 1, 1], [], []>} : vector<16x32xf32>, vector<32x32xf32>, vector<16x32xf32> -> vector<16x32xf32>
    %c1_122 = arith.constant 1 : index
    %c0_123 = arith.constant 0 : index
    %c0_124 = arith.constant 0 : index
    %282 = vector.load %arg6[%c1_122, %c0_123, %c0_124] : memref<2x1x32xf32, #tpu.memory_space<vmem>>, vector<1x1x32xf32>
    %283 = vector.shape_cast %282 : vector<1x1x32xf32> to vector<1x32xf32>
    %284 = vector.broadcast %283 : vector<1x32xf32> to vector<16x32xf32>
    %285 = arith.addf %281, %284 : vector<16x32xf32>
    %cst_125 = arith.constant 0.000000e+00 : f32
    %286 = vector.broadcast %cst_125 : f32 to vector<16x32xf32>
    %287 = arith.cmpf ogt, %285, %286 : vector<16x32xf32>
    %cst_126 = arith.constant 2.000000e-01 : f32
    %288 = vector.broadcast %cst_126 : f32 to vector<16x32xf32>
    %289 = arith.mulf %288, %285 : vector<16x32xf32>
    %290 = arith.select %287, %285, %289 : vector<16x32xi1>, vector<16x32xf32>
    %c1_127 = arith.constant 1 : index
    %c0_128 = arith.constant 0 : index
    %c0_129 = arith.constant 0 : index
    %291 = vector.load %arg7[%c1_127, %c0_128, %c0_129] : memref<2x32x32xf32, #tpu.memory_space<vmem>>, vector<1x32x32xf32>
    %292 = vector.shape_cast %291 : vector<1x32x32xf32> to vector<32x32xf32>
    %cst_130 = arith.constant dense<0.000000e+00> : vector<16x32xf32>
    %293 = tpu.matmul %290, %292, %cst_130 {dimension_numbers = #tpu.dot_dimension_numbers<[1], [0], [0], [1], [0, 0, 1, 1], [], []>} : vector<16x32xf32>, vector<32x32xf32>, vector<16x32xf32> -> vector<16x32xf32>
    %294 = arith.addf %171, %293 : vector<16x32xf32>
    %c1_131 = arith.constant 1 : index
    %c0_132 = arith.constant 0 : index
    %c0_133 = arith.constant 0 : index
    %295 = vector.load %arg8[%c1_131, %c0_132, %c0_133] : memref<2x1x32xf32, #tpu.memory_space<vmem>>, vector<1x1x32xf32>
    %296 = vector.shape_cast %295 : vector<1x1x32xf32> to vector<1x32xf32>
    %297 = vector.broadcast %296 : vector<1x32xf32> to vector<16x32xf32>
    %298 = arith.addf %294, %297 : vector<16x32xf32>
    %c1_134 = arith.constant 1 : index
    %c0_135 = arith.constant 0 : index
    %c0_136 = arith.constant 0 : index
    %299 = vector.load %arg9[%c1_134, %c0_135, %c0_136] : memref<2x1x32xf32, #tpu.memory_space<vmem>>, vector<1x1x32xf32>
    %300 = vector.shape_cast %299 : vector<1x1x32xf32> to vector<1x32xf32>
    %c1_137 = arith.constant 1 : index
    %c0_138 = arith.constant 0 : index
    %c0_139 = arith.constant 0 : index
    %301 = vector.load %arg10[%c1_137, %c0_138, %c0_139] : memref<2x1x32xf32, #tpu.memory_space<vmem>>, vector<1x1x32xf32>
    %302 = vector.shape_cast %301 : vector<1x1x32xf32> to vector<1x32xf32>
    %cst_140 = arith.constant dense<0.000000e+00> : vector<16xf32>
    %303 = vector.multi_reduction <add>, %298, %cst_140 [1] : vector<16x32xf32> to vector<16xf32>
    %304 = vector.shape_cast %303 : vector<16xf32> to vector<16x1xf32>
    %cst_141 = arith.constant 3.200000e+01 : f32
    %305 = vector.broadcast %cst_141 : f32 to vector<16x1xf32>
    %306 = arith.divf %304, %305 : vector<16x1xf32>
    %307 = vector.broadcast %306 : vector<16x1xf32> to vector<16x32xf32>
    %308 = arith.subf %298, %307 : vector<16x32xf32>
    %309 = arith.mulf %308, %308 : vector<16x32xf32>
    %cst_142 = arith.constant dense<0.000000e+00> : vector<16xf32>
    %310 = vector.multi_reduction <add>, %309, %cst_142 [1] : vector<16x32xf32> to vector<16xf32>
    %311 = vector.shape_cast %310 : vector<16xf32> to vector<16x1xf32>
    %cst_143 = arith.constant 3.200000e+01 : f32
    %312 = vector.broadcast %cst_143 : f32 to vector<16x1xf32>
    %313 = arith.divf %311, %312 : vector<16x1xf32>
    %cst_144 = arith.constant 9.99999974E-6 : f32
    %314 = vector.broadcast %cst_144 : f32 to vector<16x1xf32>
    %315 = arith.addf %313, %314 : vector<16x1xf32>
    %316 = math.rsqrt %315 : vector<16x1xf32>
    %317 = vector.broadcast %316 : vector<16x1xf32> to vector<16x32xf32>
    %318 = arith.mulf %308, %317 : vector<16x32xf32>
    %319 = vector.broadcast %300 : vector<1x32xf32> to vector<16x32xf32>
    %320 = arith.mulf %318, %319 : vector<16x32xf32>
    %321 = vector.broadcast %302 : vector<1x32xf32> to vector<16x32xf32>
    %322 = arith.addf %320, %321 : vector<16x32xf32>
    %c1_145 = arith.constant 1 : index
    %c0_146 = arith.constant 0 : index
    %c0_147 = arith.constant 0 : index
    %323 = vector.load %arg11[%c1_145, %c0_146, %c0_147] : memref<2x32x64xf32, #tpu.memory_space<vmem>>, vector<1x32x64xf32>
    %324 = vector.shape_cast %323 : vector<1x32x64xf32> to vector<32x64xf32>
    %cst_148 = arith.constant dense<0.000000e+00> : vector<16x64xf32>
    %325 = tpu.matmul %322, %324, %cst_148 {dimension_numbers = #tpu.dot_dimension_numbers<[1], [0], [0], [1], [0, 0, 1, 1], [], []>} : vector<16x32xf32>, vector<32x64xf32>, vector<16x64xf32> -> vector<16x64xf32>
    %c1_149 = arith.constant 1 : index
    %c0_150 = arith.constant 0 : index
    %c0_151 = arith.constant 0 : index
    %326 = vector.load %arg12[%c1_149, %c0_150, %c0_151] : memref<2x1x64xf32, #tpu.memory_space<vmem>>, vector<1x1x64xf32>
    %327 = vector.shape_cast %326 : vector<1x1x64xf32> to vector<1x64xf32>
    %328 = vector.broadcast %327 : vector<1x64xf32> to vector<16x64xf32>
    %329 = arith.addf %325, %328 : vector<16x64xf32>
    %cst_152 = arith.constant 0.000000e+00 : f32
    %330 = vector.broadcast %cst_152 : f32 to vector<16x64xf32>
    %331 = arith.cmpf ogt, %329, %330 : vector<16x64xf32>
    %cst_153 = arith.constant 2.000000e-01 : f32
    %332 = vector.broadcast %cst_153 : f32 to vector<16x64xf32>
    %333 = arith.mulf %332, %329 : vector<16x64xf32>
    %334 = arith.select %331, %329, %333 : vector<16x64xi1>, vector<16x64xf32>
    %c1_154 = arith.constant 1 : index
    %c0_155 = arith.constant 0 : index
    %c0_156 = arith.constant 0 : index
    %335 = vector.load %arg13[%c1_154, %c0_155, %c0_156] : memref<2x64x32xf32, #tpu.memory_space<vmem>>, vector<1x64x32xf32>
    %336 = vector.shape_cast %335 : vector<1x64x32xf32> to vector<64x32xf32>
    %cst_157 = arith.constant dense<0.000000e+00> : vector<16x32xf32>
    %337 = tpu.matmul %334, %336, %cst_157 {dimension_numbers = #tpu.dot_dimension_numbers<[1], [0], [0], [1], [0, 0, 1, 1], [], []>} : vector<16x64xf32>, vector<64x32xf32>, vector<16x32xf32> -> vector<16x32xf32>
    %338 = arith.addf %298, %337 : vector<16x32xf32>
    %c1_158 = arith.constant 1 : index
    %c0_159 = arith.constant 0 : index
    %c0_160 = arith.constant 0 : index
    %339 = vector.load %arg14[%c1_158, %c0_159, %c0_160] : memref<2x1x32xf32, #tpu.memory_space<vmem>>, vector<1x1x32xf32>
    %340 = vector.shape_cast %339 : vector<1x1x32xf32> to vector<1x32xf32>
    %341 = vector.broadcast %340 : vector<1x32xf32> to vector<16x32xf32>
    %342 = arith.addf %338, %341 : vector<16x32xf32>
    %c0_161 = arith.constant 0 : index
    %c0_162 = arith.constant 0 : index
    %343 = vector.load %arg15[%c0_161, %c0_162] : memref<16x32xf32, #tpu.memory_space<vmem>>, vector<16x32xf32>
    tpu.vector_store %arg15[%c0_161, %c0_162], %342 {strides = array<i32>} : memref<16x32xf32, #tpu.memory_space<vmem>>, vector<16x32xf32>,
    return
  }
}

</mosaic_0001>

<llo_original>
// kernel: tpu_custom_call.1
$region0: #{tpu_custom_call.1}
  #allocation0 [shape = 'u32[]', space=smem, size = 0x4, offset = 0x4, fixed_abs, tag = 'smem constant byte address 0x4 - core index']
  #allocation1 [shape = 'u32[144,128]{1,0:T(1,128)}', space=vmem, size = 0x12000, scoped, tag = 'internal scratch']
  %s0 = inlined_call_operand.hbm [shape: f32[16,32], index: 0, kind: input, shape index: {}]
  %s1 = inlined_call_operand.hbm [shape: f32[2,1,32], index: 1, kind: input, shape index: {}]
  %s2 = inlined_call_operand.vmem [shape: f32[2,1,32], index: 2, kind: input, shape index: {}]
  %s3 = inlined_call_operand.vmem [shape: f32[2,32,96], index: 3, kind: input, shape index: {}]
  %s4 = inlined_call_operand.vmem [shape: f32[2,1,96], index: 4, kind: input, shape index: {}]
  %s5 = inlined_call_operand.vmem [shape: f32[2,32,32], index: 5, kind: input, shape index: {}]
  %s6 = inlined_call_operand.vmem [shape: f32[2,1,32], index: 6, kind: input, shape index: {}]
  %s7 = inlined_call_operand.vmem [shape: f32[2,32,32], index: 7, kind: input, shape index: {}]
  %s8 = inlined_call_operand.vmem [shape: f32[2,1,32], index: 8, kind: input, shape index: {}]
  %s9 = inlined_call_operand.vmem [shape: f32[2,1,32], index: 9, kind: input, shape index: {}]
  %s10 = inlined_call_operand.vmem [shape: f32[2,1,32], index: 10, kind: input, shape index: {}]
  %s11 = inlined_call_operand.hbm [shape: f32[2,32,64], index: 11, kind: input, shape index: {}]
  %s12 = inlined_call_operand.vmem [shape: f32[2,1,64], index: 12, kind: input, shape index: {}]
  %s13 = inlined_call_operand.vmem [shape: f32[2,64,32], index: 13, kind: input, shape index: {}]
  %s14 = inlined_call_operand.vmem [shape: f32[2,1,32], index: 14, kind: input, shape index: {}]
  %s15 = inlined_call_operand.hbm [shape: f32[16,32], index: 15, kind: output, shape index: {}]
  %s16 = sld [smem:[#allocation0]]
  $region82: #{tpu_custom_call.1} parent=0
    _
  %s18 = ssub.s32 1, %s16
  %s19 = scalar_select 0, %s18, %s16
  $region1: #{tpu_custom_call.1} parent=0
    #allocation2 [shape = 'u8[8192]{0}', space=vmem, size = 0x2000, scoped, tag = 'input window, operand 0, single buffered']
    #allocation3 [shape = 's32[1]{0}', space=sflag, size = 0x4, scoped, tag = 'scoped memory for tpu_custom_call.1']
    #allocation4 [shape = 's32[1]{0}', space=sflag, size = 0x4, scoped, tag = 'scoped memory for tpu_custom_call.1']
    #allocation5 [shape = 'u8[1024]{0}', space=vmem, size = 0x400, scoped, tag = 'input window, operand 1, single buffered']
    #allocation6 [shape = 's32[1]{0}', space=sflag, size = 0x4, scoped, tag = 'scoped memory for tpu_custom_call.1']
    #allocation7 [shape = 'u8[32768]{0}', space=vmem, size = 0x8000, scoped, tag = 'input window, operand 11, single buffered']
    #allocation8 [shape = 'u8[8192]{0}', space=vmem, size = 0x2000, scoped, tag = 'output window, operand 0, single buffered']
    %20 = vsyncpa [#allocation3], 0
    %21 = vsyncpa [#allocation6], 0
    %22 = vsyncpa [#allocation4], 0
    // Predicated region
    $region2: #{tpu_custom_call.1} parent=1 // pred_check
      _
    $region3: #{tpu_custom_call.1} parent=1 // pred_check_branch
      %24 = sbr.rel (0) target = $region5
    $region4: #{tpu_custom_call.1} parent=1 // pred_region
      %s26 = ssub.s32 256, 256
      %27 = vsyncadd [#allocation3], %s26
      %s28 = sshll.u32 [#allocation2], 4
      %s29 = int_to_ptr.vmem [resolvable:$true] %s28
      %34 = dma.hbm_to_vmem [thread:$0]  %s0, 256, %s29, [#allocation3], 128, 128, 8
    $region5: #{tpu_custom_call.1} parent=1 // pred_fallthru
      _
    // Predicated region
    $region6: #{tpu_custom_call.1} parent=1 // pred_check
      _
    $region7: #{tpu_custom_call.1} parent=1 // pred_check_branch
      %36 = sbr.rel (0) target = $region9
    $region8: #{tpu_custom_call.1} parent=1 // pred_region
      %s38 = ssub.s32 32, 32
      %39 = vsyncadd [#allocation6], %s38
      %s40 = sshll.u32 [#allocation5], 4
      %s41 = int_to_ptr.vmem [resolvable:$true] %s40
      %46 = dma.hbm_to_vmem [thread:$0]  %s1, 32, %s41, [#allocation6], 16, 16, 1
    $region9: #{tpu_custom_call.1} parent=1 // pred_fallthru
      _
    // Predicated region
    $region10: #{tpu_custom_call.1} parent=1 // pred_check
      _
    $region11: #{tpu_custom_call.1} parent=1 // pred_check_branch
      %48 = sbr.rel (0) target = $region13
    $region12: #{tpu_custom_call.1} parent=1 // pred_region
      _
    $region13: #{tpu_custom_call.1} parent=1 // pred_fallthru
      _
    // Predicated region
    $region14: #{tpu_custom_call.1} parent=1 // pred_check
      _
    $region15: #{tpu_custom_call.1} parent=1 // pred_check_branch
      %50 = sbr.rel (0) target = $region17
    $region16: #{tpu_custom_call.1} parent=1 // pred_region
      _
    $region17: #{tpu_custom_call.1} parent=1 // pred_fallthru
      _
    // Predicated region
    $region18: #{tpu_custom_call.1} parent=1 // pred_check
      _
    $region19: #{tpu_custom_call.1} parent=1 // pred_check_branch
      %52 = sbr.rel (0) target = $region21
    $region20: #{tpu_custom_call.1} parent=1 // pred_region
      _
    $region21: #{tpu_custom_call.1} parent=1 // pred_fallthru
      _
    // Predicated region
    $region22: #{tpu_custom_call.1} parent=1 // pred_check
      _
    $region23: #{tpu_custom_call.1} parent=1 // pred_check_branch
      %54 = sbr.rel (0) target = $region25
    $region24: #{tpu_custom_call.1} parent=1 // pred_region
      _
    $region25: #{tpu_custom_call.1} parent=1 // pred_fallthru
      _
    // Predicated region
    $region26: #{tpu_custom_call.1} parent=1 // pred_check
      _
    $region27: #{tpu_custom_call.1} parent=1 // pred_check_branch
      %56 = sbr.rel (0) target = $region29
    $region28: #{tpu_custom_call.1} parent=1 // pred_region
      _
    $region29: #{tpu_custom_call.1} parent=1 // pred_fallthru
      _
    // Predicated region
    $region30: #{tpu_custom_call.1} parent=1 // pred_check
      _
    $region31: #{tpu_custom_call.1} parent=1 // pred_check_branch
      %58 = sbr.rel (0) target = $region33
    $region32: #{tpu_custom_call.1} parent=1 // pred_region
      _
    $region33: #{tpu_custom_call.1} parent=1 // pred_fallthru
      _
    // Predicated region
    $region34: #{tpu_custom_call.1} parent=1 // pred_check
      _
    $region35: #{tpu_custom_call.1} parent=1 // pred_check_branch
      %60 = sbr.rel (0) target = $region37
    $region36: #{tpu_custom_call.1} parent=1 // pred_region
      _
    $region37: #{tpu_custom_call.1} parent=1 // pred_fallthru
      _
    // Predicated region
    $region38: #{tpu_custom_call.1} parent=1 // pred_check
      _
    $region39: #{tpu_custom_call.1} parent=1 // pred_check_branch
      %62 = sbr.rel (0) target = $region41
    $region40: #{tpu_custom_call.1} parent=1 // pred_region
      _
    $region41: #{tpu_custom_call.1} parent=1 // pred_fallthru
      _
    // Predicated region
    $region42: #{tpu_custom_call.1} parent=1 // pred_check
      _
    $region43: #{tpu_custom_call.1} parent=1 // pred_check_branch
      %64 = sbr.rel (0) target = $region45
    $region44: #{tpu_custom_call.1} parent=1 // pred_region
      _
    $region45: #{tpu_custom_call.1} parent=1 // pred_fallthru
      _
    // Predicated region
    $region46: #{tpu_custom_call.1} parent=1 // pred_check
      _
    $region47: #{tpu_custom_call.1} parent=1 // pred_check_branch
      %66 = sbr.rel (0) target = $region49
    $region48: #{tpu_custom_call.1} parent=1 // pred_region
      %s68 = ssub.s32 1024, 1024
      %69 = vsyncadd [#allocation6], %s68
      %s70 = sshll.u32 [#allocation7], 4
      %s71 = int_to_ptr.vmem [resolvable:$true] %s70
      %76 = dma.hbm_to_vmem [thread:$0]  %s11, 1024, %s71, [#allocation6], 128, 128, 8
    $region49: #{tpu_custom_call.1} parent=1 // pred_fallthru
      _
    // Predicated region
    $region50: #{tpu_custom_call.1} parent=1 // pred_check
      _
    $region51: #{tpu_custom_call.1} parent=1 // pred_check_branch
      %78 = sbr.rel (0) target = $region53
    $region52: #{tpu_custom_call.1} parent=1 // pred_region
      _
    $region53: #{tpu_custom_call.1} parent=1 // pred_fallthru
      _
    // Predicated region
    $region54: #{tpu_custom_call.1} parent=1 // pred_check
      _
    $region55: #{tpu_custom_call.1} parent=1 // pred_check_branch
      %80 = sbr.rel (0) target = $region57
    $region56: #{tpu_custom_call.1} parent=1 // pred_region
      _
    $region57: #{tpu_custom_call.1} parent=1 // pred_fallthru
      _
    // Predicated region
    $region58: #{tpu_custom_call.1} parent=1 // pred_check
      _
    $region59: #{tpu_custom_call.1} parent=1 // pred_check_branch
      %82 = sbr.rel (0) target = $region61
    $region60: #{tpu_custom_call.1} parent=1 // pred_region
      _
    $region61: #{tpu_custom_call.1} parent=1 // pred_fallthru
      _
    // Predicated region
    $region62: #{tpu_custom_call.1} parent=1 // pred_check
      _
    $region63: #{tpu_custom_call.1} parent=1 // pred_check_branch
      %84 = sbr.rel (0) target = $region65
    $region64: #{tpu_custom_call.1} parent=1 // pred_region
      %85 = dma.done [#allocation3], 256
    $region65: #{tpu_custom_call.1} parent=1 // pred_fallthru
      _
    // Predicated region
    $region66: #{tpu_custom_call.1} parent=1 // pred_check
      _
    $region67: #{tpu_custom_call.1} parent=1 // pred_check_branch
      %87 = sbr.rel (0) target = $region69
    $region68: #{tpu_custom_call.1} parent=1 // pred_region
      %88 = dma.done [#allocation6], 32
    $region69: #{tpu_custom_call.1} parent=1 // pred_fallthru
      _
    // Predicated region
    $region70: #{tpu_custom_call.1} parent=1 // pred_check
      _
    $region71: #{tpu_custom_call.1} parent=1 // pred_check_branch
      %90 = sbr.rel (0) target = $region73
    $region72: #{tpu_custom_call.1} parent=1 // pred_region
      %91 = dma.done [#allocation6], 1024
    $region73: #{tpu_custom_call.1} parent=1 // pred_fallthru
      _
    %v92 = vld [vmem:[#allocation2] sm:$0xff]
    %v93 = vld [vmem:[#allocation2 + $0x8] sm:$0xff]
    %v94 = vld [vmem:[#allocation5] sm:$0x1]
    %v95 = vld [vmem:[%s2] sm:$0x1]
    %vm96 = vcmask 261120
    %v97 = vsel %vm96, %v92, 0.0
    %98 = vadd.xlane.f32.xlu0 %v97
    %v99 = vpop.xlane.xlu0 %98
    %v100 = vsel %vm96, %v93, 0.0
    %101 = vadd.xlane.f32.xlu0 %v100
    %v102 = vpop.xlane.xlu0 %101
    %v103 = vrcp.pop 32.0
    %v104 = vmul.f32 %v99, %v103
    %v105 = vmul.f32 %v102, %v103
    %v106 = vsub.f32 %v92, %v104
    %v107 = vsub.f32 %v93, %v105
    %v108 = vmul.f32 %v106, %v106
    %v109 = vmul.f32 %v107, %v107
    %v110 = vsel %vm96, %v108, 0.0
    %111 = vadd.xlane.f32.xlu0 %v110
    %v112 = vpop.xlane.xlu0 %111
    %v113 = vsel %vm96, %v109, 0.0
    %114 = vadd.xlane.f32.xlu0 %v113
    %v115 = vpop.xlane.xlu0 %114
    %v116 = vmul.f32 %v112, %v103
    %v117 = vmul.f32 %v115, %v103
    %v118 = vadd.f32 %v116, 1e-05
    %v119 = vadd.f32 %v117, 1e-05
    %v120 = vrsqrt.pop %v118
    %v121 = vrsqrt.pop %v119
    %v122 = vmul.f32 %v106, %v120
    %v123 = vmul.f32 %v107, %v121
    %v125 = vlaneseq
    %v126 = vshrl.u32 %v125, 7
    %v127 = vsub.s32 0, %v126
    %v128 = vrot.slane %v94, %v127
    %v130 = vmul.f32 %v122, %v128
    %v131 = vmul.f32 %v123, %v128
    %v133 = vlaneseq
    %v134 = vshrl.u32 %v133, 7
    %v135 = vsub.s32 0, %v134
    %v136 = vrot.slane %v95, %v135
    %v138 = vadd.f32 %v130, %v136
    %v139 = vadd.f32 %v131, %v136
    %v140 = vld [vmem:[%s3] sm:$0xff]
    %v141 = vld [vmem:[%s3 + $0x8] sm:$0xff]
    %v142 = vld [vmem:[%s3 + $0x10] sm:$0xff]
    %v143 = vld [vmem:[%s3 + $0x18] sm:$0xff]
    %v144 = vld [vmem:[%s4] sm:$0x1]
    %v146 = vlaneseq
    %v147 = vshrl.u32 %v146, 7
    %v148 = vsub.s32 0, %v147
    %v149 = vrot.slane %v144, %v148
    %v152 = vsel %vm96, %v138, 0
    %v155 = vsel %vm96, %v139, 0
    %157 = vmatprep.subr.mxu0 0.0
    %158 = vmatpush1.msra.mxu0 0.0
    %159 = vmatprep.subr.mxu0 0.0
    %160 = vmatpush1.msra.mxu0 0.0
    %161 = vmatprep.subr.mxu0 0.0
    %162 = vmatpush1.msra.mxu0 0.0
    %163 = vmatprep.subr.mxu0 0.0
    %164 = vmatpush1.msra.mxu0 0.0
    %165 = vmatprep.subr.mxu0 0.0
    %166 = vmatpush1.msra.mxu0 0.0
    %167 = vmatprep.subr.mxu0 0.0
    %168 = vmatpush1.msra.mxu0 0.0
    %169 = vmatprep.subr.mxu0 0.0
    %170 = vmatpush1.msra.mxu0 0.0
    %171 = vmatprep.subr.mxu0 0.0
    %172 = vmatpush1.msra.mxu0 0.0
    %173 = vmatprep.subr.mxu0 0.0
    %174 = vmatpush1.msra.mxu0 0.0
    %175 = vmatprep.subr.mxu0 0.0
    %176 = vmatpush1.msra.mxu0 0.0
    %177 = vmatprep.subr.mxu0 0.0
    %178 = vmatpush1.msra.mxu0 0.0
    %179 = vmatprep.subr.mxu0 0.0
    %180 = vmatpush1.msra.mxu0 0.0
    %181 = vmatprep.subr.mxu0 0.0
    %182 = vmatpush1.msra.mxu0 %v143
    %183 = vmatprep.subr.mxu0 0.0
    %184 = vmatpush1.msra.mxu0 %v142
    %185 = vmatprep.subr.mxu0 0.0
    %186 = vmatpush1.msra.mxu0 %v141
    %187 = vmatprep.subr.mxu0 0.0
    %188 = vmatpush1.msra.mxu0 %v140
    %189 = vmatprep.subr.mxu0 0.0
    %190 = vmatpush2.msra.mxu0 0.0
    %191 = vmatprep.subr.mxu0 0.0
    %192 = vmatpush2.msra.mxu0 0.0
    %193 = vmatprep.subr.mxu0 0.0
    %194 = vmatpush2.msra.mxu0 0.0
    %195 = vmatprep.subr.mxu0 0.0
    %196 = vmatpush2.msra.mxu0 0.0
    %197 = vmatprep.subr.mxu0 0.0
    %198 = vmatpush2.msra.mxu0 0.0
    %199 = vmatprep.subr.mxu0 0.0
    %200 = vmatpush2.msra.mxu0 0.0
    %201 = vmatprep.subr.mxu0 0.0
    %202 = vmatpush2.msra.mxu0 0.0
    %203 = vmatprep.subr.mxu0 0.0
    %204 = vmatpush2.msra.mxu0 0.0
    %205 = vmatprep.subr.mxu0 0.0
    %206 = vmatpush2.msra.mxu0 0.0
    %207 = vmatprep.subr.mxu0 0.0
    %208 = vmatpush2.msra.mxu0 0.0
    %209 = vmatprep.subr.mxu0 0.0
    %210 = vmatpush2.msra.mxu0 0.0
    %211 = vmatprep.subr.mxu0 0.0
    %212 = vmatpush2.msra.mxu0 0.0
    %213 = vmatprep.subr.mxu0 0.0
    %214 = vmatpush2.msra.mxu0 0.0
    %215 = vmatprep.subr.mxu0 0.0
    %216 = vmatpush2.msra.mxu0 0.0
    %217 = vmatprep.subr.mxu0 0.0
    %218 = vmatpush2.msra.mxu0 0.0
    %219 = vmatprep.subr.mxu0 0.0
    %220 = vmatpush2.msra.mxu0 0.0
    %221 = vmatprep.mubr.f32.mxu0 0.0
    %222 = vmatmul.mubr.f32.gmra.mxu0 %v152
    %v223 = vpop.f32.mrf.mxu0
    %v224 = vadd.f32 %v149, %v223
    %v225 = vpop.f32.mrf.mxu0
    %226 = vmatprep.mubr.f32.mxu0 0.0
    %227 = vmatmul.mubr.f32.gmra.mxu0 %v155
    %v228 = vpop.f32.mrf.mxu0
    %v229 = vadd.f32 %v149, %v228
    %v230 = vpop.f32.mrf.mxu0
    %231 = vdwg.mxu0
    %v232 = vmul.f32 %v224, 0.35355338
    %v233 = vmul.f32 %v229, 0.35355338
    %235 = vrot.lane.b32.xlu0 %v224, 96
    %v236 = vpop.permute.xlu0 %235
    %vm237 = vcmask 64512
    %v239 = vsel %vm237, %v232, 0
    %v241 = vsel %vm237, %v236, 0
    %243 = vmatprep.subr.mxu0 0.0
    %244 = vmatpush1.xpose.msra.mxu0 0.0
    %245 = vmatprep.subr.mxu0 0.0
    %246 = vmatpush1.xpose.msra.mxu0 0.0
    %247 = vmatprep.subr.mxu0 0.0
    %248 = vmatpush1.xpose.msra.mxu0 0.0
    %249 = vmatprep.subr.mxu0 0.0
    %250 = vmatpush1.xpose.msra.mxu0 0.0
    %251 = vmatprep.subr.mxu0 0.0
    %252 = vmatpush1.xpose.msra.mxu0 0.0
    %253 = vmatprep.subr.mxu0 0.0
    %254 = vmatpush1.xpose.msra.mxu0 0.0
    %255 = vmatprep.subr.mxu0 0.0
    %256 = vmatpush1.xpose.msra.mxu0 0.0
    %257 = vmatprep.subr.mxu0 0.0
    %258 = vmatpush1.xpose.msra.mxu0 0.0
    %259 = vmatprep.subr.mxu0 0.0
    %260 = vmatpush1.xpose.msra.mxu0 0.0
    %261 = vmatprep.subr.mxu0 0.0
    %262 = vmatpush1.xpose.msra.mxu0 0.0
    %263 = vmatprep.subr.mxu0 0.0
    %264 = vmatpush1.xpose.msra.mxu0 0.0
    %265 = vmatprep.subr.mxu0 0.0
    %266 = vmatpush1.xpose.msra.mxu0 0.0
    %267 = vmatprep.subr.mxu0 0.0
    %268 = vmatpush1.xpose.msra.mxu0 0.0
    %269 = vmatprep.subr.mxu0 0.0
    %270 = vmatpush1.xpose.msra.mxu0 0.0
    %271 = vmatprep.subr.mxu0 0.0
    %272 = vmatpush1.xpose.msra.mxu0 0.0
    %273 = vmatprep.subr.mxu0 0.0
    %274 = vmatpush1.xpose.msra.mxu0 %v241
    %275 = vmatprep.subr.mxu0 0.0
    %276 = vmatpush2.xpose.msra.mxu0 0.0
    %277 = vmatprep.subr.mxu0 0.0
    %278 = vmatpush2.xpose.msra.mxu0 0.0
    %279 = vmatprep.subr.mxu0 0.0
    %280 = vmatpush2.xpose.msra.mxu0 0.0
    %281 = vmatprep.subr.mxu0 0.0
    %282 = vmatpush2.xpose.msra.mxu0 0.0
    %283 = vmatprep.subr.mxu0 0.0
    %284 = vmatpush2.xpose.msra.mxu0 0.0
    %285 = vmatprep.subr.mxu0 0.0
    %286 = vmatpush2.xpose.msra.mxu0 0.0
    %287 = vmatprep.subr.mxu0 0.0
    %288 = vmatpush2.xpose.msra.mxu0 0.0
    %289 = vmatprep.subr.mxu0 0.0
    %290 = vmatpush2.xpose.msra.mxu0 0.0
    %291 = vmatprep.subr.mxu0 0.0
    %292 = vmatpush2.xpose.msra.mxu0 0.0
    %293 = vmatprep.subr.mxu0 0.0
    %294 = vmatpush2.xpose.msra.mxu0 0.0
    %295 = vmatprep.subr.mxu0 0.0
    %296 = vmatpush2.xpose.msra.mxu0 0.0
    %297 = vmatprep.subr.mxu0 0.0
    %298 = vmatpush2.xpose.msra.mxu0 0.0
    %299 = vmatprep.subr.mxu0 0.0
    %300 = vmatpush2.xpose.msra.mxu0 0.0
    %301 = vmatprep.subr.mxu0 0.0
    %302 = vmatpush2.xpose.msra.mxu0 0.0
    %303 = vmatprep.subr.mxu0 0.0
    %304 = vmatpush2.xpose.msra.mxu0 0.0
    %305 = vmatprep.subr.mxu0 0.0
    %306 = vmatpush2.xpose.msra.mxu0 0.0
    %307 = vmatprep.mubr.f32.mxu0 0.0
    %308 = vmatmul.mubr.f32.gmra.mxu0 %v239
    %v309 = vpop.f32.mrf.mxu0
    %v310 = vadd.f32 0.0, %v309
    %v311 = vpop.f32.mrf.mxu0
    %312 = vdwg.mxu0
    %314 = vrot.lane.b32.xlu0 %v229, 96
    %v315 = vpop.permute.xlu0 %314
    %v317 = vsel %vm237, %v233, 0
    %v319 = vsel %vm237, %v315, 0
    %321 = vmatprep.subr.mxu0 0.0
    %322 = vmatpush1.xpose.msra.mxu0 0.0
    %323 = vmatprep.subr.mxu0 0.0
    %324 = vmatpush1.xpose.msra.mxu0 0.0
    %325 = vmatprep.subr.mxu0 0.0
    %326 = vmatpush1.xpose.msra.mxu0 0.0
    %327 = vmatprep.subr.mxu0 0.0
    %328 = vmatpush1.xpose.msra.mxu0 0.0
    %329 = vmatprep.subr.mxu0 0.0
    %330 = vmatpush1.xpose.msra.mxu0 0.0
    %331 = vmatprep.subr.mxu0 0.0
    %332 = vmatpush1.xpose.msra.mxu0 0.0
    %333 = vmatprep.subr.mxu0 0.0
    %334 = vmatpush1.xpose.msra.mxu0 0.0
    %335 = vmatprep.subr.mxu0 0.0
    %336 = vmatpush1.xpose.msra.mxu0 0.0
    %337 = vmatprep.subr.mxu0 0.0
    %338 = vmatpush1.xpose.msra.mxu0 0.0
    %339 = vmatprep.subr.mxu0 0.0
    %340 = vmatpush1.xpose.msra.mxu0 0.0
    %341 = vmatprep.subr.mxu0 0.0
    %342 = vmatpush1.xpose.msra.mxu0 0.0
    %343 = vmatprep.subr.mxu0 0.0
    %344 = vmatpush1.xpose.msra.mxu0 0.0
    %345 = vmatprep.subr.mxu0 0.0
    %346 = vmatpush1.xpose.msra.mxu0 0.0
    %347 = vmatprep.subr.mxu0 0.0
    %348 = vmatpush1.xpose.msra.mxu0 0.0
    %349 = vmatprep.subr.mxu0 0.0
    %350 = vmatpush1.xpose.msra.mxu0 0.0
    %351 = vmatprep.subr.mxu0 0.0
    %352 = vmatpush1.xpose.msra.mxu0 %v319
    %353 = vmatprep.subr.mxu0 0.0
    %354 = vmatpush2.xpose.msra.mxu0 0.0
    %355 = vmatprep.subr.mxu0 0.0
    %356 = vmatpush2.xpose.msra.mxu0 0.0
    %357 = vmatprep.subr.mxu0 0.0
    %358 = vmatpush2.xpose.msra.mxu0 0.0
    %359 = vmatprep.subr.mxu0 0.0
    %360 = vmatpush2.xpose.msra.mxu0 0.0
    %361 = vmatprep.subr.mxu0 0.0
    %362 = vmatpush2.xpose.msra.mxu0 0.0
    %363 = vmatprep.subr.mxu0 0.0
    %364 = vmatpush2.xpose.msra.mxu0 0.0
    %365 = vmatprep.subr.mxu0 0.0
    %366 = vmatpush2.xpose.msra.mxu0 0.0
    %367 = vmatprep.subr.mxu0 0.0
    %368 = vmatpush2.xpose.msra.mxu0 0.0
    %369 = vmatprep.subr.mxu0 0.0
    %370 = vmatpush2.xpose.msra.mxu0 0.0
    %371 = vmatprep.subr.mxu0 0.0
    %372 = vmatpush2.xpose.msra.mxu0 0.0
    %373 = vmatprep.subr.mxu0 0.0
    %374 = vmatpush2.xpose.msra.mxu0 0.0
    %375 = vmatprep.subr.mxu0 0.0
    %376 = vmatpush2.xpose.msra.mxu0 0.0
    %377 = vmatprep.subr.mxu0 0.0
    %378 = vmatpush2.xpose.msra.mxu0 0.0
    %379 = vmatprep.subr.mxu0 0.0
    %380 = vmatpush2.xpose.msra.mxu0 0.0
    %381 = vmatprep.subr.mxu0 0.0
    %382 = vmatpush2.xpose.msra.mxu0 0.0
    %383 = vmatprep.subr.mxu0 0.0
    %384 = vmatpush2.xpose.msra.mxu0 0.0
    %385 = vmatprep.mubr.f32.mxu0 0.0
    %386 = vmatmul.mubr.f32.gmra.mxu0 %v317
    %v387 = vpop.f32.mrf.mxu0
    %v388 = vadd.f32 0.0, %v387
    %v389 = vpop.f32.mrf.mxu0
    %390 = vdwg.mxu0
    %v391 = vsel %vm237, %v310, -inf
    %392 = vmax.xlane.f32.xlu0 %v391
    %v393 = vpop.xlane.xlu0 %392
    %v394 = vsel %vm237, %v388, -inf
    %395 = vmax.xlane.f32.xlu0 %v394
    %v396 = vpop.xlane.xlu0 %395
    %v397 = vsub.f32 %v310, %v393
    %v398 = vsub.f32 %v388, %v396
    %v399 = vmul.f32 %v397, 1.442695
    %v400 = vpow.pop %v399
    %v401 = vmul.f32 %v398, 1.442695
    %v402 = vpow.pop %v401
    %v403 = vsel %vm237, %v400, 0.0
    %404 = vadd.xlane.f32.xlu0 %v403
    %v405 = vpop.xlane.xlu0 %404
    %v406 = vsel %vm237, %v402, 0.0
    %407 = vadd.xlane.f32.xlu0 %v406
    %v408 = vpop.xlane.xlu0 %407
    %v409 = vrcp.pop %v405
    %v410 = vrcp.pop %v408
    %v411 = vmul.f32 %v400, %v409
    %v412 = vmul.f32 %v402, %v410
    %413 = vrot.lane.b32.xlu0 %v224, 64
    %v414 = vpop.permute.xlu0 %413
    %v417 = vsel %vm237, %v411, 0
    %419 = vmatprep.subr.mxu0 0.0
    %420 = vmatpush1.msra.mxu0 0.0
    %421 = vmatprep.subr.mxu0 0.0
    %422 = vmatpush1.msra.mxu0 0.0
    %423 = vmatprep.subr.mxu0 0.0
    %424 = vmatpush1.msra.mxu0 0.0
    %425 = vmatprep.subr.mxu0 0.0
    %426 = vmatpush1.msra.mxu0 0.0
    %427 = vmatprep.subr.mxu0 0.0
    %428 = vmatpush1.msra.mxu0 0.0
    %429 = vmatprep.subr.mxu0 0.0
    %430 = vmatpush1.msra.mxu0 0.0
    %431 = vmatprep.subr.mxu0 0.0
    %432 = vmatpush1.msra.mxu0 0.0
    %433 = vmatprep.subr.mxu0 0.0
    %434 = vmatpush1.msra.mxu0 0.0
    %435 = vmatprep.subr.mxu0 0.0
    %436 = vmatpush1.msra.mxu0 0.0
    %437 = vmatprep.subr.mxu0 0.0
    %438 = vmatpush1.msra.mxu0 0.0
    %439 = vmatprep.subr.mxu0 0.0
    %440 = vmatpush1.msra.mxu0 0.0
    %441 = vmatprep.subr.mxu0 0.0
    %442 = vmatpush1.msra.mxu0 0.0
    %443 = vmatprep.subr.mxu0 0.0
    %444 = vmatpush1.msra.mxu0 0.0
    %445 = vmatprep.subr.mxu0 0.0
    %446 = vmatpush1.msra.mxu0 0.0
    %447 = vmatprep.subr.mxu0 0.0
    %448 = vmatpush1.msra.mxu0 0.0
    %449 = vmatprep.subr.mxu0 0.0
    %450 = vmatpush1.msra.mxu0 %v414
    %451 = vmatprep.subr.mxu0 0.0
    %452 = vmatpush2.msra.mxu0 0.0
    %453 = vmatprep.subr.mxu0 0.0
    %454 = vmatpush2.msra.mxu0 0.0
    %455 = vmatprep.subr.mxu0 0.0
    %456 = vmatpush2.msra.mxu0 0.0
    %457 = vmatprep.subr.mxu0 0.0
    %458 = vmatpush2.msra.mxu0 0.0
    %459 = vmatprep.subr.mxu0 0.0
    %460 = vmatpush2.msra.mxu0 0.0
    %461 = vmatprep.subr.mxu0 0.0
    %462 = vmatpush2.msra.mxu0 0.0
    %463 = vmatprep.subr.mxu0 0.0
    %464 = vmatpush2.msra.mxu0 0.0
    %465 = vmatprep.subr.mxu0 0.0
    %466 = vmatpush2.msra.mxu0 0.0
    %467 = vmatprep.subr.mxu0 0.0
    %468 = vmatpush2.msra.mxu0 0.0
    %469 = vmatprep.subr.mxu0 0.0
    %470 = vmatpush2.msra.mxu0 0.0
    %471 = vmatprep.subr.mxu0 0.0
    %472 = vmatpush2.msra.mxu0 0.0
    %473 = vmatprep.subr.mxu0 0.0
    %474 = vmatpush2.msra.mxu0 0.0
    %475 = vmatprep.subr.mxu0 0.0
    %476 = vmatpush2.msra.mxu0 0.0
    %477 = vmatprep.subr.mxu0 0.0
    %478 = vmatpush2.msra.mxu0 0.0
    %479 = vmatprep.subr.mxu0 0.0
    %480 = vmatpush2.msra.mxu0 0.0
    %481 = vmatprep.subr.mxu0 0.0
    %482 = vmatpush2.msra.mxu0 0.0
    %483 = vmatprep.mubr.f32.mxu0 0.0
    %484 = vmatmul.mubr.f32.gmra.mxu0 %v417
    %v485 = vpop.f32.mrf.mxu0
    %v486 = vadd.f32 0.0, %v485
    %v487 = vpop.f32.mrf.mxu0
    %488 = vdwg.mxu0
    %489 = vrot.lane.b32.xlu0 %v229, 64
    %v490 = vpop.permute.xlu0 %489
    %v493 = vsel %vm237, %v412, 0
    %495 = vmatprep.subr.mxu0 0.0
    %496 = vmatpush1.msra.mxu0 0.0
    %497 = vmatprep.subr.mxu0 0.0
    %498 = vmatpush1.msra.mxu0 0.0
    %499 = vmatprep.subr.mxu0 0.0
    %500 = vmatpush1.msra.mxu0 0.0
    %501 = vmatprep.subr.mxu0 0.0
    %502 = vmatpush1.msra.mxu0 0.0
    %503 = vmatprep.subr.mxu0 0.0
    %504 = vmatpush1.msra.mxu0 0.0
    %505 = vmatprep.subr.mxu0 0.0
    %506 = vmatpush1.msra.mxu0 0.0
    %507 = vmatprep.subr.mxu0 0.0
    %508 = vmatpush1.msra.mxu0 0.0
    %509 = vmatprep.subr.mxu0 0.0
    %510 = vmatpush1.msra.mxu0 0.0
    %511 = vmatprep.subr.mxu0 0.0
    %512 = vmatpush1.msra.mxu0 0.0
    %513 = vmatprep.subr.mxu0 0.0
    %514 = vmatpush1.msra.mxu0 0.0
    %515 = vmatprep.subr.mxu0 0.0
    %516 = vmatpush1.msra.mxu0 0.0
    %517 = vmatprep.subr.mxu0 0.0
    %518 = vmatpush1.msra.mxu0 0.0
    %519 = vmatprep.subr.mxu0 0.0
    %520 = vmatpush1.msra.mxu0 0.0
    %521 = vmatprep.subr.mxu0 0.0
    %522 = vmatpush1.msra.mxu0 0.0
    %523 = vmatprep.subr.mxu0 0.0
    %524 = vmatpush1.msra.mxu0 0.0
    %525 = vmatprep.subr.mxu0 0.0
    %526 = vmatpush1.msra.mxu0 %v490
    %527 = vmatprep.subr.mxu0 0.0
    %528 = vmatpush2.msra.mxu0 0.0
    %529 = vmatprep.subr.mxu0 0.0
    %530 = vmatpush2.msra.mxu0 0.0
    %531 = vmatprep.subr.mxu0 0.0
    %532 = vmatpush2.msra.mxu0 0.0
    %533 = vmatprep.subr.mxu0 0.0
    %534 = vmatpush2.msra.mxu0 0.0
    %535 = vmatprep.subr.mxu0 0.0
    %536 = vmatpush2.msra.mxu0 0.0
    %537 = vmatprep.subr.mxu0 0.0
    %538 = vmatpush2.msra.mxu0 0.0
    %539 = vmatprep.subr.mxu0 0.0
    %540 = vmatpush2.msra.mxu0 0.0
    %541 = vmatprep.subr.mxu0 0.0
    %542 = vmatpush2.msra.mxu0 0.0
    %543 = vmatprep.subr.mxu0 0.0
    %544 = vmatpush2.msra.mxu0 0.0
    %545 = vmatprep.subr.mxu0 0.0
    %546 = vmatpush2.msra.mxu0 0.0
    %547 = vmatprep.subr.mxu0 0.0
    %548 = vmatpush2.msra.mxu0 0.0
    %549 = vmatprep.subr.mxu0 0.0
    %550 = vmatpush2.msra.mxu0 0.0
    %551 = vmatprep.subr.mxu0 0.0
    %552 = vmatpush2.msra.mxu0 0.0
    %553 = vmatprep.subr.mxu0 0.0
    %554 = vmatpush2.msra.mxu0 0.0
    %555 = vmatprep.subr.mxu0 0.0
    %556 = vmatpush2.msra.mxu0 0.0
    %557 = vmatprep.subr.mxu0 0.0
    %558 = vmatpush2.msra.mxu0 0.0
    %559 = vmatprep.mubr.f32.mxu0 0.0
    %560 = vmatmul.mubr.f32.gmra.mxu0 %v493
    %v561 = vpop.f32.mrf.mxu0
    %v562 = vadd.f32 0.0, %v561
    %v563 = vpop.f32.mrf.mxu0
    %564 = vdwg.mxu0
    %565 = vrot.lane.b32.xlu0 %v232, 120
    %v566 = vpop.permute.xlu0 %565
    %567 = vrot.lane.b32.xlu0 %v224, 88
    %v568 = vpop.permute.xlu0 %567
    %v569 = vsel %vm237, %v566, 0
    %v571 = vsel %vm237, %v568, 0
    %573 = vmatprep.subr.mxu0 0.0
    %574 = vmatpush1.xpose.msra.mxu0 0.0
    %575 = vmatprep.subr.mxu0 0.0
    %576 = vmatpush1.xpose.msra.mxu0 0.0
    %577 = vmatprep.subr.mxu0 0.0
    %578 = vmatpush1.xpose.msra.mxu0 0.0
    %579 = vmatprep.subr.mxu0 0.0
    %580 = vmatpush1.xpose.msra.mxu0 0.0
    %581 = vmatprep.subr.mxu0 0.0
    %582 = vmatpush1.xpose.msra.mxu0 0.0
    %583 = vmatprep.subr.mxu0 0.0
    %584 = vmatpush1.xpose.msra.mxu0 0.0
    %585 = vmatprep.subr.mxu0 0.0
    %586 = vmatpush1.xpose.msra.mxu0 0.0
    %587 = vmatprep.subr.mxu0 0.0
    %588 = vmatpush1.xpose.msra.mxu0 0.0
    %589 = vmatprep.subr.mxu0 0.0
    %590 = vmatpush1.xpose.msra.mxu0 0.0
    %591 = vmatprep.subr.mxu0 0.0
    %592 = vmatpush1.xpose.msra.mxu0 0.0
    %593 = vmatprep.subr.mxu0 0.0
    %594 = vmatpush1.xpose.msra.mxu0 0.0
    %595 = vmatprep.subr.mxu0 0.0
    %596 = vmatpush1.xpose.msra.mxu0 0.0
    %597 = vmatprep.subr.mxu0 0.0
    %598 = vmatpush1.xpose.msra.mxu0 0.0
    %599 = vmatprep.subr.mxu0 0.0
    %600 = vmatpush1.xpose.msra.mxu0 0.0
    %601 = vmatprep.subr.mxu0 0.0
    %602 = vmatpush1.xpose.msra.mxu0 0.0
    %603 = vmatprep.subr.mxu0 0.0
    %604 = vmatpush1.xpose.msra.mxu0 %v571
    %605 = vmatprep.subr.mxu0 0.0
    %606 = vmatpush2.xpose.msra.mxu0 0.0
    %607 = vmatprep.subr.mxu0 0.0
    %608 = vmatpush2.xpose.msra.mxu0 0.0
    %609 = vmatprep.subr.mxu0 0.0
    %610 = vmatpush2.xpose.msra.mxu0 0.0
    %611 = vmatprep.subr.mxu0 0.0
    %612 = vmatpush2.xpose.msra.mxu0 0.0
    %613 = vmatprep.subr.mxu0 0.0
    %614 = vmatpush2.xpose.msra.mxu0 0.0
    %615 = vmatprep.subr.mxu0 0.0
    %616 = vmatpush2.xpose.msra.mxu0 0.0
    %617 = vmatprep.subr.mxu0 0.0
    %618 = vmatpush2.xpose.msra.mxu0 0.0
    %619 = vmatprep.subr.mxu0 0.0
    %620 = vmatpush2.xpose.msra.mxu0 0.0
    %621 = vmatprep.subr.mxu0 0.0
    %622 = vmatpush2.xpose.msra.mxu0 0.0
    %623 = vmatprep.subr.mxu0 0.0
    %624 = vmatpush2.xpose.msra.mxu0 0.0
    %625 = vmatprep.subr.mxu0 0.0
    %626 = vmatpush2.xpose.msra.mxu0 0.0
    %627 = vmatprep.subr.mxu0 0.0
    %628 = vmatpush2.xpose.msra.mxu0 0.0
    %629 = vmatprep.subr.mxu0 0.0
    %630 = vmatpush2.xpose.msra.mxu0 0.0
    %631 = vmatprep.subr.mxu0 0.0
    %632 = vmatpush2.xpose.msra.mxu0 0.0
    %633 = vmatprep.subr.mxu0 0.0
    %634 = vmatpush2.xpose.msra.mxu0 0.0
    %635 = vmatprep.subr.mxu0 0.0
    %636 = vmatpush2.xpose.msra.mxu0 0.0
    %637 = vmatprep.mubr.f32.mxu0 0.0
    %638 = vmatmul.mubr.f32.gmra.mxu0 %v569
    %v639 = vpop.f32.mrf.mxu0
    %v640 = vadd.f32 0.0, %v639
    %v641 = vpop.f32.mrf.mxu0
    %642 = vdwg.mxu0
    %643 = vrot.lane.b32.xlu0 %v233, 120
    %v644 = vpop.permute.xlu0 %643
    %645 = vrot.lane.b32.xlu0 %v229, 88
    %v646 = vpop.permute.xlu0 %645
    %v647 = vsel %vm237, %v644, 0
    %v649 = vsel %vm237, %v646, 0
    %651 = vmatprep.subr.mxu0 0.0
    %652 = vmatpush1.xpose.msra.mxu0 0.0
    %653 = vmatprep.subr.mxu0 0.0
    %654 = vmatpush1.xpose.msra.mxu0 0.0
    %655 = vmatprep.subr.mxu0 0.0
    %656 = vmatpush1.xpose.msra.mxu0 0.0
    %657 = vmatprep.subr.mxu0 0.0
    %658 = vmatpush1.xpose.msra.mxu0 0.0
    %659 = vmatprep.subr.mxu0 0.0
    %660 = vmatpush1.xpose.msra.mxu0 0.0
    %661 = vmatprep.subr.mxu0 0.0
    %662 = vmatpush1.xpose.msra.mxu0 0.0
    %663 = vmatprep.subr.mxu0 0.0
    %664 = vmatpush1.xpose.msra.mxu0 0.0
    %665 = vmatprep.subr.mxu0 0.0
    %666 = vmatpush1.xpose.msra.mxu0 0.0
    %667 = vmatprep.subr.mxu0 0.0
    %668 = vmatpush1.xpose.msra.mxu0 0.0
    %669 = vmatprep.subr.mxu0 0.0
    %670 = vmatpush1.xpose.msra.mxu0 0.0
    %671 = vmatprep.subr.mxu0 0.0
    %672 = vmatpush1.xpose.msra.mxu0 0.0
    %673 = vmatprep.subr.mxu0 0.0
    %674 = vmatpush1.xpose.msra.mxu0 0.0
    %675 = vmatprep.subr.mxu0 0.0
    %676 = vmatpush1.xpose.msra.mxu0 0.0
    %677 = vmatprep.subr.mxu0 0.0
    %678 = vmatpush1.xpose.msra.mxu0 0.0
    %679 = vmatprep.subr.mxu0 0.0
    %680 = vmatpush1.xpose.msra.mxu0 0.0
    %681 = vmatprep.subr.mxu0 0.0
    %682 = vmatpush1.xpose.msra.mxu0 %v649
    %683 = vmatprep.subr.mxu0 0.0
    %684 = vmatpush2.xpose.msra.mxu0 0.0
    %685 = vmatprep.subr.mxu0 0.0
    %686 = vmatpush2.xpose.msra.mxu0 0.0
    %687 = vmatprep.subr.mxu0 0.0
    %688 = vmatpush2.xpose.msra.mxu0 0.0
    %689 = vmatprep.subr.mxu0 0.0
    %690 = vmatpush2.xpose.msra.mxu0 0.0
    %691 = vmatprep.subr.mxu0 0.0
    %692 = vmatpush2.xpose.msra.mxu0 0.0
    %693 = vmatprep.subr.mxu0 0.0
    %694 = vmatpush2.xpose.msra.mxu0 0.0
    %695 = vmatprep.subr.mxu0 0.0
    %696 = vmatpush2.xpose.msra.mxu0 0.0
    %697 = vmatprep.subr.mxu0 0.0
    %698 = vmatpush2.xpose.msra.mxu0 0.0
    %699 = vmatprep.subr.mxu0 0.0
    %700 = vmatpush2.xpose.msra.mxu0 0.0
    %701 = vmatprep.subr.mxu0 0.0
    %702 = vmatpush2.xpose.msra.mxu0 0.0
    %703 = vmatprep.subr.mxu0 0.0
    %704 = vmatpush2.xpose.msra.mxu0 0.0
    %705 = vmatprep.subr.mxu0 0.0
    %706 = vmatpush2.xpose.msra.mxu0 0.0
    %707 = vmatprep.subr.mxu0 0.0
    %708 = vmatpush2.xpose.msra.mxu0 0.0
    %709 = vmatprep.subr.mxu0 0.0
    %710 = vmatpush2.xpose.msra.mxu0 0.0
    %711 = vmatprep.subr.mxu0 0.0
    %712 = vmatpush2.xpose.msra.mxu0 0.0
    %713 = vmatprep.subr.mxu0 0.0
    %714 = vmatpush2.xpose.msra.mxu0 0.0
    %715 = vmatprep.mubr.f32.mxu0 0.0
    %716 = vmatmul.mubr.f32.gmra.mxu0 %v647
    %v717 = vpop.f32.mrf.mxu0
    %v718 = vadd.f32 0.0, %v717
    %v719 = vpop.f32.mrf.mxu0
    %720 = vdwg.mxu0
    %v721 = vsel %vm237, %v640, -inf
    %722 = vmax.xlane.f32.xlu0 %v721
    %v723 = vpop.xlane.xlu0 %722
    %v724 = vsel %vm237, %v718, -inf
    %725 = vmax.xlane.f32.xlu0 %v724
    %v726 = vpop.xlane.xlu0 %725
    %v727 = vsub.f32 %v640, %v723
    %v728 = vsub.f32 %v718, %v726
    %v729 = vmul.f32 %v727, 1.442695
    %v730 = vpow.pop %v729
    %v731 = vmul.f32 %v728, 1.442695
    %v732 = vpow.pop %v731
    %v733 = vsel %vm237, %v730, 0.0
    %734 = vadd.xlane.f32.xlu0 %v733
    %v735 = vpop.xlane.xlu0 %734
    %v736 = vsel %vm237, %v732, 0.0
    %737 = vadd.xlane.f32.xlu0 %v736
    %v738 = vpop.xlane.xlu0 %737
    %v739 = vrcp.pop %v735
    %v740 = vrcp.pop %v738
    %v741 = vmul.f32 %v730, %v739
    %v742 = vmul.f32 %v732, %v740
    %743 = vrot.lane.b32.xlu0 %v224, 56
    %v744 = vpop.permute.xlu0 %743
    %v747 = vsel %vm237, %v741, 0
    %749 = vmatprep.subr.mxu0 0.0
    %750 = vmatpush1.msra.mxu0 0.0
    %751 = vmatprep.subr.mxu0 0.0
    %752 = vmatpush1.msra.mxu0 0.0
    %753 = vmatprep.subr.mxu0 0.0
    %754 = vmatpush1.msra.mxu0 0.0
    %755 = vmatprep.subr.mxu0 0.0
    %756 = vmatpush1.msra.mxu0 0.0
    %757 = vmatprep.subr.mxu0 0.0
    %758 = vmatpush1.msra.mxu0 0.0
    %759 = vmatprep.subr.mxu0 0.0
    %760 = vmatpush1.msra.mxu0 0.0
    %761 = vmatprep.subr.mxu0 0.0
    %762 = vmatpush1.msra.mxu0 0.0
    %763 = vmatprep.subr.mxu0 0.0
    %764 = vmatpush1.msra.mxu0 0.0
    %765 = vmatprep.subr.mxu0 0.0
    %766 = vmatpush1.msra.mxu0 0.0
    %767 = vmatprep.subr.mxu0 0.0
    %768 = vmatpush1.msra.mxu0 0.0
    %769 = vmatprep.subr.mxu0 0.0
    %770 = vmatpush1.msra.mxu0 0.0
    %771 = vmatprep.subr.mxu0 0.0
    %772 = vmatpush1.msra.mxu0 0.0
    %773 = vmatprep.subr.mxu0 0.0
    %774 = vmatpush1.msra.mxu0 0.0
    %775 = vmatprep.subr.mxu0 0.0
    %776 = vmatpush1.msra.mxu0 0.0
    %777 = vmatprep.subr.mxu0 0.0
    %778 = vmatpush1.msra.mxu0 0.0
    %779 = vmatprep.subr.mxu0 0.0
    %780 = vmatpush1.msra.mxu0 %v744
    %781 = vmatprep.subr.mxu0 0.0
    %782 = vmatpush2.msra.mxu0 0.0
    %783 = vmatprep.subr.mxu0 0.0
    %784 = vmatpush2.msra.mxu0 0.0
    %785 = vmatprep.subr.mxu0 0.0
    %786 = vmatpush2.msra.mxu0 0.0
    %787 = vmatprep.subr.mxu0 0.0
    %788 = vmatpush2.msra.mxu0 0.0
    %789 = vmatprep.subr.mxu0 0.0
    %790 = vmatpush2.msra.mxu0 0.0
    %791 = vmatprep.subr.mxu0 0.0
    %792 = vmatpush2.msra.mxu0 0.0
    %793 = vmatprep.subr.mxu0 0.0
    %794 = vmatpush2.msra.mxu0 0.0
    %795 = vmatprep.subr.mxu0 0.0
    %796 = vmatpush2.msra.mxu0 0.0
    %797 = vmatprep.subr.mxu0 0.0
    %798 = vmatpush2.msra.mxu0 0.0
    %799 = vmatprep.subr.mxu0 0.0
    %800 = vmatpush2.msra.mxu0 0.0
    %801 = vmatprep.subr.mxu0 0.0
    %802 = vmatpush2.msra.mxu0 0.0
    %803 = vmatprep.subr.mxu0 0.0
    %804 = vmatpush2.msra.mxu0 0.0
    %805 = vmatprep.subr.mxu0 0.0
    %806 = vmatpush2.msra.mxu0 0.0
    %807 = vmatprep.subr.mxu0 0.0
    %808 = vmatpush2.msra.mxu0 0.0
    %809 = vmatprep.subr.mxu0 0.0
    %810 = vmatpush2.msra.mxu0 0.0
    %811 = vmatprep.subr.mxu0 0.0
    %812 = vmatpush2.msra.mxu0 0.0
    %813 = vmatprep.mubr.f32.mxu0 0.0
    %814 = vmatmul.mubr.f32.gmra.mxu0 %v747
    %v815 = vpop.f32.mrf.mxu0
    %v816 = vadd.f32 0.0, %v815
    %v817 = vpop.f32.mrf.mxu0
    %818 = vdwg.mxu0
    %819 = vrot.lane.b32.xlu0 %v229, 56
    %v820 = vpop.permute.xlu0 %819
    %v823 = vsel %vm237, %v742, 0
    %825 = vmatprep.subr.mxu0 0.0
    %826 = vmatpush1.msra.mxu0 0.0
    %827 = vmatprep.subr.mxu0 0.0
    %828 = vmatpush1.msra.mxu0 0.0
    %829 = vmatprep.subr.mxu0 0.0
    %830 = vmatpush1.msra.mxu0 0.0
    %831 = vmatprep.subr.mxu0 0.0
    %832 = vmatpush1.msra.mxu0 0.0
    %833 = vmatprep.subr.mxu0 0.0
    %834 = vmatpush1.msra.mxu0 0.0
    %835 = vmatprep.subr.mxu0 0.0
    %836 = vmatpush1.msra.mxu0 0.0
    %837 = vmatprep.subr.mxu0 0.0
    %838 = vmatpush1.msra.mxu0 0.0
    %839 = vmatprep.subr.mxu0 0.0
    %840 = vmatpush1.msra.mxu0 0.0
    %841 = vmatprep.subr.mxu0 0.0
    %842 = vmatpush1.msra.mxu0 0.0
    %843 = vmatprep.subr.mxu0 0.0
    %844 = vmatpush1.msra.mxu0 0.0
    %845 = vmatprep.subr.mxu0 0.0
    %846 = vmatpush1.msra.mxu0 0.0
    %847 = vmatprep.subr.mxu0 0.0
    %848 = vmatpush1.msra.mxu0 0.0
    %849 = vmatprep.subr.mxu0 0.0
    %850 = vmatpush1.msra.mxu0 0.0
    %851 = vmatprep.subr.mxu0 0.0
    %852 = vmatpush1.msra.mxu0 0.0
    %853 = vmatprep.subr.mxu0 0.0
    %854 = vmatpush1.msra.mxu0 0.0
    %855 = vmatprep.subr.mxu0 0.0
    %856 = vmatpush1.msra.mxu0 %v820
    %857 = vmatprep.subr.mxu0 0.0
    %858 = vmatpush2.msra.mxu0 0.0
    %859 = vmatprep.subr.mxu0 0.0
    %860 = vmatpush2.msra.mxu0 0.0
    %861 = vmatprep.subr.mxu0 0.0
    %862 = vmatpush2.msra.mxu0 0.0
    %863 = vmatprep.subr.mxu0 0.0
    %864 = vmatpush2.msra.mxu0 0.0
    %865 = vmatprep.subr.mxu0 0.0
    %866 = vmatpush2.msra.mxu0 0.0
    %867 = vmatprep.subr.mxu0 0.0
    %868 = vmatpush2.msra.mxu0 0.0
    %869 = vmatprep.subr.mxu0 0.0
    %870 = vmatpush2.msra.mxu0 0.0
    %871 = vmatprep.subr.mxu0 0.0
    %872 = vmatpush2.msra.mxu0 0.0
    %873 = vmatprep.subr.mxu0 0.0
    %874 = vmatpush2.msra.mxu0 0.0
    %875 = vmatprep.subr.mxu0 0.0
    %876 = vmatpush2.msra.mxu0 0.0
    %877 = vmatprep.subr.mxu0 0.0
    %878 = vmatpush2.msra.mxu0 0.0
    %879 = vmatprep.subr.mxu0 0.0
    %880 = vmatpush2.msra.mxu0 0.0
    %881 = vmatprep.subr.mxu0 0.0
    %882 = vmatpush2.msra.mxu0 0.0
    %883 = vmatprep.subr.mxu0 0.0
    %884 = vmatpush2.msra.mxu0 0.0
    %885 = vmatprep.subr.mxu0 0.0
    %886 = vmatpush2.msra.mxu0 0.0
    %887 = vmatprep.subr.mxu0 0.0
    %888 = vmatpush2.msra.mxu0 0.0
    %889 = vmatprep.mubr.f32.mxu0 0.0
    %890 = vmatmul.mubr.f32.gmra.mxu0 %v823
    %v891 = vpop.f32.mrf.mxu0
    %v892 = vadd.f32 0.0, %v891
    %v893 = vpop.f32.mrf.mxu0
    %894 = vdwg.mxu0
    %895 = vrot.lane.b32.xlu0 %v232, 112
    %v896 = vpop.permute.xlu0 %895
    %897 = vrot.lane.b32.xlu0 %v224, 80
    %v898 = vpop.permute.xlu0 %897
    %v899 = vsel %vm237, %v896, 0
    %v901 = vsel %vm237, %v898, 0
    %903 = vmatprep.subr.mxu0 0.0
    %904 = vmatpush1.xpose.msra.mxu0 0.0
    %905 = vmatprep.subr.mxu0 0.0
    %906 = vmatpush1.xpose.msra.mxu0 0.0
    %907 = vmatprep.subr.mxu0 0.0
    %908 = vmatpush1.xpose.msra.mxu0 0.0
    %909 = vmatprep.subr.mxu0 0.0
    %910 = vmatpush1.xpose.msra.mxu0 0.0
    %911 = vmatprep.subr.mxu0 0.0
    %912 = vmatpush1.xpose.msra.mxu0 0.0
    %913 = vmatprep.subr.mxu0 0.0
    %914 = vmatpush1.xpose.msra.mxu0 0.0
    %915 = vmatprep.subr.mxu0 0.0
    %916 = vmatpush1.xpose.msra.mxu0 0.0
    %917 = vmatprep.subr.mxu0 0.0
    %918 = vmatpush1.xpose.msra.mxu0 0.0
    %919 = vmatprep.subr.mxu0 0.0
    %920 = vmatpush1.xpose.msra.mxu0 0.0
    %921 = vmatprep.subr.mxu0 0.0
    %922 = vmatpush1.xpose.msra.mxu0 0.0
    %923 = vmatprep.subr.mxu0 0.0
    %924 = vmatpush1.xpose.msra.mxu0 0.0
    %925 = vmatprep.subr.mxu0 0.0
    %926 = vmatpush1.xpose.msra.mxu0 0.0
    %927 = vmatprep.subr.mxu0 0.0
    %928 = vmatpush1.xpose.msra.mxu0 0.0
    %929 = vmatprep.subr.mxu0 0.0
    %930 = vmatpush1.xpose.msra.mxu0 0.0
    %931 = vmatprep.subr.mxu0 0.0
    %932 = vmatpush1.xpose.msra.mxu0 0.0
    %933 = vmatprep.subr.mxu0 0.0
    %934 = vmatpush1.xpose.msra.mxu0 %v901
    %935 = vmatprep.subr.mxu0 0.0
    %936 = vmatpush2.xpose.msra.mxu0 0.0
    %937 = vmatprep.subr.mxu0 0.0
    %938 = vmatpush2.xpose.msra.mxu0 0.0
    %939 = vmatprep.subr.mxu0 0.0
    %940 = vmatpush2.xpose.msra.mxu0 0.0
    %941 = vmatprep.subr.mxu0 0.0
    %942 = vmatpush2.xpose.msra.mxu0 0.0
    %943 = vmatprep.subr.mxu0 0.0
    %944 = vmatpush2.xpose.msra.mxu0 0.0
    %945 = vmatprep.subr.mxu0 0.0
    %946 = vmatpush2.xpose.msra.mxu0 0.0
    %947 = vmatprep.subr.mxu0 0.0
    %948 = vmatpush2.xpose.msra.mxu0 0.0
    %949 = vmatprep.subr.mxu0 0.0
    %950 = vmatpush2.xpose.msra.mxu0 0.0
    %951 = vmatprep.subr.mxu0 0.0
    %952 = vmatpush2.xpose.msra.mxu0 0.0
    %953 = vmatprep.subr.mxu0 0.0
    %954 = vmatpush2.xpose.msra.mxu0 0.0
    %955 = vmatprep.subr.mxu0 0.0
    %956 = vmatpush2.xpose.msra.mxu0 0.0
    %957 = vmatprep.subr.mxu0 0.0
    %958 = vmatpush2.xpose.msra.mxu0 0.0
    %959 = vmatprep.subr.mxu0 0.0
    %960 = vmatpush2.xpose.msra.mxu0 0.0
    %961 = vmatprep.subr.mxu0 0.0
    %962 = vmatpush2.xpose.msra.mxu0 0.0
    %963 = vmatprep.subr.mxu0 0.0
    %964 = vmatpush2.xpose.msra.mxu0 0.0
    %965 = vmatprep.subr.mxu0 0.0
    %966 = vmatpush2.xpose.msra.mxu0 0.0
    %967 = vmatprep.mubr.f32.mxu0 0.0
    %968 = vmatmul.mubr.f32.gmra.mxu0 %v899
    %v969 = vpop.f32.mrf.mxu0
    %v970 = vadd.f32 0.0, %v969
    %v971 = vpop.f32.mrf.mxu0
    %972 = vdwg.mxu0
    %973 = vrot.lane.b32.xlu0 %v233, 112
    %v974 = vpop.permute.xlu0 %973
    %975 = vrot.lane.b32.xlu0 %v229, 80
    %v976 = vpop.permute.xlu0 %975
    %v977 = vsel %vm237, %v974, 0
    %v979 = vsel %vm237, %v976, 0
    %981 = vmatprep.subr.mxu0 0.0
    %982 = vmatpush1.xpose.msra.mxu0 0.0
    %983 = vmatprep.subr.mxu0 0.0
    %984 = vmatpush1.xpose.msra.mxu0 0.0
    %985 = vmatprep.subr.mxu0 0.0
    %986 = vmatpush1.xpose.msra.mxu0 0.0
    %987 = vmatprep.subr.mxu0 0.0
    %988 = vmatpush1.xpose.msra.mxu0 0.0
    %989 = vmatprep.subr.mxu0 0.0
    %990 = vmatpush1.xpose.msra.mxu0 0.0
    %991 = vmatprep.subr.mxu0 0.0
    %992 = vmatpush1.xpose.msra.mxu0 0.0
    %993 = vmatprep.subr.mxu0 0.0
    %994 = vmatpush1.xpose.msra.mxu0 0.0
    %995 = vmatprep.subr.mxu0 0.0
    %996 = vmatpush1.xpose.msra.mxu0 0.0
    %997 = vmatprep.subr.mxu0 0.0
    %998 = vmatpush1.xpose.msra.mxu0 0.0
    %999 = vmatprep.subr.mxu0 0.0
    %1000 = vmatpush1.xpose.msra.mxu0 0.0
    %1001 = vmatprep.subr.mxu0 0.0
    %1002 = vmatpush1.xpose.msra.mxu0 0.0
    %1003 = vmatprep.subr.mxu0 0.0
    %1004 = vmatpush1.xpose.msra.mxu0 0.0
    %1005 = vmatprep.subr.mxu0 0.0
    %1006 = vmatpush1.xpose.msra.mxu0 0.0
    %1007 = vmatprep.subr.mxu0 0.0
    %1008 = vmatpush1.xpose.msra.mxu0 0.0
    %1009 = vmatprep.subr.mxu0 0.0
    %1010 = vmatpush1.xpose.msra.mxu0 0.0
    %1011 = vmatprep.subr.mxu0 0.0
    %1012 = vmatpush1.xpose.msra.mxu0 %v979
    %1013 = vmatprep.subr.mxu0 0.0
    %1014 = vmatpush2.xpose.msra.mxu0 0.0
    %1015 = vmatprep.subr.mxu0 0.0
    %1016 = vmatpush2.xpose.msra.mxu0 0.0
    %1017 = vmatprep.subr.mxu0 0.0
    %1018 = vmatpush2.xpose.msra.mxu0 0.0
    %1019 = vmatprep.subr.mxu0 0.0
    %1020 = vmatpush2.xpose.msra.mxu0 0.0
    %1021 = vmatprep.subr.mxu0 0.0
    %1022 = vmatpush2.xpose.msra.mxu0 0.0
    %1023 = vmatprep.subr.mxu0 0.0
    %1024 = vmatpush2.xpose.msra.mxu0 0.0
    %1025 = vmatprep.subr.mxu0 0.0
    %1026 = vmatpush2.xpose.msra.mxu0 0.0
    %1027 = vmatprep.subr.mxu0 0.0
    %1028 = vmatpush2.xpose.msra.mxu0 0.0
    %1029 = vmatprep.subr.mxu0 0.0
    %1030 = vmatpush2.xpose.msra.mxu0 0.0
    %1031 = vmatprep.subr.mxu0 0.0
    %1032 = vmatpush2.xpose.msra.mxu0 0.0
    %1033 = vmatprep.subr.mxu0 0.0
    %1034 = vmatpush2.xpose.msra.mxu0 0.0
    %1035 = vmatprep.subr.mxu0 0.0
    %1036 = vmatpush2.xpose.msra.mxu0 0.0
    %1037 = vmatprep.subr.mxu0 0.0
    %1038 = vmatpush2.xpose.msra.mxu0 0.0
    %1039 = vmatprep.subr.mxu0 0.0
    %1040 = vmatpush2.xpose.msra.mxu0 0.0
    %1041 = vmatprep.subr.mxu0 0.0
    %1042 = vmatpush2.xpose.msra.mxu0 0.0
    %1043 = vmatprep.subr.mxu0 0.0
    %1044 = vmatpush2.xpose.msra.mxu0 0.0
    %1045 = vmatprep.mubr.f32.mxu0 0.0
    %1046 = vmatmul.mubr.f32.gmra.mxu0 %v977
    %v1047 = vpop.f32.mrf.mxu0
    %v1048 = vadd.f32 0.0, %v1047
    %v1049 = vpop.f32.mrf.mxu0
    %1050 = vdwg.mxu0
    %v1051 = vsel %vm237, %v970, -inf
    %1052 = vmax.xlane.f32.xlu0 %v1051
    %v1053 = vpop.xlane.xlu0 %1052
    %v1054 = vsel %vm237, %v1048, -inf
    %1055 = vmax.xlane.f32.xlu0 %v1054
    %v1056 = vpop.xlane.xlu0 %1055
    %v1057 = vsub.f32 %v970, %v1053
    %v1058 = vsub.f32 %v1048, %v1056
    %v1059 = vmul.f32 %v1057, 1.442695
    %v1060 = vpow.pop %v1059
    %v1061 = vmul.f32 %v1058, 1.442695
    %v1062 = vpow.pop %v1061
    %v1063 = vsel %vm237, %v1060, 0.0
    %1064 = vadd.xlane.f32.xlu0 %v1063
    %v1065 = vpop.xlane.xlu0 %1064
    %v1066 = vsel %vm237, %v1062, 0.0
    %1067 = vadd.xlane.f32.xlu0 %v1066
    %v1068 = vpop.xlane.xlu0 %1067
    %v1069 = vrcp.pop %v1065
    %v1070 = vrcp.pop %v1068
    %v1071 = vmul.f32 %v1060, %v1069
    %v1072 = vmul.f32 %v1062, %v1070
    %1073 = vrot.lane.b32.xlu0 %v224, 48
    %v1074 = vpop.permute.xlu0 %1073
    %v1077 = vsel %vm237, %v1071, 0
    %1079 = vmatprep.subr.mxu0 0.0
    %1080 = vmatpush1.msra.mxu0 0.0
    %1081 = vmatprep.subr.mxu0 0.0
    %1082 = vmatpush1.msra.mxu0 0.0
    %1083 = vmatprep.subr.mxu0 0.0
    %1084 = vmatpush1.msra.mxu0 0.0
    %1085 = vmatprep.subr.mxu0 0.0
    %1086 = vmatpush1.msra.mxu0 0.0
    %1087 = vmatprep.subr.mxu0 0.0
    %1088 = vmatpush1.msra.mxu0 0.0
    %1089 = vmatprep.subr.mxu0 0.0
    %1090 = vmatpush1.msra.mxu0 0.0
    %1091 = vmatprep.subr.mxu0 0.0
    %1092 = vmatpush1.msra.mxu0 0.0
    %1093 = vmatprep.subr.mxu0 0.0
    %1094 = vmatpush1.msra.mxu0 0.0
    %1095 = vmatprep.subr.mxu0 0.0
    %1096 = vmatpush1.msra.mxu0 0.0
    %1097 = vmatprep.subr.mxu0 0.0
    %1098 = vmatpush1.msra.mxu0 0.0
    %1099 = vmatprep.subr.mxu0 0.0
    %1100 = vmatpush1.msra.mxu0 0.0
    %1101 = vmatprep.subr.mxu0 0.0
    %1102 = vmatpush1.msra.mxu0 0.0
    %1103 = vmatprep.subr.mxu0 0.0
    %1104 = vmatpush1.msra.mxu0 0.0
    %1105 = vmatprep.subr.mxu0 0.0
    %1106 = vmatpush1.msra.mxu0 0.0
    %1107 = vmatprep.subr.mxu0 0.0
    %1108 = vmatpush1.msra.mxu0 0.0
    %1109 = vmatprep.subr.mxu0 0.0
    %1110 = vmatpush1.msra.mxu0 %v1074
    %1111 = vmatprep.subr.mxu0 0.0
    %1112 = vmatpush2.msra.mxu0 0.0
    %1113 = vmatprep.subr.mxu0 0.0
    %1114 = vmatpush2.msra.mxu0 0.0
    %1115 = vmatprep.subr.mxu0 0.0
    %1116 = vmatpush2.msra.mxu0 0.0
    %1117 = vmatprep.subr.mxu0 0.0
    %1118 = vmatpush2.msra.mxu0 0.0
    %1119 = vmatprep.subr.mxu0 0.0
    %1120 = vmatpush2.msra.mxu0 0.0
    %1121 = vmatprep.subr.mxu0 0.0
    %1122 = vmatpush2.msra.mxu0 0.0
    %1123 = vmatprep.subr.mxu0 0.0
    %1124 = vmatpush2.msra.mxu0 0.0
    %1125 = vmatprep.subr.mxu0 0.0
    %1126 = vmatpush2.msra.mxu0 0.0
    %1127 = vmatprep.subr.mxu0 0.0
    %1128 = vmatpush2.msra.mxu0 0.0
    %1129 = vmatprep.subr.mxu0 0.0
    %1130 = vmatpush2.msra.mxu0 0.0
    %1131 = vmatprep.subr.mxu0 0.0
    %1132 = vmatpush2.msra.mxu0 0.0
    %1133 = vmatprep.subr.mxu0 0.0
    %1134 = vmatpush2.msra.mxu0 0.0
    %1135 = vmatprep.subr.mxu0 0.0
    %1136 = vmatpush2.msra.mxu0 0.0
    %1137 = vmatprep.subr.mxu0 0.0
    %1138 = vmatpush2.msra.mxu0 0.0
    %1139 = vmatprep.subr.mxu0 0.0
    %1140 = vmatpush2.msra.mxu0 0.0
    %1141 = vmatprep.subr.mxu0 0.0
    %1142 = vmatpush2.msra.mxu0 0.0
    %1143 = vmatprep.mubr.f32.mxu0 0.0
    %1144 = vmatmul.mubr.f32.gmra.mxu0 %v1077
    %v1145 = vpop.f32.mrf.mxu0
    %v1146 = vadd.f32 0.0, %v1145
    %v1147 = vpop.f32.mrf.mxu0
    %1148 = vdwg.mxu0
    %1149 = vrot.lane.b32.xlu0 %v229, 48
    %v1150 = vpop.permute.xlu0 %1149
    %v1153 = vsel %vm237, %v1072, 0
    %1155 = vmatprep.subr.mxu0 0.0
    %1156 = vmatpush1.msra.mxu0 0.0
    %1157 = vmatprep.subr.mxu0 0.0
    %1158 = vmatpush1.msra.mxu0 0.0
    %1159 = vmatprep.subr.mxu0 0.0
    %1160 = vmatpush1.msra.mxu0 0.0
    %1161 = vmatprep.subr.mxu0 0.0
    %1162 = vmatpush1.msra.mxu0 0.0
    %1163 = vmatprep.subr.mxu0 0.0
    %1164 = vmatpush1.msra.mxu0 0.0
    %1165 = vmatprep.subr.mxu0 0.0
    %1166 = vmatpush1.msra.mxu0 0.0
    %1167 = vmatprep.subr.mxu0 0.0
    %1168 = vmatpush1.msra.mxu0 0.0
    %1169 = vmatprep.subr.mxu0 0.0
    %1170 = vmatpush1.msra.mxu0 0.0
    %1171 = vmatprep.subr.mxu0 0.0
    %1172 = vmatpush1.msra.mxu0 0.0
    %1173 = vmatprep.subr.mxu0 0.0
    %1174 = vmatpush1.msra.mxu0 0.0
    %1175 = vmatprep.subr.mxu0 0.0
    %1176 = vmatpush1.msra.mxu0 0.0
    %1177 = vmatprep.subr.mxu0 0.0
    %1178 = vmatpush1.msra.mxu0 0.0
    %1179 = vmatprep.subr.mxu0 0.0
    %1180 = vmatpush1.msra.mxu0 0.0
    %1181 = vmatprep.subr.mxu0 0.0
    %1182 = vmatpush1.msra.mxu0 0.0
    %1183 = vmatprep.subr.mxu0 0.0
    %1184 = vmatpush1.msra.mxu0 0.0
    %1185 = vmatprep.subr.mxu0 0.0
    %1186 = vmatpush1.msra.mxu0 %v1150
    %1187 = vmatprep.subr.mxu0 0.0
    %1188 = vmatpush2.msra.mxu0 0.0
    %1189 = vmatprep.subr.mxu0 0.0
    %1190 = vmatpush2.msra.mxu0 0.0
    %1191 = vmatprep.subr.mxu0 0.0
    %1192 = vmatpush2.msra.mxu0 0.0
    %1193 = vmatprep.subr.mxu0 0.0
    %1194 = vmatpush2.msra.mxu0 0.0
    %1195 = vmatprep.subr.mxu0 0.0
    %1196 = vmatpush2.msra.mxu0 0.0
    %1197 = vmatprep.subr.mxu0 0.0
    %1198 = vmatpush2.msra.mxu0 0.0
    %1199 = vmatprep.subr.mxu0 0.0
    %1200 = vmatpush2.msra.mxu0 0.0
    %1201 = vmatprep.subr.mxu0 0.0
    %1202 = vmatpush2.msra.mxu0 0.0
    %1203 = vmatprep.subr.mxu0 0.0
    %1204 = vmatpush2.msra.mxu0 0.0
    %1205 = vmatprep.subr.mxu0 0.0
    %1206 = vmatpush2.msra.mxu0 0.0
    %1207 = vmatprep.subr.mxu0 0.0
    %1208 = vmatpush2.msra.mxu0 0.0
    %1209 = vmatprep.subr.mxu0 0.0
    %1210 = vmatpush2.msra.mxu0 0.0
    %1211 = vmatprep.subr.mxu0 0.0
    %1212 = vmatpush2.msra.mxu0 0.0
    %1213 = vmatprep.subr.mxu0 0.0
    %1214 = vmatpush2.msra.mxu0 0.0
    %1215 = vmatprep.subr.mxu0 0.0
    %1216 = vmatpush2.msra.mxu0 0.0
    %1217 = vmatprep.subr.mxu0 0.0
    %1218 = vmatpush2.msra.mxu0 0.0
    %1219 = vmatprep.mubr.f32.mxu0 0.0
    %1220 = vmatmul.mubr.f32.gmra.mxu0 %v1153
    %v1221 = vpop.f32.mrf.mxu0
    %v1222 = vadd.f32 0.0, %v1221
    %v1223 = vpop.f32.mrf.mxu0
    %1224 = vdwg.mxu0
    %1225 = vrot.lane.b32.xlu0 %v232, 104
    %v1226 = vpop.permute.xlu0 %1225
    %1227 = vrot.lane.b32.xlu0 %v224, 72
    %v1228 = vpop.permute.xlu0 %1227
    %v1229 = vsel %vm237, %v1226, 0
    %v1231 = vsel %vm237, %v1228, 0
    %1233 = vmatprep.subr.mxu0 0.0
    %1234 = vmatpush1.xpose.msra.mxu0 0.0
    %1235 = vmatprep.subr.mxu0 0.0
    %1236 = vmatpush1.xpose.msra.mxu0 0.0
    %1237 = vmatprep.subr.mxu0 0.0
    %1238 = vmatpush1.xpose.msra.mxu0 0.0
    %1239 = vmatprep.subr.mxu0 0.0
    %1240 = vmatpush1.xpose.msra.mxu0 0.0
    %1241 = vmatprep.subr.mxu0 0.0
    %1242 = vmatpush1.xpose.msra.mxu0 0.0
    %1243 = vmatprep.subr.mxu0 0.0
    %1244 = vmatpush1.xpose.msra.mxu0 0.0
    %1245 = vmatprep.subr.mxu0 0.0
    %1246 = vmatpush1.xpose.msra.mxu0 0.0
    %1247 = vmatprep.subr.mxu0 0.0
    %1248 = vmatpush1.xpose.msra.mxu0 0.0
    %1249 = vmatprep.subr.mxu0 0.0
    %1250 = vmatpush1.xpose.msra.mxu0 0.0
    %1251 = vmatprep.subr.mxu0 0.0
    %1252 = vmatpush1.xpose.msra.mxu0 0.0
    %1253 = vmatprep.subr.mxu0 0.0
    %1254 = vmatpush1.xpose.msra.mxu0 0.0
    %1255 = vmatprep.subr.mxu0 0.0
    %1256 = vmatpush1.xpose.msra.mxu0 0.0
    %1257 = vmatprep.subr.mxu0 0.0
    %1258 = vmatpush1.xpose.msra.mxu0 0.0
    %1259 = vmatprep.subr.mxu0 0.0
    %1260 = vmatpush1.xpose.msra.mxu0 0.0
    %1261 = vmatprep.subr.mxu0 0.0
    %1262 = vmatpush1.xpose.msra.mxu0 0.0
    %1263 = vmatprep.subr.mxu0 0.0
    %1264 = vmatpush1.xpose.msra.mxu0 %v1231
    %1265 = vmatprep.subr.mxu0 0.0
    %1266 = vmatpush2.xpose.msra.mxu0 0.0
    %1267 = vmatprep.subr.mxu0 0.0
    %1268 = vmatpush2.xpose.msra.mxu0 0.0
    %1269 = vmatprep.subr.mxu0 0.0
    %1270 = vmatpush2.xpose.msra.mxu0 0.0
    %1271 = vmatprep.subr.mxu0 0.0
    %1272 = vmatpush2.xpose.msra.mxu0 0.0
    %1273 = vmatprep.subr.mxu0 0.0
    %1274 = vmatpush2.xpose.msra.mxu0 0.0
    %1275 = vmatprep.subr.mxu0 0.0
    %1276 = vmatpush2.xpose.msra.mxu0 0.0
    %1277 = vmatprep.subr.mxu0 0.0
    %1278 = vmatpush2.xpose.msra.mxu0 0.0
    %1279 = vmatprep.subr.mxu0 0.0
    %1280 = vmatpush2.xpose.msra.mxu0 0.0
    %1281 = vmatprep.subr.mxu0 0.0
    %1282 = vmatpush2.xpose.msra.mxu0 0.0
    %1283 = vmatprep.subr.mxu0 0.0
    %1284 = vmatpush2.xpose.msra.mxu0 0.0
    %1285 = vmatprep.subr.mxu0 0.0
    %1286 = vmatpush2.xpose.msra.mxu0 0.0
    %1287 = vmatprep.subr.mxu0 0.0
    %1288 = vmatpush2.xpose.msra.mxu0 0.0
    %1289 = vmatprep.subr.mxu0 0.0
    %1290 = vmatpush2.xpose.msra.mxu0 0.0
    %1291 = vmatprep.subr.mxu0 0.0
    %1292 = vmatpush2.xpose.msra.mxu0 0.0
    %1293 = vmatprep.subr.mxu0 0.0
    %1294 = vmatpush2.xpose.msra.mxu0 0.0
    %1295 = vmatprep.subr.mxu0 0.0
    %1296 = vmatpush2.xpose.msra.mxu0 0.0
    %1297 = vmatprep.mubr.f32.mxu0 0.0
    %1298 = vmatmul.mubr.f32.gmra.mxu0 %v1229
    %v1299 = vpop.f32.mrf.mxu0
    %v1300 = vadd.f32 0.0, %v1299
    %v1301 = vpop.f32.mrf.mxu0
    %1302 = vdwg.mxu0
    %1303 = vrot.lane.b32.xlu0 %v233, 104
    %v1304 = vpop.permute.xlu0 %1303
    %1305 = vrot.lane.b32.xlu0 %v229, 72
    %v1306 = vpop.permute.xlu0 %1305
    %v1307 = vsel %vm237, %v1304, 0
    %v1309 = vsel %vm237, %v1306, 0
    %1311 = vmatprep.subr.mxu0 0.0
    %1312 = vmatpush1.xpose.msra.mxu0 0.0
    %1313 = vmatprep.subr.mxu0 0.0
    %1314 = vmatpush1.xpose.msra.mxu0 0.0
    %1315 = vmatprep.subr.mxu0 0.0
    %1316 = vmatpush1.xpose.msra.mxu0 0.0
    %1317 = vmatprep.subr.mxu0 0.0
    %1318 = vmatpush1.xpose.msra.mxu0 0.0
    %1319 = vmatprep.subr.mxu0 0.0
    %1320 = vmatpush1.xpose.msra.mxu0 0.0
    %1321 = vmatprep.subr.mxu0 0.0
    %1322 = vmatpush1.xpose.msra.mxu0 0.0
    %1323 = vmatprep.subr.mxu0 0.0
    %1324 = vmatpush1.xpose.msra.mxu0 0.0
    %1325 = vmatprep.subr.mxu0 0.0
    %1326 = vmatpush1.xpose.msra.mxu0 0.0
    %1327 = vmatprep.subr.mxu0 0.0
    %1328 = vmatpush1.xpose.msra.mxu0 0.0
    %1329 = vmatprep.subr.mxu0 0.0
    %1330 = vmatpush1.xpose.msra.mxu0 0.0
    %1331 = vmatprep.subr.mxu0 0.0
    %1332 = vmatpush1.xpose.msra.mxu0 0.0
    %1333 = vmatprep.subr.mxu0 0.0
    %1334 = vmatpush1.xpose.msra.mxu0 0.0
    %1335 = vmatprep.subr.mxu0 0.0
    %1336 = vmatpush1.xpose.msra.mxu0 0.0
    %1337 = vmatprep.subr.mxu0 0.0
    %1338 = vmatpush1.xpose.msra.mxu0 0.0
    %1339 = vmatprep.subr.mxu0 0.0
    %1340 = vmatpush1.xpose.msra.mxu0 0.0
    %1341 = vmatprep.subr.mxu0 0.0
    %1342 = vmatpush1.xpose.msra.mxu0 %v1309
    %1343 = vmatprep.subr.mxu0 0.0
    %1344 = vmatpush2.xpose.msra.mxu0 0.0
    %1345 = vmatprep.subr.mxu0 0.0
    %1346 = vmatpush2.xpose.msra.mxu0 0.0
    %1347 = vmatprep.subr.mxu0 0.0
    %1348 = vmatpush2.xpose.msra.mxu0 0.0
    %1349 = vmatprep.subr.mxu0 0.0
    %1350 = vmatpush2.xpose.msra.mxu0 0.0
    %1351 = vmatprep.subr.mxu0 0.0
    %1352 = vmatpush2.xpose.msra.mxu0 0.0
    %1353 = vmatprep.subr.mxu0 0.0
    %1354 = vmatpush2.xpose.msra.mxu0 0.0
    %1355 = vmatprep.subr.mxu0 0.0
    %1356 = vmatpush2.xpose.msra.mxu0 0.0
    %1357 = vmatprep.subr.mxu0 0.0
    %1358 = vmatpush2.xpose.msra.mxu0 0.0
    %1359 = vmatprep.subr.mxu0 0.0
    %1360 = vmatpush2.xpose.msra.mxu0 0.0
    %1361 = vmatprep.subr.mxu0 0.0
    %1362 = vmatpush2.xpose.msra.mxu0 0.0
    %1363 = vmatprep.subr.mxu0 0.0
    %1364 = vmatpush2.xpose.msra.mxu0 0.0
    %1365 = vmatprep.subr.mxu0 0.0
    %1366 = vmatpush2.xpose.msra.mxu0 0.0
    %1367 = vmatprep.subr.mxu0 0.0
    %1368 = vmatpush2.xpose.msra.mxu0 0.0
    %1369 = vmatprep.subr.mxu0 0.0
    %1370 = vmatpush2.xpose.msra.mxu0 0.0
    %1371 = vmatprep.subr.mxu0 0.0
    %1372 = vmatpush2.xpose.msra.mxu0 0.0
    %1373 = vmatprep.subr.mxu0 0.0
    %1374 = vmatpush2.xpose.msra.mxu0 0.0
    %1375 = vmatprep.mubr.f32.mxu0 0.0
    %1376 = vmatmul.mubr.f32.gmra.mxu0 %v1307
    %v1377 = vpop.f32.mrf.mxu0
    %v1378 = vadd.f32 0.0, %v1377
    %v1379 = vpop.f32.mrf.mxu0
    %1380 = vdwg.mxu0
    %v1381 = vsel %vm237, %v1300, -inf
    %1382 = vmax.xlane.f32.xlu0 %v1381
    %v1383 = vpop.xlane.xlu0 %1382
    %v1384 = vsel %vm237, %v1378, -inf
    %1385 = vmax.xlane.f32.xlu0 %v1384
    %v1386 = vpop.xlane.xlu0 %1385
    %v1387 = vsub.f32 %v1300, %v1383
    %v1388 = vsub.f32 %v1378, %v1386
    %v1389 = vmul.f32 %v1387, 1.442695
    %v1390 = vpow.pop %v1389
    %v1391 = vmul.f32 %v1388, 1.442695
    %v1392 = vpow.pop %v1391
    %v1393 = vsel %vm237, %v1390, 0.0
    %1394 = vadd.xlane.f32.xlu0 %v1393
    %v1395 = vpop.xlane.xlu0 %1394
    %v1396 = vsel %vm237, %v1392, 0.0
    %1397 = vadd.xlane.f32.xlu0 %v1396
    %v1398 = vpop.xlane.xlu0 %1397
    %v1399 = vrcp.pop %v1395
    %v1400 = vrcp.pop %v1398
    %v1401 = vmul.f32 %v1390, %v1399
    %v1402 = vmul.f32 %v1392, %v1400
    %1403 = vrot.lane.b32.xlu0 %v224, 40
    %v1404 = vpop.permute.xlu0 %1403
    %v1407 = vsel %vm237, %v1401, 0
    %1409 = vmatprep.subr.mxu0 0.0
    %1410 = vmatpush1.msra.mxu0 0.0
    %1411 = vmatprep.subr.mxu0 0.0
    %1412 = vmatpush1.msra.mxu0 0.0
    %1413 = vmatprep.subr.mxu0 0.0
    %1414 = vmatpush1.msra.mxu0 0.0
    %1415 = vmatprep.subr.mxu0 0.0
    %1416 = vmatpush1.msra.mxu0 0.0
    %1417 = vmatprep.subr.mxu0 0.0
    %1418 = vmatpush1.msra.mxu0 0.0
    %1419 = vmatprep.subr.mxu0 0.0
    %1420 = vmatpush1.msra.mxu0 0.0
    %1421 = vmatprep.subr.mxu0 0.0
    %1422 = vmatpush1.msra.mxu0 0.0
    %1423 = vmatprep.subr.mxu0 0.0
    %1424 = vmatpush1.msra.mxu0 0.0
    %1425 = vmatprep.subr.mxu0 0.0
    %1426 = vmatpush1.msra.mxu0 0.0
    %1427 = vmatprep.subr.mxu0 0.0
    %1428 = vmatpush1.msra.mxu0 0.0
    %1429 = vmatprep.subr.mxu0 0.0
    %1430 = vmatpush1.msra.mxu0 0.0
    %1431 = vmatprep.subr.mxu0 0.0
    %1432 = vmatpush1.msra.mxu0 0.0
    %1433 = vmatprep.subr.mxu0 0.0
    %1434 = vmatpush1.msra.mxu0 0.0
    %1435 = vmatprep.subr.mxu0 0.0
    %1436 = vmatpush1.msra.mxu0 0.0
    %1437 = vmatprep.subr.mxu0 0.0
    %1438 = vmatpush1.msra.mxu0 0.0
    %1439 = vmatprep.subr.mxu0 0.0
    %1440 = vmatpush1.msra.mxu0 %v1404
    %1441 = vmatprep.subr.mxu0 0.0
    %1442 = vmatpush2.msra.mxu0 0.0
    %1443 = vmatprep.subr.mxu0 0.0
    %1444 = vmatpush2.msra.mxu0 0.0
    %1445 = vmatprep.subr.mxu0 0.0
    %1446 = vmatpush2.msra.mxu0 0.0
    %1447 = vmatprep.subr.mxu0 0.0
    %1448 = vmatpush2.msra.mxu0 0.0
    %1449 = vmatprep.subr.mxu0 0.0
    %1450 = vmatpush2.msra.mxu0 0.0
    %1451 = vmatprep.subr.mxu0 0.0
    %1452 = vmatpush2.msra.mxu0 0.0
    %1453 = vmatprep.subr.mxu0 0.0
    %1454 = vmatpush2.msra.mxu0 0.0
    %1455 = vmatprep.subr.mxu0 0.0
    %1456 = vmatpush2.msra.mxu0 0.0
    %1457 = vmatprep.subr.mxu0 0.0
    %1458 = vmatpush2.msra.mxu0 0.0
    %1459 = vmatprep.subr.mxu0 0.0
    %1460 = vmatpush2.msra.mxu0 0.0
    %1461 = vmatprep.subr.mxu0 0.0
    %1462 = vmatpush2.msra.mxu0 0.0
    %1463 = vmatprep.subr.mxu0 0.0
    %1464 = vmatpush2.msra.mxu0 0.0
    %1465 = vmatprep.subr.mxu0 0.0
    %1466 = vmatpush2.msra.mxu0 0.0
    %1467 = vmatprep.subr.mxu0 0.0
    %1468 = vmatpush2.msra.mxu0 0.0
    %1469 = vmatprep.subr.mxu0 0.0
    %1470 = vmatpush2.msra.mxu0 0.0
    %1471 = vmatprep.subr.mxu0 0.0
    %1472 = vmatpush2.msra.mxu0 0.0
    %1473 = vmatprep.mubr.f32.mxu0 0.0
    %1474 = vmatmul.mubr.f32.gmra.mxu0 %v1407
    %v1475 = vpop.f32.mrf.mxu0
    %v1476 = vadd.f32 0.0, %v1475
    %v1477 = vpop.f32.mrf.mxu0
    %1478 = vdwg.mxu0
    %1479 = vrot.lane.b32.xlu0 %v229, 40
    %v1480 = vpop.permute.xlu0 %1479
    %v1483 = vsel %vm237, %v1402, 0
    %1485 = vmatprep.subr.mxu0 0.0
    %1486 = vmatpush1.msra.mxu0 0.0
    %1487 = vmatprep.subr.mxu0 0.0
    %1488 = vmatpush1.msra.mxu0 0.0
    %1489 = vmatprep.subr.mxu0 0.0
    %1490 = vmatpush1.msra.mxu0 0.0
    %1491 = vmatprep.subr.mxu0 0.0
    %1492 = vmatpush1.msra.mxu0 0.0
    %1493 = vmatprep.subr.mxu0 0.0
    %1494 = vmatpush1.msra.mxu0 0.0
    %1495 = vmatprep.subr.mxu0 0.0
    %1496 = vmatpush1.msra.mxu0 0.0
    %1497 = vmatprep.subr.mxu0 0.0
    %1498 = vmatpush1.msra.mxu0 0.0
    %1499 = vmatprep.subr.mxu0 0.0
    %1500 = vmatpush1.msra.mxu0 0.0
    %1501 = vmatprep.subr.mxu0 0.0
    %1502 = vmatpush1.msra.mxu0 0.0
    %1503 = vmatprep.subr.mxu0 0.0
    %1504 = vmatpush1.msra.mxu0 0.0
    %1505 = vmatprep.subr.mxu0 0.0
    %1506 = vmatpush1.msra.mxu0 0.0
    %1507 = vmatprep.subr.mxu0 0.0
    %1508 = vmatpush1.msra.mxu0 0.0
    %1509 = vmatprep.subr.mxu0 0.0
    %1510 = vmatpush1.msra.mxu0 0.0
    %1511 = vmatprep.subr.mxu0 0.0
    %1512 = vmatpush1.msra.mxu0 0.0
    %1513 = vmatprep.subr.mxu0 0.0
    %1514 = vmatpush1.msra.mxu0 0.0
    %1515 = vmatprep.subr.mxu0 0.0
    %1516 = vmatpush1.msra.mxu0 %v1480
    %1517 = vmatprep.subr.mxu0 0.0
    %1518 = vmatpush2.msra.mxu0 0.0
    %1519 = vmatprep.subr.mxu0 0.0
    %1520 = vmatpush2.msra.mxu0 0.0
    %1521 = vmatprep.subr.mxu0 0.0
    %1522 = vmatpush2.msra.mxu0 0.0
    %1523 = vmatprep.subr.mxu0 0.0
    %1524 = vmatpush2.msra.mxu0 0.0
    %1525 = vmatprep.subr.mxu0 0.0
    %1526 = vmatpush2.msra.mxu0 0.0
    %1527 = vmatprep.subr.mxu0 0.0
    %1528 = vmatpush2.msra.mxu0 0.0
    %1529 = vmatprep.subr.mxu0 0.0
    %1530 = vmatpush2.msra.mxu0 0.0
    %1531 = vmatprep.subr.mxu0 0.0
    %1532 = vmatpush2.msra.mxu0 0.0
    %1533 = vmatprep.subr.mxu0 0.0
    %1534 = vmatpush2.msra.mxu0 0.0
    %1535 = vmatprep.subr.mxu0 0.0
    %1536 = vmatpush2.msra.mxu0 0.0
    %1537 = vmatprep.subr.mxu0 0.0
    %1538 = vmatpush2.msra.mxu0 0.0
    %1539 = vmatprep.subr.mxu0 0.0
    %1540 = vmatpush2.msra.mxu0 0.0
    %1541 = vmatprep.subr.mxu0 0.0
    %1542 = vmatpush2.msra.mxu0 0.0
    %1543 = vmatprep.subr.mxu0 0.0
    %1544 = vmatpush2.msra.mxu0 0.0
    %1545 = vmatprep.subr.mxu0 0.0
    %1546 = vmatpush2.msra.mxu0 0.0
    %1547 = vmatprep.subr.mxu0 0.0
    %1548 = vmatpush2.msra.mxu0 0.0
    %1549 = vmatprep.mubr.f32.mxu0 0.0
    %1550 = vmatmul.mubr.f32.gmra.mxu0 %v1483
    %v1551 = vpop.f32.mrf.mxu0
    %v1552 = vadd.f32 0.0, %v1551
    %v1553 = vpop.f32.mrf.mxu0
    %1554 = vdwg.mxu0
    %1557 = vrot.lane.b32.xlu0 %v816, 8
    %v1558 = vpop.permute.xlu0 %1557
    %1559 = vrot.lane.b32.xlu0 %v892, 8
    %v1560 = vpop.permute.xlu0 %1559
    %1565 = vrot.lane.b32.xlu0 %v1146, 16
    %v1566 = vpop.permute.xlu0 %1565
    %1567 = vrot.lane.b32.xlu0 %v1222, 16
    %v1568 = vpop.permute.xlu0 %1567
    %1573 = vrot.lane.b32.xlu0 %v1476, 24
    %v1574 = vpop.permute.xlu0 %1573
    %1575 = vrot.lane.b32.xlu0 %v1552, 24
    %v1576 = vpop.permute.xlu0 %1575
    %v1579 = vsel %vm237, %v486, %v1558
    %v1580 = vsel %vm237, %v562, %v1560
    %vm1581 = vcmask 130048
    %v1582 = vsel %vm1581, %v1579, %v1566
    %v1583 = vsel %vm1581, %v1580, %v1568
    %vm1584 = vcmask 195584
    %v1585 = vsel %vm1584, %v1582, %v1574
    %v1586 = vsel %vm1584, %v1583, %v1576
    %v1587 = vld [vmem:[%s5] sm:$0xff]
    %v1588 = vld [vmem:[%s5 + $0x8] sm:$0xff]
    %v1589 = vld [vmem:[%s5 + $0x10] sm:$0xff]
    %v1590 = vld [vmem:[%s5 + $0x18] sm:$0xff]
    %v1591 = vld [vmem:[%s6] sm:$0x1]
    %v1593 = vlaneseq
    %v1594 = vshrl.u32 %v1593, 7
    %v1595 = vsub.s32 0, %v1594
    %v1596 = vrot.slane %v1591, %v1595
    %v1599 = vsel %vm96, %v1585, 0
    %v1602 = vsel %vm96, %v1586, 0
    %1604 = vmatprep.subr.mxu0 0.0
    %1605 = vmatpush1.msra.mxu0 0.0
    %1606 = vmatprep.subr.mxu0 0.0
    %1607 = vmatpush1.msra.mxu0 0.0
    %1608 = vmatprep.subr.mxu0 0.0
    %1609 = vmatpush1.msra.mxu0 0.0
    %1610 = vmatprep.subr.mxu0 0.0
    %1611 = vmatpush1.msra.mxu0 0.0
    %1612 = vmatprep.subr.mxu0 0.0
    %1613 = vmatpush1.msra.mxu0 0.0
    %1614 = vmatprep.subr.mxu0 0.0
    %1615 = vmatpush1.msra.mxu0 0.0
    %1616 = vmatprep.subr.mxu0 0.0
    %1617 = vmatpush1.msra.mxu0 0.0
    %1618 = vmatprep.subr.mxu0 0.0
    %1619 = vmatpush1.msra.mxu0 0.0
    %1620 = vmatprep.subr.mxu0 0.0
    %1621 = vmatpush1.msra.mxu0 0.0
    %1622 = vmatprep.subr.mxu0 0.0
    %1623 = vmatpush1.msra.mxu0 0.0
    %1624 = vmatprep.subr.mxu0 0.0
    %1625 = vmatpush1.msra.mxu0 0.0
    %1626 = vmatprep.subr.mxu0 0.0
    %1627 = vmatpush1.msra.mxu0 0.0
    %1628 = vmatprep.subr.mxu0 0.0
    %1629 = vmatpush1.msra.mxu0 %v1590
    %1630 = vmatprep.subr.mxu0 0.0
    %1631 = vmatpush1.msra.mxu0 %v1589
    %1632 = vmatprep.subr.mxu0 0.0
    %1633 = vmatpush1.msra.mxu0 %v1588
    %1634 = vmatprep.subr.mxu0 0.0
    %1635 = vmatpush1.msra.mxu0 %v1587
    %1636 = vmatprep.subr.mxu0 0.0
    %1637 = vmatpush2.msra.mxu0 0.0
    %1638 = vmatprep.subr.mxu0 0.0
    %1639 = vmatpush2.msra.mxu0 0.0
    %1640 = vmatprep.subr.mxu0 0.0
    %1641 = vmatpush2.msra.mxu0 0.0
    %1642 = vmatprep.subr.mxu0 0.0
    %1643 = vmatpush2.msra.mxu0 0.0
    %1644 = vmatprep.subr.mxu0 0.0
    %1645 = vmatpush2.msra.mxu0 0.0
    %1646 = vmatprep.subr.mxu0 0.0
    %1647 = vmatpush2.msra.mxu0 0.0
    %1648 = vmatprep.subr.mxu0 0.0
    %1649 = vmatpush2.msra.mxu0 0.0
    %1650 = vmatprep.subr.mxu0 0.0
    %1651 = vmatpush2.msra.mxu0 0.0
    %1652 = vmatprep.subr.mxu0 0.0
    %1653 = vmatpush2.msra.mxu0 0.0
    %1654 = vmatprep.subr.mxu0 0.0
    %1655 = vmatpush2.msra.mxu0 0.0
    %1656 = vmatprep.subr.mxu0 0.0
    %1657 = vmatpush2.msra.mxu0 0.0
    %1658 = vmatprep.subr.mxu0 0.0
    %1659 = vmatpush2.msra.mxu0 0.0
    %1660 = vmatprep.subr.mxu0 0.0
    %1661 = vmatpush2.msra.mxu0 0.0
    %1662 = vmatprep.subr.mxu0 0.0
    %1663 = vmatpush2.msra.mxu0 0.0
    %1664 = vmatprep.subr.mxu0 0.0
    %1665 = vmatpush2.msra.mxu0 0.0
    %1666 = vmatprep.subr.mxu0 0.0
    %1667 = vmatpush2.msra.mxu0 0.0
    %1668 = vmatprep.mubr.f32.mxu0 0.0
    %1669 = vmatmul.mubr.f32.gmra.mxu0 %v1599
    %v1670 = vpop.f32.mrf.mxu0
    %v1671 = vadd.f32 %v1596, %v1670
    %v1672 = vpop.f32.mrf.mxu0
    %1673 = vmatprep.mubr.f32.mxu0 0.0
    %1674 = vmatmul.mubr.f32.gmra.mxu0 %v1602
    %v1675 = vpop.f32.mrf.mxu0
    %v1676 = vadd.f32 %v1596, %v1675
    %v1677 = vpop.f32.mrf.mxu0
    %1678 = vdwg.mxu0
    %vm1679 = vcmp.gt.f32.partialorder %v1671, 0.0
    %vm1680 = vcmp.gt.f32.partialorder %v1676, 0.0
    %v1681 = vmul.f32 %v1671, 0.2
    %v1682 = vmul.f32 %v1676, 0.2
    %v1683 = vsel %vm1679, %v1671, %v1681
    %v1684 = vsel %vm1680, %v1676, %v1682
    %v1685 = vld [vmem:[%s7] sm:$0xff]
    %v1686 = vld [vmem:[%s7 + $0x8] sm:$0xff]
    %v1687 = vld [vmem:[%s7 + $0x10] sm:$0xff]
    %v1688 = vld [vmem:[%s7 + $0x18] sm:$0xff]
    %v1690 = vsel %vm96, %v1683, 0
    %v1693 = vsel %vm96, %v1684, 0
    %1695 = vmatprep.subr.mxu0 0.0
    %1696 = vmatpush1.msra.mxu0 0.0
    %1697 = vmatprep.subr.mxu0 0.0
    %1698 = vmatpush1.msra.mxu0 0.0
    %1699 = vmatprep.subr.mxu0 0.0
    %1700 = vmatpush1.msra.mxu0 0.0
    %1701 = vmatprep.subr.mxu0 0.0
    %1702 = vmatpush1.msra.mxu0 0.0
    %1703 = vmatprep.subr.mxu0 0.0
    %1704 = vmatpush1.msra.mxu0 0.0
    %1705 = vmatprep.subr.mxu0 0.0
    %1706 = vmatpush1.msra.mxu0 0.0
    %1707 = vmatprep.subr.mxu0 0.0
    %1708 = vmatpush1.msra.mxu0 0.0
    %1709 = vmatprep.subr.mxu0 0.0
    %1710 = vmatpush1.msra.mxu0 0.0
    %1711 = vmatprep.subr.mxu0 0.0
    %1712 = vmatpush1.msra.mxu0 0.0
    %1713 = vmatprep.subr.mxu0 0.0
    %1714 = vmatpush1.msra.mxu0 0.0
    %1715 = vmatprep.subr.mxu0 0.0
    %1716 = vmatpush1.msra.mxu0 0.0
    %1717 = vmatprep.subr.mxu0 0.0
    %1718 = vmatpush1.msra.mxu0 0.0
    %1719 = vmatprep.subr.mxu0 0.0
    %1720 = vmatpush1.msra.mxu0 %v1688
    %1721 = vmatprep.subr.mxu0 0.0
    %1722 = vmatpush1.msra.mxu0 %v1687
    %1723 = vmatprep.subr.mxu0 0.0
    %1724 = vmatpush1.msra.mxu0 %v1686
    %1725 = vmatprep.subr.mxu0 0.0
    %1726 = vmatpush1.msra.mxu0 %v1685
    %1727 = vmatprep.subr.mxu0 0.0
    %1728 = vmatpush2.msra.mxu0 0.0
    %1729 = vmatprep.subr.mxu0 0.0
    %1730 = vmatpush2.msra.mxu0 0.0
    %1731 = vmatprep.subr.mxu0 0.0
    %1732 = vmatpush2.msra.mxu0 0.0
    %1733 = vmatprep.subr.mxu0 0.0
    %1734 = vmatpush2.msra.mxu0 0.0
    %1735 = vmatprep.subr.mxu0 0.0
    %1736 = vmatpush2.msra.mxu0 0.0
    %1737 = vmatprep.subr.mxu0 0.0
    %1738 = vmatpush2.msra.mxu0 0.0
    %1739 = vmatprep.subr.mxu0 0.0
    %1740 = vmatpush2.msra.mxu0 0.0
    %1741 = vmatprep.subr.mxu0 0.0
    %1742 = vmatpush2.msra.mxu0 0.0
    %1743 = vmatprep.subr.mxu0 0.0
    %1744 = vmatpush2.msra.mxu0 0.0
    %1745 = vmatprep.subr.mxu0 0.0
    %1746 = vmatpush2.msra.mxu0 0.0
    %1747 = vmatprep.subr.mxu0 0.0
    %1748 = vmatpush2.msra.mxu0 0.0
    %1749 = vmatprep.subr.mxu0 0.0
    %1750 = vmatpush2.msra.mxu0 0.0
    %1751 = vmatprep.subr.mxu0 0.0
    %1752 = vmatpush2.msra.mxu0 0.0
    %1753 = vmatprep.subr.mxu0 0.0
    %1754 = vmatpush2.msra.mxu0 0.0
    %1755 = vmatprep.subr.mxu0 0.0
    %1756 = vmatpush2.msra.mxu0 0.0
    %1757 = vmatprep.subr.mxu0 0.0
    %1758 = vmatpush2.msra.mxu0 0.0
    %1759 = vmatprep.mubr.f32.mxu0 0.0
    %1760 = vmatmul.mubr.f32.gmra.mxu0 %v1690
    %v1761 = vpop.f32.mrf.mxu0
    %v1762 = vadd.f32 0.0, %v1761
    %v1763 = vpop.f32.mrf.mxu0
    %1764 = vmatprep.mubr.f32.mxu0 0.0
    %1765 = vmatmul.mubr.f32.gmra.mxu0 %v1693
    %v1766 = vpop.f32.mrf.mxu0
    %v1767 = vadd.f32 0.0, %v1766
    %v1768 = vpop.f32.mrf.mxu0
    %1769 = vdwg.mxu0
    %v1770 = vadd.f32 %v92, %v1762
    %v1771 = vadd.f32 %v93, %v1767
    %v1772 = vld [vmem:[%s8] sm:$0x1]
    %v1774 = vlaneseq
    %v1775 = vshrl.u32 %v1774, 7
    %v1776 = vsub.s32 0, %v1775
    %v1777 = vrot.slane %v1772, %v1776
    %v1779 = vadd.f32 %v1770, %v1777
    %v1780 = vadd.f32 %v1771, %v1777
    %v1781 = vld [vmem:[%s9] sm:$0x1]
    %v1782 = vld [vmem:[%s10] sm:$0x1]
    %v1783 = vsel %vm96, %v1779, 0.0
    %1784 = vadd.xlane.f32.xlu0 %v1783
    %v1785 = vpop.xlane.xlu0 %1784
    %v1786 = vsel %vm96, %v1780, 0.0
    %1787 = vadd.xlane.f32.xlu0 %v1786
    %v1788 = vpop.xlane.xlu0 %1787
    %v1789 = vmul.f32 %v1785, %v103
    %v1790 = vmul.f32 %v1788, %v103
    %v1791 = vsub.f32 %v1779, %v1789
    %v1792 = vsub.f32 %v1780, %v1790
    %v1793 = vmul.f32 %v1791, %v1791
    %v1794 = vmul.f32 %v1792, %v1792
    %v1795 = vsel %vm96, %v1793, 0.0
    %1796 = vadd.xlane.f32.xlu0 %v1795
    %v1797 = vpop.xlane.xlu0 %1796
    %v1798 = vsel %vm96, %v1794, 0.0
    %1799 = vadd.xlane.f32.xlu0 %v1798
    %v1800 = vpop.xlane.xlu0 %1799
    %v1801 = vmul.f32 %v1797, %v103
    %v1802 = vmul.f32 %v1800, %v103
    %v1803 = vadd.f32 %v1801, 1e-05
    %v1804 = vadd.f32 %v1802, 1e-05
    %v1805 = vrsqrt.pop %v1803
    %v1806 = vrsqrt.pop %v1804
    %v1807 = vmul.f32 %v1791, %v1805
    %v1808 = vmul.f32 %v1792, %v1806
    %v1810 = vlaneseq
    %v1811 = vshrl.u32 %v1810, 7
    %v1812 = vsub.s32 0, %v1811
    %v1813 = vrot.slane %v1781, %v1812
    %v1815 = vmul.f32 %v1807, %v1813
    %v1816 = vmul.f32 %v1808, %v1813
    %v1818 = vlaneseq
    %v1819 = vshrl.u32 %v1818, 7
    %v1820 = vsub.s32 0, %v1819
    %v1821 = vrot.slane %v1782, %v1820
    %v1823 = vadd.f32 %v1815, %v1821
    %v1824 = vadd.f32 %v1816, %v1821
    %v1825 = vld [vmem:[#allocation7] sm:$0xff]
    %v1826 = vld [vmem:[#allocation7 + $0x8] sm:$0xff]
    %v1827 = vld [vmem:[#allocation7 + $0x10] sm:$0xff]
    %v1828 = vld [vmem:[#allocation7 + $0x18] sm:$0xff]
    %v1829 = vld [vmem:[%s12] sm:$0x1]
    %v1831 = vlaneseq
    %v1832 = vshrl.u32 %v1831, 7
    %v1833 = vsub.s32 0, %v1832
    %v1834 = vrot.slane %v1829, %v1833
    %v1837 = vsel %vm96, %v1823, 0
    %v1840 = vsel %vm96, %v1824, 0
    %1842 = vmatprep.subr.mxu0 0.0
    %1843 = vmatpush1.msra.mxu0 0.0
    %1844 = vmatprep.subr.mxu0 0.0
    %1845 = vmatpush1.msra.mxu0 0.0
    %1846 = vmatprep.subr.mxu0 0.0
    %1847 = vmatpush1.msra.mxu0 0.0
    %1848 = vmatprep.subr.mxu0 0.0
    %1849 = vmatpush1.msra.mxu0 0.0
    %1850 = vmatprep.subr.mxu0 0.0
    %1851 = vmatpush1.msra.mxu0 0.0
    %1852 = vmatprep.subr.mxu0 0.0
    %1853 = vmatpush1.msra.mxu0 0.0
    %1854 = vmatprep.subr.mxu0 0.0
    %1855 = vmatpush1.msra.mxu0 0.0
    %1856 = vmatprep.subr.mxu0 0.0
    %1857 = vmatpush1.msra.mxu0 0.0
    %1858 = vmatprep.subr.mxu0 0.0
    %1859 = vmatpush1.msra.mxu0 0.0
    %1860 = vmatprep.subr.mxu0 0.0
    %1861 = vmatpush1.msra.mxu0 0.0
    %1862 = vmatprep.subr.mxu0 0.0
    %1863 = vmatpush1.msra.mxu0 0.0
    %1864 = vmatprep.subr.mxu0 0.0
    %1865 = vmatpush1.msra.mxu0 0.0
    %1866 = vmatprep.subr.mxu0 0.0
    %1867 = vmatpush1.msra.mxu0 %v1828
    %1868 = vmatprep.subr.mxu0 0.0
    %1869 = vmatpush1.msra.mxu0 %v1827
    %1870 = vmatprep.subr.mxu0 0.0
    %1871 = vmatpush1.msra.mxu0 %v1826
    %1872 = vmatprep.subr.mxu0 0.0
    %1873 = vmatpush1.msra.mxu0 %v1825
    %1874 = vmatprep.subr.mxu0 0.0
    %1875 = vmatpush2.msra.mxu0 0.0
    %1876 = vmatprep.subr.mxu0 0.0
    %1877 = vmatpush2.msra.mxu0 0.0
    %1878 = vmatprep.subr.mxu0 0.0
    %1879 = vmatpush2.msra.mxu0 0.0
    %1880 = vmatprep.subr.mxu0 0.0
    %1881 = vmatpush2.msra.mxu0 0.0
    %1882 = vmatprep.subr.mxu0 0.0
    %1883 = vmatpush2.msra.mxu0 0.0
    %1884 = vmatprep.subr.mxu0 0.0
    %1885 = vmatpush2.msra.mxu0 0.0
    %1886 = vmatprep.subr.mxu0 0.0
    %1887 = vmatpush2.msra.mxu0 0.0
    %1888 = vmatprep.subr.mxu0 0.0
    %1889 = vmatpush2.msra.mxu0 0.0
    %1890 = vmatprep.subr.mxu0 0.0
    %1891 = vmatpush2.msra.mxu0 0.0
    %1892 = vmatprep.subr.mxu0 0.0
    %1893 = vmatpush2.msra.mxu0 0.0
    %1894 = vmatprep.subr.mxu0 0.0
    %1895 = vmatpush2.msra.mxu0 0.0
    %1896 = vmatprep.subr.mxu0 0.0
    %1897 = vmatpush2.msra.mxu0 0.0
    %1898 = vmatprep.subr.mxu0 0.0
    %1899 = vmatpush2.msra.mxu0 0.0
    %1900 = vmatprep.subr.mxu0 0.0
    %1901 = vmatpush2.msra.mxu0 0.0
    %1902 = vmatprep.subr.mxu0 0.0
    %1903 = vmatpush2.msra.mxu0 0.0
    %1904 = vmatprep.subr.mxu0 0.0
    %1905 = vmatpush2.msra.mxu0 0.0
    %1906 = vmatprep.mubr.f32.mxu0 0.0
    %1907 = vmatmul.mubr.f32.gmra.mxu0 %v1837
    %v1908 = vpop.f32.mrf.mxu0
    %v1909 = vadd.f32 %v1834, %v1908
    %v1910 = vpop.f32.mrf.mxu0
    %1911 = vmatprep.mubr.f32.mxu0 0.0
    %1912 = vmatmul.mubr.f32.gmra.mxu0 %v1840
    %v1913 = vpop.f32.mrf.mxu0
    %v1914 = vadd.f32 %v1834, %v1913
    %v1915 = vpop.f32.mrf.mxu0
    %1916 = vdwg.mxu0
    %vm1917 = vcmp.gt.f32.partialorder %v1909, 0.0
    %vm1918 = vcmp.gt.f32.partialorder %v1914, 0.0
    %v1919 = vmul.f32 %v1909, 0.2
    %v1920 = vmul.f32 %v1914, 0.2
    %v1921 = vsel %vm1917, %v1909, %v1919
    %v1922 = vsel %vm1918, %v1914, %v1920
    %v1923 = vld [vmem:[%s13] sm:$0xff]
    %v1924 = vld [vmem:[%s13 + $0x8] sm:$0xff]
    %v1925 = vld [vmem:[%s13 + $0x10] sm:$0xff]
    %v1926 = vld [vmem:[%s13 + $0x18] sm:$0xff]
    %v1927 = vld [vmem:[%s13 + $0x20] sm:$0xff]
    %v1928 = vld [vmem:[%s13 + $0x28] sm:$0xff]
    %v1929 = vld [vmem:[%s13 + $0x30] sm:$0xff]
    %v1930 = vld [vmem:[%s13 + $0x38] sm:$0xff]
    %vm1931 = vcmask 523264
    %v1933 = vsel %vm1931, %v1921, 0
    %v1936 = vsel %vm1931, %v1922, 0
    %1938 = vmatprep.subr.mxu0 0.0
    %1939 = vmatpush1.msra.mxu0 0.0
    %1940 = vmatprep.subr.mxu0 0.0
    %1941 = vmatpush1.msra.mxu0 0.0
    %1942 = vmatprep.subr.mxu0 0.0
    %1943 = vmatpush1.msra.mxu0 0.0
    %1944 = vmatprep.subr.mxu0 0.0
    %1945 = vmatpush1.msra.mxu0 0.0
    %1946 = vmatprep.subr.mxu0 0.0
    %1947 = vmatpush1.msra.mxu0 0.0
    %1948 = vmatprep.subr.mxu0 0.0
    %1949 = vmatpush1.msra.mxu0 0.0
    %1950 = vmatprep.subr.mxu0 0.0
    %1951 = vmatpush1.msra.mxu0 0.0
    %1952 = vmatprep.subr.mxu0 0.0
    %1953 = vmatpush1.msra.mxu0 0.0
    %1954 = vmatprep.subr.mxu0 0.0
    %1955 = vmatpush1.msra.mxu0 %v1930
    %1956 = vmatprep.subr.mxu0 0.0
    %1957 = vmatpush1.msra.mxu0 %v1929
    %1958 = vmatprep.subr.mxu0 0.0
    %1959 = vmatpush1.msra.mxu0 %v1928
    %1960 = vmatprep.subr.mxu0 0.0
    %1961 = vmatpush1.msra.mxu0 %v1927
    %1962 = vmatprep.subr.mxu0 0.0
    %1963 = vmatpush1.msra.mxu0 %v1926
    %1964 = vmatprep.subr.mxu0 0.0
    %1965 = vmatpush1.msra.mxu0 %v1925
    %1966 = vmatprep.subr.mxu0 0.0
    %1967 = vmatpush1.msra.mxu0 %v1924
    %1968 = vmatprep.subr.mxu0 0.0
    %1969 = vmatpush1.msra.mxu0 %v1923
    %1970 = vmatprep.subr.mxu0 0.0
    %1971 = vmatpush2.msra.mxu0 0.0
    %1972 = vmatprep.subr.mxu0 0.0
    %1973 = vmatpush2.msra.mxu0 0.0
    %1974 = vmatprep.subr.mxu0 0.0
    %1975 = vmatpush2.msra.mxu0 0.0
    %1976 = vmatprep.subr.mxu0 0.0
    %1977 = vmatpush2.msra.mxu0 0.0
    %1978 = vmatprep.subr.mxu0 0.0
    %1979 = vmatpush2.msra.mxu0 0.0
    %1980 = vmatprep.subr.mxu0 0.0
    %1981 = vmatpush2.msra.mxu0 0.0
    %1982 = vmatprep.subr.mxu0 0.0
    %1983 = vmatpush2.msra.mxu0 0.0
    %1984 = vmatprep.subr.mxu0 0.0
    %1985 = vmatpush2.msra.mxu0 0.0
    %1986 = vmatprep.subr.mxu0 0.0
    %1987 = vmatpush2.msra.mxu0 0.0
    %1988 = vmatprep.subr.mxu0 0.0
    %1989 = vmatpush2.msra.mxu0 0.0
    %1990 = vmatprep.subr.mxu0 0.0
    %1991 = vmatpush2.msra.mxu0 0.0
    %1992 = vmatprep.subr.mxu0 0.0
    %1993 = vmatpush2.msra.mxu0 0.0
    %1994 = vmatprep.subr.mxu0 0.0
    %1995 = vmatpush2.msra.mxu0 0.0
    %1996 = vmatprep.subr.mxu0 0.0
    %1997 = vmatpush2.msra.mxu0 0.0
    %1998 = vmatprep.subr.mxu0 0.0
    %1999 = vmatpush2.msra.mxu0 0.0
    %2000 = vmatprep.subr.mxu0 0.0
    %2001 = vmatpush2.msra.mxu0 0.0
    %2002 = vmatprep.mubr.f32.mxu0 0.0
    %2003 = vmatmul.mubr.f32.gmra.mxu0 %v1933
    %v2004 = vpop.f32.mrf.mxu0
    %v2005 = vadd.f32 0.0, %v2004
    %v2006 = vpop.f32.mrf.mxu0
    %2007 = vmatprep.mubr.f32.mxu0 0.0
    %2008 = vmatmul.mubr.f32.gmra.mxu0 %v1936
    %v2009 = vpop.f32.mrf.mxu0
    %v2010 = vadd.f32 0.0, %v2009
    %v2011 = vpop.f32.mrf.mxu0
    %2012 = vdwg.mxu0
    %v2013 = vadd.f32 %v1779, %v2005
    %v2014 = vadd.f32 %v1780, %v2010
    %v2015 = vld [vmem:[%s14] sm:$0x1]
    %v2017 = vlaneseq
    %v2018 = vshrl.u32 %v2017, 7
    %v2019 = vsub.s32 0, %v2018
    %v2020 = vrot.slane %v2015, %v2019
    %v2022 = vadd.f32 %v2013, %v2020
    %v2023 = vadd.f32 %v2014, %v2020
    %s2024 = scalar_lea.vmem [#allocation5], 1
    %v2025 = vld [vmem:[%s2024] sm:$0x1]
    %s2026 = scalar_lea.vmem %s2, 1
    %v2027 = vld [vmem:[%s2026] sm:$0x1]
    %v2028 = vsel %vm96, %v2022, 0.0
    %2029 = vadd.xlane.f32.xlu0 %v2028
    %v2030 = vpop.xlane.xlu0 %2029
    %v2031 = vsel %vm96, %v2023, 0.0
    %2032 = vadd.xlane.f32.xlu0 %v2031
    %v2033 = vpop.xlane.xlu0 %2032
    %v2034 = vmul.f32 %v2030, %v103
    %v2035 = vmul.f32 %v2033, %v103
    %v2036 = vsub.f32 %v2022, %v2034
    %v2037 = vsub.f32 %v2023, %v2035
    %v2038 = vmul.f32 %v2036, %v2036
    %v2039 = vmul.f32 %v2037, %v2037
    %v2040 = vsel %vm96, %v2038, 0.0
    %2041 = vadd.xlane.f32.xlu0 %v2040
    %v2042 = vpop.xlane.xlu0 %2041
    %v2043 = vsel %vm96, %v2039, 0.0
    %2044 = vadd.xlane.f32.xlu0 %v2043
    %v2045 = vpop.xlane.xlu0 %2044
    %v2046 = vmul.f32 %v2042, %v103
    %v2047 = vmul.f32 %v2045, %v103
    %v2048 = vadd.f32 %v2046, 1e-05
    %v2049 = vadd.f32 %v2047, 1e-05
    %v2050 = vrsqrt.pop %v2048
    %v2051 = vrsqrt.pop %v2049
    %v2052 = vmul.f32 %v2036, %v2050
    %v2053 = vmul.f32 %v2037, %v2051
    %v2055 = vlaneseq
    %v2056 = vshrl.u32 %v2055, 7
    %v2057 = vsub.s32 0, %v2056
    %v2058 = vrot.slane %v2025, %v2057
    %v2060 = vmul.f32 %v2052, %v2058
    %v2061 = vmul.f32 %v2053, %v2058
    %v2063 = vlaneseq
    %v2064 = vshrl.u32 %v2063, 7
    %v2065 = vsub.s32 0, %v2064
    %v2066 = vrot.slane %v2027, %v2065
    %v2068 = vadd.f32 %v2060, %v2066
    %v2069 = vadd.f32 %v2061, %v2066
    %s2070 = scalar_lea.vmem %s3, 32
    %v2071 = vld [vmem:[%s2070] sm:$0xff]
    %v2072 = vld [vmem:[%s2070 + $0x8] sm:$0xff]
    %v2073 = vld [vmem:[%s2070 + $0x10] sm:$0xff]
    %v2074 = vld [vmem:[%s2070 + $0x18] sm:$0xff]
    %s2075 = scalar_lea.vmem %s4, 1
    %v2076 = vld [vmem:[%s2075] sm:$0x1]
    %v2078 = vlaneseq
    %v2079 = vshrl.u32 %v2078, 7
    %v2080 = vsub.s32 0, %v2079
    %v2081 = vrot.slane %v2076, %v2080
    %v2084 = vsel %vm96, %v2068, 0
    %v2087 = vsel %vm96, %v2069, 0
    %2089 = vmatprep.subr.mxu0 0.0
    %2090 = vmatpush1.msra.mxu0 0.0
    %2091 = vmatprep.subr.mxu0 0.0
    %2092 = vmatpush1.msra.mxu0 0.0
    %2093 = vmatprep.subr.mxu0 0.0
    %2094 = vmatpush1.msra.mxu0 0.0
    %2095 = vmatprep.subr.mxu0 0.0
    %2096 = vmatpush1.msra.mxu0 0.0
    %2097 = vmatprep.subr.mxu0 0.0
    %2098 = vmatpush1.msra.mxu0 0.0
    %2099 = vmatprep.subr.mxu0 0.0
    %2100 = vmatpush1.msra.mxu0 0.0
    %2101 = vmatprep.subr.mxu0 0.0
    %2102 = vmatpush1.msra.mxu0 0.0
    %2103 = vmatprep.subr.mxu0 0.0
    %2104 = vmatpush1.msra.mxu0 0.0
    %2105 = vmatprep.subr.mxu0 0.0
    %2106 = vmatpush1.msra.mxu0 0.0
    %2107 = vmatprep.subr.mxu0 0.0
    %2108 = vmatpush1.msra.mxu0 0.0
    %2109 = vmatprep.subr.mxu0 0.0
    %2110 = vmatpush1.msra.mxu0 0.0
    %2111 = vmatprep.subr.mxu0 0.0
    %2112 = vmatpush1.msra.mxu0 0.0
    %2113 = vmatprep.subr.mxu0 0.0
    %2114 = vmatpush1.msra.mxu0 %v2074
    %2115 = vmatprep.subr.mxu0 0.0
    %2116 = vmatpush1.msra.mxu0 %v2073
    %2117 = vmatprep.subr.mxu0 0.0
    %2118 = vmatpush1.msra.mxu0 %v2072
    %2119 = vmatprep.subr.mxu0 0.0
    %2120 = vmatpush1.msra.mxu0 %v2071
    %2121 = vmatprep.subr.mxu0 0.0
    %2122 = vmatpush2.msra.mxu0 0.0
    %2123 = vmatprep.subr.mxu0 0.0
    %2124 = vmatpush2.msra.mxu0 0.0
    %2125 = vmatprep.subr.mxu0 0.0
    %2126 = vmatpush2.msra.mxu0 0.0
    %2127 = vmatprep.subr.mxu0 0.0
    %2128 = vmatpush2.msra.mxu0 0.0
    %2129 = vmatprep.subr.mxu0 0.0
    %2130 = vmatpush2.msra.mxu0 0.0
    %2131 = vmatprep.subr.mxu0 0.0
    %2132 = vmatpush2.msra.mxu0 0.0
    %2133 = vmatprep.subr.mxu0 0.0
    %2134 = vmatpush2.msra.mxu0 0.0
    %2135 = vmatprep.subr.mxu0 0.0
    %2136 = vmatpush2.msra.mxu0 0.0
    %2137 = vmatprep.subr.mxu0 0.0
    %2138 = vmatpush2.msra.mxu0 0.0
    %2139 = vmatprep.subr.mxu0 0.0
    %2140 = vmatpush2.msra.mxu0 0.0
    %2141 = vmatprep.subr.mxu0 0.0
    %2142 = vmatpush2.msra.mxu0 0.0
    %2143 = vmatprep.subr.mxu0 0.0
    %2144 = vmatpush2.msra.mxu0 0.0
    %2145 = vmatprep.subr.mxu0 0.0
    %2146 = vmatpush2.msra.mxu0 0.0
    %2147 = vmatprep.subr.mxu0 0.0
    %2148 = vmatpush2.msra.mxu0 0.0
    %2149 = vmatprep.subr.mxu0 0.0
    %2150 = vmatpush2.msra.mxu0 0.0
    %2151 = vmatprep.subr.mxu0 0.0
    %2152 = vmatpush2.msra.mxu0 0.0
    %2153 = vmatprep.mubr.f32.mxu0 0.0
    %2154 = vmatmul.mubr.f32.gmra.mxu0 %v2084
    %v2155 = vpop.f32.mrf.mxu0
    %v2156 = vadd.f32 %v2081, %v2155
    %v2157 = vpop.f32.mrf.mxu0
    %2158 = vmatprep.mubr.f32.mxu0 0.0
    %2159 = vmatmul.mubr.f32.gmra.mxu0 %v2087
    %v2160 = vpop.f32.mrf.mxu0
    %v2161 = vadd.f32 %v2081, %v2160
    %v2162 = vpop.f32.mrf.mxu0
    %2163 = vdwg.mxu0
    %v2164 = vmul.f32 %v2156, 0.35355338
    %v2165 = vmul.f32 %v2161, 0.35355338
    %2167 = vrot.lane.b32.xlu0 %v2156, 96
    %v2168 = vpop.permute.xlu0 %2167
    %v2170 = vsel %vm237, %v2164, 0
    %v2172 = vsel %vm237, %v2168, 0
    %2174 = vmatprep.subr.mxu0 0.0
    %2175 = vmatpush1.xpose.msra.mxu0 0.0
    %2176 = vmatprep.subr.mxu0 0.0
    %2177 = vmatpush1.xpose.msra.mxu0 0.0
    %2178 = vmatprep.subr.mxu0 0.0
    %2179 = vmatpush1.xpose.msra.mxu0 0.0
    %2180 = vmatprep.subr.mxu0 0.0
    %2181 = vmatpush1.xpose.msra.mxu0 0.0
    %2182 = vmatprep.subr.mxu0 0.0
    %2183 = vmatpush1.xpose.msra.mxu0 0.0
    %2184 = vmatprep.subr.mxu0 0.0
    %2185 = vmatpush1.xpose.msra.mxu0 0.0
    %2186 = vmatprep.subr.mxu0 0.0
    %2187 = vmatpush1.xpose.msra.mxu0 0.0
    %2188 = vmatprep.subr.mxu0 0.0
    %2189 = vmatpush1.xpose.msra.mxu0 0.0
    %2190 = vmatprep.subr.mxu0 0.0
    %2191 = vmatpush1.xpose.msra.mxu0 0.0
    %2192 = vmatprep.subr.mxu0 0.0
    %2193 = vmatpush1.xpose.msra.mxu0 0.0
    %2194 = vmatprep.subr.mxu0 0.0
    %2195 = vmatpush1.xpose.msra.mxu0 0.0
    %2196 = vmatprep.subr.mxu0 0.0
    %2197 = vmatpush1.xpose.msra.mxu0 0.0
    %2198 = vmatprep.subr.mxu0 0.0
    %2199 = vmatpush1.xpose.msra.mxu0 0.0
    %2200 = vmatprep.subr.mxu0 0.0
    %2201 = vmatpush1.xpose.msra.mxu0 0.0
    %2202 = vmatprep.subr.mxu0 0.0
    %2203 = vmatpush1.xpose.msra.mxu0 0.0
    %2204 = vmatprep.subr.mxu0 0.0
    %2205 = vmatpush1.xpose.msra.mxu0 %v2172
    %2206 = vmatprep.subr.mxu0 0.0
    %2207 = vmatpush2.xpose.msra.mxu0 0.0
    %2208 = vmatprep.subr.mxu0 0.0
    %2209 = vmatpush2.xpose.msra.mxu0 0.0
    %2210 = vmatprep.subr.mxu0 0.0
    %2211 = vmatpush2.xpose.msra.mxu0 0.0
    %2212 = vmatprep.subr.mxu0 0.0
    %2213 = vmatpush2.xpose.msra.mxu0 0.0
    %2214 = vmatprep.subr.mxu0 0.0
    %2215 = vmatpush2.xpose.msra.mxu0 0.0
    %2216 = vmatprep.subr.mxu0 0.0
    %2217 = vmatpush2.xpose.msra.mxu0 0.0
    %2218 = vmatprep.subr.mxu0 0.0
    %2219 = vmatpush2.xpose.msra.mxu0 0.0
    %2220 = vmatprep.subr.mxu0 0.0
    %2221 = vmatpush2.xpose.msra.mxu0 0.0
    %2222 = vmatprep.subr.mxu0 0.0
    %2223 = vmatpush2.xpose.msra.mxu0 0.0
    %2224 = vmatprep.subr.mxu0 0.0
    %2225 = vmatpush2.xpose.msra.mxu0 0.0
    %2226 = vmatprep.subr.mxu0 0.0
    %2227 = vmatpush2.xpose.msra.mxu0 0.0
    %2228 = vmatprep.subr.mxu0 0.0
    %2229 = vmatpush2.xpose.msra.mxu0 0.0
    %2230 = vmatprep.subr.mxu0 0.0
    %2231 = vmatpush2.xpose.msra.mxu0 0.0
    %2232 = vmatprep.subr.mxu0 0.0
    %2233 = vmatpush2.xpose.msra.mxu0 0.0
    %2234 = vmatprep.subr.mxu0 0.0
    %2235 = vmatpush2.xpose.msra.mxu0 0.0
    %2236 = vmatprep.subr.mxu0 0.0
    %2237 = vmatpush2.xpose.msra.mxu0 0.0
    %2238 = vmatprep.mubr.f32.mxu0 0.0
    %2239 = vmatmul.mubr.f32.gmra.mxu0 %v2170
    %v2240 = vpop.f32.mrf.mxu0
    %v2241 = vadd.f32 0.0, %v2240
    %v2242 = vpop.f32.mrf.mxu0
    %2243 = vdwg.mxu0
    %2245 = vrot.lane.b32.xlu0 %v2161, 96
    %v2246 = vpop.permute.xlu0 %2245
    %v2248 = vsel %vm237, %v2165, 0
    %v2250 = vsel %vm237, %v2246, 0
    %2252 = vmatprep.subr.mxu0 0.0
    %2253 = vmatpush1.xpose.msra.mxu0 0.0
    %2254 = vmatprep.subr.mxu0 0.0
    %2255 = vmatpush1.xpose.msra.mxu0 0.0
    %2256 = vmatprep.subr.mxu0 0.0
    %2257 = vmatpush1.xpose.msra.mxu0 0.0
    %2258 = vmatprep.subr.mxu0 0.0
    %2259 = vmatpush1.xpose.msra.mxu0 0.0
    %2260 = vmatprep.subr.mxu0 0.0
    %2261 = vmatpush1.xpose.msra.mxu0 0.0
    %2262 = vmatprep.subr.mxu0 0.0
    %2263 = vmatpush1.xpose.msra.mxu0 0.0
    %2264 = vmatprep.subr.mxu0 0.0
    %2265 = vmatpush1.xpose.msra.mxu0 0.0
    %2266 = vmatprep.subr.mxu0 0.0
    %2267 = vmatpush1.xpose.msra.mxu0 0.0
    %2268 = vmatprep.subr.mxu0 0.0
    %2269 = vmatpush1.xpose.msra.mxu0 0.0
    %2270 = vmatprep.subr.mxu0 0.0
    %2271 = vmatpush1.xpose.msra.mxu0 0.0
    %2272 = vmatprep.subr.mxu0 0.0
    %2273 = vmatpush1.xpose.msra.mxu0 0.0
    %2274 = vmatprep.subr.mxu0 0.0
    %2275 = vmatpush1.xpose.msra.mxu0 0.0
    %2276 = vmatprep.subr.mxu0 0.0
    %2277 = vmatpush1.xpose.msra.mxu0 0.0
    %2278 = vmatprep.subr.mxu0 0.0
    %2279 = vmatpush1.xpose.msra.mxu0 0.0
    %2280 = vmatprep.subr.mxu0 0.0
    %2281 = vmatpush1.xpose.msra.mxu0 0.0
    %2282 = vmatprep.subr.mxu0 0.0
    %2283 = vmatpush1.xpose.msra.mxu0 %v2250
    %2284 = vmatprep.subr.mxu0 0.0
    %2285 = vmatpush2.xpose.msra.mxu0 0.0
    %2286 = vmatprep.subr.mxu0 0.0
    %2287 = vmatpush2.xpose.msra.mxu0 0.0
    %2288 = vmatprep.subr.mxu0 0.0
    %2289 = vmatpush2.xpose.msra.mxu0 0.0
    %2290 = vmatprep.subr.mxu0 0.0
    %2291 = vmatpush2.xpose.msra.mxu0 0.0
    %2292 = vmatprep.subr.mxu0 0.0
    %2293 = vmatpush2.xpose.msra.mxu0 0.0
    %2294 = vmatprep.subr.mxu0 0.0
    %2295 = vmatpush2.xpose.msra.mxu0 0.0
    %2296 = vmatprep.subr.mxu0 0.0
    %2297 = vmatpush2.xpose.msra.mxu0 0.0
    %2298 = vmatprep.subr.mxu0 0.0
    %2299 = vmatpush2.xpose.msra.mxu0 0.0
    %2300 = vmatprep.subr.mxu0 0.0
    %2301 = vmatpush2.xpose.msra.mxu0 0.0
    %2302 = vmatprep.subr.mxu0 0.0
    %2303 = vmatpush2.xpose.msra.mxu0 0.0
    %2304 = vmatprep.subr.mxu0 0.0
    %2305 = vmatpush2.xpose.msra.mxu0 0.0
    %2306 = vmatprep.subr.mxu0 0.0
    %2307 = vmatpush2.xpose.msra.mxu0 0.0
    %2308 = vmatprep.subr.mxu0 0.0
    %2309 = vmatpush2.xpose.msra.mxu0 0.0
    %2310 = vmatprep.subr.mxu0 0.0
    %2311 = vmatpush2.xpose.msra.mxu0 0.0
    %2312 = vmatprep.subr.mxu0 0.0
    %2313 = vmatpush2.xpose.msra.mxu0 0.0
    %2314 = vmatprep.subr.mxu0 0.0
    %2315 = vmatpush2.xpose.msra.mxu0 0.0
    %2316 = vmatprep.mubr.f32.mxu0 0.0
    %2317 = vmatmul.mubr.f32.gmra.mxu0 %v2248
    %v2318 = vpop.f32.mrf.mxu0
    %v2319 = vadd.f32 0.0, %v2318
    %v2320 = vpop.f32.mrf.mxu0
    %2321 = vdwg.mxu0
    %v2322 = vsel %vm237, %v2241, -inf
    %2323 = vmax.xlane.f32.xlu0 %v2322
    %v2324 = vpop.xlane.xlu0 %2323
    %v2325 = vsel %vm237, %v2319, -inf
    %2326 = vmax.xlane.f32.xlu0 %v2325
    %v2327 = vpop.xlane.xlu0 %2326
    %v2328 = vsub.f32 %v2241, %v2324
    %v2329 = vsub.f32 %v2319, %v2327
    %v2330 = vmul.f32 %v2328, 1.442695
    %v2331 = vpow.pop %v2330
    %v2332 = vmul.f32 %v2329, 1.442695
    %v2333 = vpow.pop %v2332
    %v2334 = vsel %vm237, %v2331, 0.0
    %2335 = vadd.xlane.f32.xlu0 %v2334
    %v2336 = vpop.xlane.xlu0 %2335
    %v2337 = vsel %vm237, %v2333, 0.0
    %2338 = vadd.xlane.f32.xlu0 %v2337
    %v2339 = vpop.xlane.xlu0 %2338
    %v2340 = vrcp.pop %v2336
    %v2341 = vrcp.pop %v2339
    %v2342 = vmul.f32 %v2331, %v2340
    %v2343 = vmul.f32 %v2333, %v2341
    %2344 = vrot.lane.b32.xlu0 %v2156, 64
    %v2345 = vpop.permute.xlu0 %2344
    %v2348 = vsel %vm237, %v2342, 0
    %2350 = vmatprep.subr.mxu0 0.0
    %2351 = vmatpush1.msra.mxu0 0.0
    %2352 = vmatprep.subr.mxu0 0.0
    %2353 = vmatpush1.msra.mxu0 0.0
    %2354 = vmatprep.subr.mxu0 0.0
    %2355 = vmatpush1.msra.mxu0 0.0
    %2356 = vmatprep.subr.mxu0 0.0
    %2357 = vmatpush1.msra.mxu0 0.0
    %2358 = vmatprep.subr.mxu0 0.0
    %2359 = vmatpush1.msra.mxu0 0.0
    %2360 = vmatprep.subr.mxu0 0.0
    %2361 = vmatpush1.msra.mxu0 0.0
    %2362 = vmatprep.subr.mxu0 0.0
    %2363 = vmatpush1.msra.mxu0 0.0
    %2364 = vmatprep.subr.mxu0 0.0
    %2365 = vmatpush1.msra.mxu0 0.0
    %2366 = vmatprep.subr.mxu0 0.0
    %2367 = vmatpush1.msra.mxu0 0.0
    %2368 = vmatprep.subr.mxu0 0.0
    %2369 = vmatpush1.msra.mxu0 0.0
    %2370 = vmatprep.subr.mxu0 0.0
    %2371 = vmatpush1.msra.mxu0 0.0
    %2372 = vmatprep.subr.mxu0 0.0
    %2373 = vmatpush1.msra.mxu0 0.0
    %2374 = vmatprep.subr.mxu0 0.0
    %2375 = vmatpush1.msra.mxu0 0.0
    %2376 = vmatprep.subr.mxu0 0.0
    %2377 = vmatpush1.msra.mxu0 0.0
    %2378 = vmatprep.subr.mxu0 0.0
    %2379 = vmatpush1.msra.mxu0 0.0
    %2380 = vmatprep.subr.mxu0 0.0
    %2381 = vmatpush1.msra.mxu0 %v2345
    %2382 = vmatprep.subr.mxu0 0.0
    %2383 = vmatpush2.msra.mxu0 0.0
    %2384 = vmatprep.subr.mxu0 0.0
    %2385 = vmatpush2.msra.mxu0 0.0
    %2386 = vmatprep.subr.mxu0 0.0
    %2387 = vmatpush2.msra.mxu0 0.0
    %2388 = vmatprep.subr.mxu0 0.0
    %2389 = vmatpush2.msra.mxu0 0.0
    %2390 = vmatprep.subr.mxu0 0.0
    %2391 = vmatpush2.msra.mxu0 0.0
    %2392 = vmatprep.subr.mxu0 0.0
    %2393 = vmatpush2.msra.mxu0 0.0
    %2394 = vmatprep.subr.mxu0 0.0
    %2395 = vmatpush2.msra.mxu0 0.0
    %2396 = vmatprep.subr.mxu0 0.0
    %2397 = vmatpush2.msra.mxu0 0.0
    %2398 = vmatprep.subr.mxu0 0.0
    %2399 = vmatpush2.msra.mxu0 0.0
    %2400 = vmatprep.subr.mxu0 0.0
    %2401 = vmatpush2.msra.mxu0 0.0
    %2402 = vmatprep.subr.mxu0 0.0
    %2403 = vmatpush2.msra.mxu0 0.0
    %2404 = vmatprep.subr.mxu0 0.0
    %2405 = vmatpush2.msra.mxu0 0.0
    %2406 = vmatprep.subr.mxu0 0.0
    %2407 = vmatpush2.msra.mxu0 0.0
    %2408 = vmatprep.subr.mxu0 0.0
    %2409 = vmatpush2.msra.mxu0 0.0
    %2410 = vmatprep.subr.mxu0 0.0
    %2411 = vmatpush2.msra.mxu0 0.0
    %2412 = vmatprep.subr.mxu0 0.0
    %2413 = vmatpush2.msra.mxu0 0.0
    %2414 = vmatprep.mubr.f32.mxu0 0.0
    %2415 = vmatmul.mubr.f32.gmra.mxu0 %v2348
    %v2416 = vpop.f32.mrf.mxu0
    %v2417 = vadd.f32 0.0, %v2416
    %v2418 = vpop.f32.mrf.mxu0
    %2419 = vdwg.mxu0
    %2420 = vrot.lane.b32.xlu0 %v2161, 64
    %v2421 = vpop.permute.xlu0 %2420
    %v2424 = vsel %vm237, %v2343, 0
    %2426 = vmatprep.subr.mxu0 0.0
    %2427 = vmatpush1.msra.mxu0 0.0
    %2428 = vmatprep.subr.mxu0 0.0
    %2429 = vmatpush1.msra.mxu0 0.0
    %2430 = vmatprep.subr.mxu0 0.0
    %2431 = vmatpush1.msra.mxu0 0.0
    %2432 = vmatprep.subr.mxu0 0.0
    %2433 = vmatpush1.msra.mxu0 0.0
    %2434 = vmatprep.subr.mxu0 0.0
    %2435 = vmatpush1.msra.mxu0 0.0
    %2436 = vmatprep.subr.mxu0 0.0
    %2437 = vmatpush1.msra.mxu0 0.0
    %2438 = vmatprep.subr.mxu0 0.0
    %2439 = vmatpush1.msra.mxu0 0.0
    %2440 = vmatprep.subr.mxu0 0.0
    %2441 = vmatpush1.msra.mxu0 0.0
    %2442 = vmatprep.subr.mxu0 0.0
    %2443 = vmatpush1.msra.mxu0 0.0
    %2444 = vmatprep.subr.mxu0 0.0
    %2445 = vmatpush1.msra.mxu0 0.0
    %2446 = vmatprep.subr.mxu0 0.0
    %2447 = vmatpush1.msra.mxu0 0.0
    %2448 = vmatprep.subr.mxu0 0.0
    %2449 = vmatpush1.msra.mxu0 0.0
    %2450 = vmatprep.subr.mxu0 0.0
    %2451 = vmatpush1.msra.mxu0 0.0
    %2452 = vmatprep.subr.mxu0 0.0
    %2453 = vmatpush1.msra.mxu0 0.0
    %2454 = vmatprep.subr.mxu0 0.0
    %2455 = vmatpush1.msra.mxu0 0.0
    %2456 = vmatprep.subr.mxu0 0.0
    %2457 = vmatpush1.msra.mxu0 %v2421
    %2458 = vmatprep.subr.mxu0 0.0
    %2459 = vmatpush2.msra.mxu0 0.0
    %2460 = vmatprep.subr.mxu0 0.0
    %2461 = vmatpush2.msra.mxu0 0.0
    %2462 = vmatprep.subr.mxu0 0.0
    %2463 = vmatpush2.msra.mxu0 0.0
    %2464 = vmatprep.subr.mxu0 0.0
    %2465 = vmatpush2.msra.mxu0 0.0
    %2466 = vmatprep.subr.mxu0 0.0
    %2467 = vmatpush2.msra.mxu0 0.0
    %2468 = vmatprep.subr.mxu0 0.0
    %2469 = vmatpush2.msra.mxu0 0.0
    %2470 = vmatprep.subr.mxu0 0.0
    %2471 = vmatpush2.msra.mxu0 0.0
    %2472 = vmatprep.subr.mxu0 0.0
    %2473 = vmatpush2.msra.mxu0 0.0
    %2474 = vmatprep.subr.mxu0 0.0
    %2475 = vmatpush2.msra.mxu0 0.0
    %2476 = vmatprep.subr.mxu0 0.0
    %2477 = vmatpush2.msra.mxu0 0.0
    %2478 = vmatprep.subr.mxu0 0.0
    %2479 = vmatpush2.msra.mxu0 0.0
    %2480 = vmatprep.subr.mxu0 0.0
    %2481 = vmatpush2.msra.mxu0 0.0
    %2482 = vmatprep.subr.mxu0 0.0
    %2483 = vmatpush2.msra.mxu0 0.0
    %2484 = vmatprep.subr.mxu0 0.0
    %2485 = vmatpush2.msra.mxu0 0.0
    %2486 = vmatprep.subr.mxu0 0.0
    %2487 = vmatpush2.msra.mxu0 0.0
    %2488 = vmatprep.subr.mxu0 0.0
    %2489 = vmatpush2.msra.mxu0 0.0
    %2490 = vmatprep.mubr.f32.mxu0 0.0
    %2491 = vmatmul.mubr.f32.gmra.mxu0 %v2424
    %v2492 = vpop.f32.mrf.mxu0
    %v2493 = vadd.f32 0.0, %v2492
    %v2494 = vpop.f32.mrf.mxu0
    %2495 = vdwg.mxu0
    %2496 = vrot.lane.b32.xlu0 %v2164, 120
    %v2497 = vpop.permute.xlu0 %2496
    %2498 = vrot.lane.b32.xlu0 %v2156, 88
    %v2499 = vpop.permute.xlu0 %2498
    %v2500 = vsel %vm237, %v2497, 0
    %v2502 = vsel %vm237, %v2499, 0
    %2504 = vmatprep.subr.mxu0 0.0
    %2505 = vmatpush1.xpose.msra.mxu0 0.0
    %2506 = vmatprep.subr.mxu0 0.0
    %2507 = vmatpush1.xpose.msra.mxu0 0.0
    %2508 = vmatprep.subr.mxu0 0.0
    %2509 = vmatpush1.xpose.msra.mxu0 0.0
    %2510 = vmatprep.subr.mxu0 0.0
    %2511 = vmatpush1.xpose.msra.mxu0 0.0
    %2512 = vmatprep.subr.mxu0 0.0
    %2513 = vmatpush1.xpose.msra.mxu0 0.0
    %2514 = vmatprep.subr.mxu0 0.0
    %2515 = vmatpush1.xpose.msra.mxu0 0.0
    %2516 = vmatprep.subr.mxu0 0.0
    %2517 = vmatpush1.xpose.msra.mxu0 0.0
    %2518 = vmatprep.subr.mxu0 0.0
    %2519 = vmatpush1.xpose.msra.mxu0 0.0
    %2520 = vmatprep.subr.mxu0 0.0
    %2521 = vmatpush1.xpose.msra.mxu0 0.0
    %2522 = vmatprep.subr.mxu0 0.0
    %2523 = vmatpush1.xpose.msra.mxu0 0.0
    %2524 = vmatprep.subr.mxu0 0.0
    %2525 = vmatpush1.xpose.msra.mxu0 0.0
    %2526 = vmatprep.subr.mxu0 0.0
    %2527 = vmatpush1.xpose.msra.mxu0 0.0
    %2528 = vmatprep.subr.mxu0 0.0
    %2529 = vmatpush1.xpose.msra.mxu0 0.0
    %2530 = vmatprep.subr.mxu0 0.0
    %2531 = vmatpush1.xpose.msra.mxu0 0.0
    %2532 = vmatprep.subr.mxu0 0.0
    %2533 = vmatpush1.xpose.msra.mxu0 0.0
    %2534 = vmatprep.subr.mxu0 0.0
    %2535 = vmatpush1.xpose.msra.mxu0 %v2502
    %2536 = vmatprep.subr.mxu0 0.0
    %2537 = vmatpush2.xpose.msra.mxu0 0.0
    %2538 = vmatprep.subr.mxu0 0.0
    %2539 = vmatpush2.xpose.msra.mxu0 0.0
    %2540 = vmatprep.subr.mxu0 0.0
    %2541 = vmatpush2.xpose.msra.mxu0 0.0
    %2542 = vmatprep.subr.mxu0 0.0
    %2543 = vmatpush2.xpose.msra.mxu0 0.0
    %2544 = vmatprep.subr.mxu0 0.0
    %2545 = vmatpush2.xpose.msra.mxu0 0.0
    %2546 = vmatprep.subr.mxu0 0.0
    %2547 = vmatpush2.xpose.msra.mxu0 0.0
    %2548 = vmatprep.subr.mxu0 0.0
    %2549 = vmatpush2.xpose.msra.mxu0 0.0
    %2550 = vmatprep.subr.mxu0 0.0
    %2551 = vmatpush2.xpose.msra.mxu0 0.0
    %2552 = vmatprep.subr.mxu0 0.0
    %2553 = vmatpush2.xpose.msra.mxu0 0.0
    %2554 = vmatprep.subr.mxu0 0.0
    %2555 = vmatpush2.xpose.msra.mxu0 0.0
    %2556 = vmatprep.subr.mxu0 0.0
    %2557 = vmatpush2.xpose.msra.mxu0 0.0
    %2558 = vmatprep.subr.mxu0 0.0
    %2559 = vmatpush2.xpose.msra.mxu0 0.0
    %2560 = vmatprep.subr.mxu0 0.0
    %2561 = vmatpush2.xpose.msra.mxu0 0.0
    %2562 = vmatprep.subr.mxu0 0.0
    %2563 = vmatpush2.xpose.msra.mxu0 0.0
    %2564 = vmatprep.subr.mxu0 0.0
    %2565 = vmatpush2.xpose.msra.mxu0 0.0
    %2566 = vmatprep.subr.mxu0 0.0
    %2567 = vmatpush2.xpose.msra.mxu0 0.0
    %2568 = vmatprep.mubr.f32.mxu0 0.0
    %2569 = vmatmul.mubr.f32.gmra.mxu0 %v2500
    %v2570 = vpop.f32.mrf.mxu0
    %v2571 = vadd.f32 0.0, %v2570
    %v2572 = vpop.f32.mrf.mxu0
    %2573 = vdwg.mxu0
    %2574 = vrot.lane.b32.xlu0 %v2165, 120
    %v2575 = vpop.permute.xlu0 %2574
    %2576 = vrot.lane.b32.xlu0 %v2161, 88
    %v2577 = vpop.permute.xlu0 %2576
    %v2578 = vsel %vm237, %v2575, 0
    %v2580 = vsel %vm237, %v2577, 0
    %2582 = vmatprep.subr.mxu0 0.0
    %2583 = vmatpush1.xpose.msra.mxu0 0.0
    %2584 = vmatprep.subr.mxu0 0.0
    %2585 = vmatpush1.xpose.msra.mxu0 0.0
    %2586 = vmatprep.subr.mxu0 0.0
    %2587 = vmatpush1.xpose.msra.mxu0 0.0
    %2588 = vmatprep.subr.mxu0 0.0
    %2589 = vmatpush1.xpose.msra.mxu0 0.0
    %2590 = vmatprep.subr.mxu0 0.0
    %2591 = vmatpush1.xpose.msra.mxu0 0.0
    %2592 = vmatprep.subr.mxu0 0.0
    %2593 = vmatpush1.xpose.msra.mxu0 0.0
    %2594 = vmatprep.subr.mxu0 0.0
    %2595 = vmatpush1.xpose.msra.mxu0 0.0
    %2596 = vmatprep.subr.mxu0 0.0
    %2597 = vmatpush1.xpose.msra.mxu0 0.0
    %2598 = vmatprep.subr.mxu0 0.0
    %2599 = vmatpush1.xpose.msra.mxu0 0.0
    %2600 = vmatprep.subr.mxu0 0.0
    %2601 = vmatpush1.xpose.msra.mxu0 0.0
    %2602 = vmatprep.subr.mxu0 0.0
    %2603 = vmatpush1.xpose.msra.mxu0 0.0
    %2604 = vmatprep.subr.mxu0 0.0
    %2605 = vmatpush1.xpose.msra.mxu0 0.0
    %2606 = vmatprep.subr.mxu0 0.0
    %2607 = vmatpush1.xpose.msra.mxu0 0.0
    %2608 = vmatprep.subr.mxu0 0.0
    %2609 = vmatpush1.xpose.msra.mxu0 0.0
    %2610 = vmatprep.subr.mxu0 0.0
    %2611 = vmatpush1.xpose.msra.mxu0 0.0
    %2612 = vmatprep.subr.mxu0 0.0
    %2613 = vmatpush1.xpose.msra.mxu0 %v2580
    %2614 = vmatprep.subr.mxu0 0.0
    %2615 = vmatpush2.xpose.msra.mxu0 0.0
    %2616 = vmatprep.subr.mxu0 0.0
    %2617 = vmatpush2.xpose.msra.mxu0 0.0
    %2618 = vmatprep.subr.mxu0 0.0
    %2619 = vmatpush2.xpose.msra.mxu0 0.0
    %2620 = vmatprep.subr.mxu0 0.0
    %2621 = vmatpush2.xpose.msra.mxu0 0.0
    %2622 = vmatprep.subr.mxu0 0.0
    %2623 = vmatpush2.xpose.msra.mxu0 0.0
    %2624 = vmatprep.subr.mxu0 0.0
    %2625 = vmatpush2.xpose.msra.mxu0 0.0
    %2626 = vmatprep.subr.mxu0 0.0
    %2627 = vmatpush2.xpose.msra.mxu0 0.0
    %2628 = vmatprep.subr.mxu0 0.0
    %2629 = vmatpush2.xpose.msra.mxu0 0.0
    %2630 = vmatprep.subr.mxu0 0.0
    %2631 = vmatpush2.xpose.msra.mxu0 0.0
    %2632 = vmatprep.subr.mxu0 0.0
    %2633 = vmatpush2.xpose.msra.mxu0 0.0
    %2634 = vmatprep.subr.mxu0 0.0
    %2635 = vmatpush2.xpose.msra.mxu0 0.0
    %2636 = vmatprep.subr.mxu0 0.0
    %2637 = vmatpush2.xpose.msra.mxu0 0.0
    %2638 = vmatprep.subr.mxu0 0.0
    %2639 = vmatpush2.xpose.msra.mxu0 0.0
    %2640 = vmatprep.subr.mxu0 0.0
    %2641 = vmatpush2.xpose.msra.mxu0 0.0
    %2642 = vmatprep.subr.mxu0 0.0
    %2643 = vmatpush2.xpose.msra.mxu0 0.0
    %2644 = vmatprep.subr.mxu0 0.0
    %2645 = vmatpush2.xpose.msra.mxu0 0.0
    %2646 = vmatprep.mubr.f32.mxu0 0.0
    %2647 = vmatmul.mubr.f32.gmra.mxu0 %v2578
    %v2648 = vpop.f32.mrf.mxu0
    %v2649 = vadd.f32 0.0, %v2648
    %v2650 = vpop.f32.mrf.mxu0
    %2651 = vdwg.mxu0
    %v2652 = vsel %vm237, %v2571, -inf
    %2653 = vmax.xlane.f32.xlu0 %v2652
    %v2654 = vpop.xlane.xlu0 %2653
    %v2655 = vsel %vm237, %v2649, -inf
    %2656 = vmax.xlane.f32.xlu0 %v2655
    %v2657 = vpop.xlane.xlu0 %2656
    %v2658 = vsub.f32 %v2571, %v2654
    %v2659 = vsub.f32 %v2649, %v2657
    %v2660 = vmul.f32 %v2658, 1.442695
    %v2661 = vpow.pop %v2660
    %v2662 = vmul.f32 %v2659, 1.442695
    %v2663 = vpow.pop %v2662
    %v2664 = vsel %vm237, %v2661, 0.0
    %2665 = vadd.xlane.f32.xlu0 %v2664
    %v2666 = vpop.xlane.xlu0 %2665
    %v2667 = vsel %vm237, %v2663, 0.0
    %2668 = vadd.xlane.f32.xlu0 %v2667
    %v2669 = vpop.xlane.xlu0 %2668
    %v2670 = vrcp.pop %v2666
    %v2671 = vrcp.pop %v2669
    %v2672 = vmul.f32 %v2661, %v2670
    %v2673 = vmul.f32 %v2663, %v2671
    %2674 = vrot.lane.b32.xlu0 %v2156, 56
    %v2675 = vpop.permute.xlu0 %2674
    %v2678 = vsel %vm237, %v2672, 0
    %2680 = vmatprep.subr.mxu0 0.0
    %2681 = vmatpush1.msra.mxu0 0.0
    %2682 = vmatprep.subr.mxu0 0.0
    %2683 = vmatpush1.msra.mxu0 0.0
    %2684 = vmatprep.subr.mxu0 0.0
    %2685 = vmatpush1.msra.mxu0 0.0
    %2686 = vmatprep.subr.mxu0 0.0
    %2687 = vmatpush1.msra.mxu0 0.0
    %2688 = vmatprep.subr.mxu0 0.0
    %2689 = vmatpush1.msra.mxu0 0.0
    %2690 = vmatprep.subr.mxu0 0.0
    %2691 = vmatpush1.msra.mxu0 0.0
    %2692 = vmatprep.subr.mxu0 0.0
    %2693 = vmatpush1.msra.mxu0 0.0
    %2694 = vmatprep.subr.mxu0 0.0
    %2695 = vmatpush1.msra.mxu0 0.0
    %2696 = vmatprep.subr.mxu0 0.0
    %2697 = vmatpush1.msra.mxu0 0.0
    %2698 = vmatprep.subr.mxu0 0.0
    %2699 = vmatpush1.msra.mxu0 0.0
    %2700 = vmatprep.subr.mxu0 0.0
    %2701 = vmatpush1.msra.mxu0 0.0
    %2702 = vmatprep.subr.mxu0 0.0
    %2703 = vmatpush1.msra.mxu0 0.0
    %2704 = vmatprep.subr.mxu0 0.0
    %2705 = vmatpush1.msra.mxu0 0.0
    %2706 = vmatprep.subr.mxu0 0.0
    %2707 = vmatpush1.msra.mxu0 0.0
    %2708 = vmatprep.subr.mxu0 0.0
    %2709 = vmatpush1.msra.mxu0 0.0
    %2710 = vmatprep.subr.mxu0 0.0
    %2711 = vmatpush1.msra.mxu0 %v2675
    %2712 = vmatprep.subr.mxu0 0.0
    %2713 = vmatpush2.msra.mxu0 0.0
    %2714 = vmatprep.subr.mxu0 0.0
    %2715 = vmatpush2.msra.mxu0 0.0
    %2716 = vmatprep.subr.mxu0 0.0
    %2717 = vmatpush2.msra.mxu0 0.0
    %2718 = vmatprep.subr.mxu0 0.0
    %2719 = vmatpush2.msra.mxu0 0.0
    %2720 = vmatprep.subr.mxu0 0.0
    %2721 = vmatpush2.msra.mxu0 0.0
    %2722 = vmatprep.subr.mxu0 0.0
    %2723 = vmatpush2.msra.mxu0 0.0
    %2724 = vmatprep.subr.mxu0 0.0
    %2725 = vmatpush2.msra.mxu0 0.0
    %2726 = vmatprep.subr.mxu0 0.0
    %2727 = vmatpush2.msra.mxu0 0.0
    %2728 = vmatprep.subr.mxu0 0.0
    %2729 = vmatpush2.msra.mxu0 0.0
    %2730 = vmatprep.subr.mxu0 0.0
    %2731 = vmatpush2.msra.mxu0 0.0
    %2732 = vmatprep.subr.mxu0 0.0
    %2733 = vmatpush2.msra.mxu0 0.0
    %2734 = vmatprep.subr.mxu0 0.0
    %2735 = vmatpush2.msra.mxu0 0.0
    %2736 = vmatprep.subr.mxu0 0.0
    %2737 = vmatpush2.msra.mxu0 0.0
    %2738 = vmatprep.subr.mxu0 0.0
    %2739 = vmatpush2.msra.mxu0 0.0
    %2740 = vmatprep.subr.mxu0 0.0
    %2741 = vmatpush2.msra.mxu0 0.0
    %2742 = vmatprep.subr.mxu0 0.0
    %2743 = vmatpush2.msra.mxu0 0.0
    %2744 = vmatprep.mubr.f32.mxu0 0.0
    %2745 = vmatmul.mubr.f32.gmra.mxu0 %v2678
    %v2746 = vpop.f32.mrf.mxu0
    %v2747 = vadd.f32 0.0, %v2746
    %v2748 = vpop.f32.mrf.mxu0
    %2749 = vdwg.mxu0
    %2750 = vrot.lane.b32.xlu0 %v2161, 56
    %v2751 = vpop.permute.xlu0 %2750
    %v2754 = vsel %vm237, %v2673, 0
    %2756 = vmatprep.subr.mxu0 0.0
    %2757 = vmatpush1.msra.mxu0 0.0
    %2758 = vmatprep.subr.mxu0 0.0
    %2759 = vmatpush1.msra.mxu0 0.0
    %2760 = vmatprep.subr.mxu0 0.0
    %2761 = vmatpush1.msra.mxu0 0.0
    %2762 = vmatprep.subr.mxu0 0.0
    %2763 = vmatpush1.msra.mxu0 0.0
    %2764 = vmatprep.subr.mxu0 0.0
    %2765 = vmatpush1.msra.mxu0 0.0
    %2766 = vmatprep.subr.mxu0 0.0
    %2767 = vmatpush1.msra.mxu0 0.0
    %2768 = vmatprep.subr.mxu0 0.0
    %2769 = vmatpush1.msra.mxu0 0.0
    %2770 = vmatprep.subr.mxu0 0.0
    %2771 = vmatpush1.msra.mxu0 0.0
    %2772 = vmatprep.subr.mxu0 0.0
    %2773 = vmatpush1.msra.mxu0 0.0
    %2774 = vmatprep.subr.mxu0 0.0
    %2775 = vmatpush1.msra.mxu0 0.0
    %2776 = vmatprep.subr.mxu0 0.0
    %2777 = vmatpush1.msra.mxu0 0.0
    %2778 = vmatprep.subr.mxu0 0.0
    %2779 = vmatpush1.msra.mxu0 0.0
    %2780 = vmatprep.subr.mxu0 0.0
    %2781 = vmatpush1.msra.mxu0 0.0
    %2782 = vmatprep.subr.mxu0 0.0
    %2783 = vmatpush1.msra.mxu0 0.0
    %2784 = vmatprep.subr.mxu0 0.0
    %2785 = vmatpush1.msra.mxu0 0.0
    %2786 = vmatprep.subr.mxu0 0.0
    %2787 = vmatpush1.msra.mxu0 %v2751
    %2788 = vmatprep.subr.mxu0 0.0
    %2789 = vmatpush2.msra.mxu0 0.0
    %2790 = vmatprep.subr.mxu0 0.0
    %2791 = vmatpush2.msra.mxu0 0.0
    %2792 = vmatprep.subr.mxu0 0.0
    %2793 = vmatpush2.msra.mxu0 0.0
    %2794 = vmatprep.subr.mxu0 0.0
    %2795 = vmatpush2.msra.mxu0 0.0
    %2796 = vmatprep.subr.mxu0 0.0
    %2797 = vmatpush2.msra.mxu0 0.0
    %2798 = vmatprep.subr.mxu0 0.0
    %2799 = vmatpush2.msra.mxu0 0.0
    %2800 = vmatprep.subr.mxu0 0.0
    %2801 = vmatpush2.msra.mxu0 0.0
    %2802 = vmatprep.subr.mxu0 0.0
    %2803 = vmatpush2.msra.mxu0 0.0
    %2804 = vmatprep.subr.mxu0 0.0
    %2805 = vmatpush2.msra.mxu0 0.0
    %2806 = vmatprep.subr.mxu0 0.0
    %2807 = vmatpush2.msra.mxu0 0.0
    %2808 = vmatprep.subr.mxu0 0.0
    %2809 = vmatpush2.msra.mxu0 0.0
    %2810 = vmatprep.subr.mxu0 0.0
    %2811 = vmatpush2.msra.mxu0 0.0
    %2812 = vmatprep.subr.mxu0 0.0
    %2813 = vmatpush2.msra.mxu0 0.0
    %2814 = vmatprep.subr.mxu0 0.0
    %2815 = vmatpush2.msra.mxu0 0.0
    %2816 = vmatprep.subr.mxu0 0.0
    %2817 = vmatpush2.msra.mxu0 0.0
    %2818 = vmatprep.subr.mxu0 0.0
    %2819 = vmatpush2.msra.mxu0 0.0
    %2820 = vmatprep.mubr.f32.mxu0 0.0
    %2821 = vmatmul.mubr.f32.gmra.mxu0 %v2754
    %v2822 = vpop.f32.mrf.mxu0
    %v2823 = vadd.f32 0.0, %v2822
    %v2824 = vpop.f32.mrf.mxu0
    %2825 = vdwg.mxu0
    %2826 = vrot.lane.b32.xlu0 %v2164, 112
    %v2827 = vpop.permute.xlu0 %2826
    %2828 = vrot.lane.b32.xlu0 %v2156, 80
    %v2829 = vpop.permute.xlu0 %2828
    %v2830 = vsel %vm237, %v2827, 0
    %v2832 = vsel %vm237, %v2829, 0
    %2834 = vmatprep.subr.mxu0 0.0
    %2835 = vmatpush1.xpose.msra.mxu0 0.0
    %2836 = vmatprep.subr.mxu0 0.0
    %2837 = vmatpush1.xpose.msra.mxu0 0.0
    %2838 = vmatprep.subr.mxu0 0.0
    %2839 = vmatpush1.xpose.msra.mxu0 0.0
    %2840 = vmatprep.subr.mxu0 0.0
    %2841 = vmatpush1.xpose.msra.mxu0 0.0
    %2842 = vmatprep.subr.mxu0 0.0
    %2843 = vmatpush1.xpose.msra.mxu0 0.0
    %2844 = vmatprep.subr.mxu0 0.0
    %2845 = vmatpush1.xpose.msra.mxu0 0.0
    %2846 = vmatprep.subr.mxu0 0.0
    %2847 = vmatpush1.xpose.msra.mxu0 0.0
    %2848 = vmatprep.subr.mxu0 0.0
    %2849 = vmatpush1.xpose.msra.mxu0 0.0
    %2850 = vmatprep.subr.mxu0 0.0
    %2851 = vmatpush1.xpose.msra.mxu0 0.0
    %2852 = vmatprep.subr.mxu0 0.0
    %2853 = vmatpush1.xpose.msra.mxu0 0.0
    %2854 = vmatprep.subr.mxu0 0.0
    %2855 = vmatpush1.xpose.msra.mxu0 0.0
    %2856 = vmatprep.subr.mxu0 0.0
    %2857 = vmatpush1.xpose.msra.mxu0 0.0
    %2858 = vmatprep.subr.mxu0 0.0
    %2859 = vmatpush1.xpose.msra.mxu0 0.0
    %2860 = vmatprep.subr.mxu0 0.0
    %2861 = vmatpush1.xpose.msra.mxu0 0.0
    %2862 = vmatprep.subr.mxu0 0.0
    %2863 = vmatpush1.xpose.msra.mxu0 0.0
    %2864 = vmatprep.subr.mxu0 0.0
    %2865 = vmatpush1.xpose.msra.mxu0 %v2832
    %2866 = vmatprep.subr.mxu0 0.0
    %2867 = vmatpush2.xpose.msra.mxu0 0.0
    %2868 = vmatprep.subr.mxu0 0.0
    %2869 = vmatpush2.xpose.msra.mxu0 0.0
    %2870 = vmatprep.subr.mxu0 0.0
    %2871 = vmatpush2.xpose.msra.mxu0 0.0
    %2872 = vmatprep.subr.mxu0 0.0
    %2873 = vmatpush2.xpose.msra.mxu0 0.0
    %2874 = vmatprep.subr.mxu0 0.0
    %2875 = vmatpush2.xpose.msra.mxu0 0.0
    %2876 = vmatprep.subr.mxu0 0.0
    %2877 = vmatpush2.xpose.msra.mxu0 0.0
    %2878 = vmatprep.subr.mxu0 0.0
    %2879 = vmatpush2.xpose.msra.mxu0 0.0
    %2880 = vmatprep.subr.mxu0 0.0
    %2881 = vmatpush2.xpose.msra.mxu0 0.0
    %2882 = vmatprep.subr.mxu0 0.0
    %2883 = vmatpush2.xpose.msra.mxu0 0.0
    %2884 = vmatprep.subr.mxu0 0.0
    %2885 = vmatpush2.xpose.msra.mxu0 0.0
    %2886 = vmatprep.subr.mxu0 0.0
    %2887 = vmatpush2.xpose.msra.mxu0 0.0
    %2888 = vmatprep.subr.mxu0 0.0
    %2889 = vmatpush2.xpose.msra.mxu0 0.0
    %2890 = vmatprep.subr.mxu0 0.0
    %2891 = vmatpush2.xpose.msra.mxu0 0.0
    %2892 = vmatprep.subr.mxu0 0.0
    %2893 = vmatpush2.xpose.msra.mxu0 0.0
    %2894 = vmatprep.subr.mxu0 0.0
    %2895 = vmatpush2.xpose.msra.mxu0 0.0
    %2896 = vmatprep.subr.mxu0 0.0
    %2897 = vmatpush2.xpose.msra.mxu0 0.0
    %2898 = vmatprep.mubr.f32.mxu0 0.0
    %2899 = vmatmul.mubr.f32.gmra.mxu0 %v2830
    %v2900 = vpop.f32.mrf.mxu0
    %v2901 = vadd.f32 0.0, %v2900
    %v2902 = vpop.f32.mrf.mxu0
    %2903 = vdwg.mxu0
    %2904 = vrot.lane.b32.xlu0 %v2165, 112
    %v2905 = vpop.permute.xlu0 %2904
    %2906 = vrot.lane.b32.xlu0 %v2161, 80
    %v2907 = vpop.permute.xlu0 %2906
    %v2908 = vsel %vm237, %v2905, 0
    %v2910 = vsel %vm237, %v2907, 0
    %2912 = vmatprep.subr.mxu0 0.0
    %2913 = vmatpush1.xpose.msra.mxu0 0.0
    %2914 = vmatprep.subr.mxu0 0.0
    %2915 = vmatpush1.xpose.msra.mxu0 0.0
    %2916 = vmatprep.subr.mxu0 0.0
    %2917 = vmatpush1.xpose.msra.mxu0 0.0
    %2918 = vmatprep.subr.mxu0 0.0
    %2919 = vmatpush1.xpose.msra.mxu0 0.0
    %2920 = vmatprep.subr.mxu0 0.0
    %2921 = vmatpush1.xpose.msra.mxu0 0.0
    %2922 = vmatprep.subr.mxu0 0.0
    %2923 = vmatpush1.xpose.msra.mxu0 0.0
    %2924 = vmatprep.subr.mxu0 0.0
    %2925 = vmatpush1.xpose.msra.mxu0 0.0
    %2926 = vmatprep.subr.mxu0 0.0
    %2927 = vmatpush1.xpose.msra.mxu0 0.0
    %2928 = vmatprep.subr.mxu0 0.0
    %2929 = vmatpush1.xpose.msra.mxu0 0.0
    %2930 = vmatprep.subr.mxu0 0.0
    %2931 = vmatpush1.xpose.msra.mxu0 0.0
    %2932 = vmatprep.subr.mxu0 0.0
    %2933 = vmatpush1.xpose.msra.mxu0 0.0
    %2934 = vmatprep.subr.mxu0 0.0
    %2935 = vmatpush1.xpose.msra.mxu0 0.0
    %2936 = vmatprep.subr.mxu0 0.0
    %2937 = vmatpush1.xpose.msra.mxu0 0.0
    %2938 = vmatprep.subr.mxu0 0.0
    %2939 = vmatpush1.xpose.msra.mxu0 0.0
    %2940 = vmatprep.subr.mxu0 0.0
    %2941 = vmatpush1.xpose.msra.mxu0 0.0
    %2942 = vmatprep.subr.mxu0 0.0
    %2943 = vmatpush1.xpose.msra.mxu0 %v2910
    %2944 = vmatprep.subr.mxu0 0.0
    %2945 = vmatpush2.xpose.msra.mxu0 0.0
    %2946 = vmatprep.subr.mxu0 0.0
    %2947 = vmatpush2.xpose.msra.mxu0 0.0
    %2948 = vmatprep.subr.mxu0 0.0
    %2949 = vmatpush2.xpose.msra.mxu0 0.0
    %2950 = vmatprep.subr.mxu0 0.0
    %2951 = vmatpush2.xpose.msra.mxu0 0.0
    %2952 = vmatprep.subr.mxu0 0.0
    %2953 = vmatpush2.xpose.msra.mxu0 0.0
    %2954 = vmatprep.subr.mxu0 0.0
    %2955 = vmatpush2.xpose.msra.mxu0 0.0
    %2956 = vmatprep.subr.mxu0 0.0
    %2957 = vmatpush2.xpose.msra.mxu0 0.0
    %2958 = vmatprep.subr.mxu0 0.0
    %2959 = vmatpush2.xpose.msra.mxu0 0.0
    %2960 = vmatprep.subr.mxu0 0.0
    %2961 = vmatpush2.xpose.msra.mxu0 0.0
    %2962 = vmatprep.subr.mxu0 0.0
    %2963 = vmatpush2.xpose.msra.mxu0 0.0
    %2964 = vmatprep.subr.mxu0 0.0
    %2965 = vmatpush2.xpose.msra.mxu0 0.0
    %2966 = vmatprep.subr.mxu0 0.0
    %2967 = vmatpush2.xpose.msra.mxu0 0.0
    %2968 = vmatprep.subr.mxu0 0.0
    %2969 = vmatpush2.xpose.msra.mxu0 0.0
    %2970 = vmatprep.subr.mxu0 0.0
    %2971 = vmatpush2.xpose.msra.mxu0 0.0
    %2972 = vmatprep.subr.mxu0 0.0
    %2973 = vmatpush2.xpose.msra.mxu0 0.0
    %2974 = vmatprep.subr.mxu0 0.0
    %2975 = vmatpush2.xpose.msra.mxu0 0.0
    %2976 = vmatprep.mubr.f32.mxu0 0.0
    %2977 = vmatmul.mubr.f32.gmra.mxu0 %v2908
    %v2978 = vpop.f32.mrf.mxu0
    %v2979 = vadd.f32 0.0, %v2978
    %v2980 = vpop.f32.mrf.mxu0
    %2981 = vdwg.mxu0
    %v2982 = vsel %vm237, %v2901, -inf
    %2983 = vmax.xlane.f32.xlu0 %v2982
    %v2984 = vpop.xlane.xlu0 %2983
    %v2985 = vsel %vm237, %v2979, -inf
    %2986 = vmax.xlane.f32.xlu0 %v2985
    %v2987 = vpop.xlane.xlu0 %2986
    %v2988 = vsub.f32 %v2901, %v2984
    %v2989 = vsub.f32 %v2979, %v2987
    %v2990 = vmul.f32 %v2988, 1.442695
    %v2991 = vpow.pop %v2990
    %v2992 = vmul.f32 %v2989, 1.442695
    %v2993 = vpow.pop %v2992
    %v2994 = vsel %vm237, %v2991, 0.0
    %2995 = vadd.xlane.f32.xlu0 %v2994
    %v2996 = vpop.xlane.xlu0 %2995
    %v2997 = vsel %vm237, %v2993, 0.0
    %2998 = vadd.xlane.f32.xlu0 %v2997
    %v2999 = vpop.xlane.xlu0 %2998
    %v3000 = vrcp.pop %v2996
    %v3001 = vrcp.pop %v2999
    %v3002 = vmul.f32 %v2991, %v3000
    %v3003 = vmul.f32 %v2993, %v3001
    %3004 = vrot.lane.b32.xlu0 %v2156, 48
    %v3005 = vpop.permute.xlu0 %3004
    %v3008 = vsel %vm237, %v3002, 0
    %3010 = vmatprep.subr.mxu0 0.0
    %3011 = vmatpush1.msra.mxu0 0.0
    %3012 = vmatprep.subr.mxu0 0.0
    %3013 = vmatpush1.msra.mxu0 0.0
    %3014 = vmatprep.subr.mxu0 0.0
    %3015 = vmatpush1.msra.mxu0 0.0
    %3016 = vmatprep.subr.mxu0 0.0
    %3017 = vmatpush1.msra.mxu0 0.0
    %3018 = vmatprep.subr.mxu0 0.0
    %3019 = vmatpush1.msra.mxu0 0.0
    %3020 = vmatprep.subr.mxu0 0.0
    %3021 = vmatpush1.msra.mxu0 0.0
    %3022 = vmatprep.subr.mxu0 0.0
    %3023 = vmatpush1.msra.mxu0 0.0
    %3024 = vmatprep.subr.mxu0 0.0
    %3025 = vmatpush1.msra.mxu0 0.0
    %3026 = vmatprep.subr.mxu0 0.0
    %3027 = vmatpush1.msra.mxu0 0.0
    %3028 = vmatprep.subr.mxu0 0.0
    %3029 = vmatpush1.msra.mxu0 0.0
    %3030 = vmatprep.subr.mxu0 0.0
    %3031 = vmatpush1.msra.mxu0 0.0
    %3032 = vmatprep.subr.mxu0 0.0
    %3033 = vmatpush1.msra.mxu0 0.0
    %3034 = vmatprep.subr.mxu0 0.0
    %3035 = vmatpush1.msra.mxu0 0.0
    %3036 = vmatprep.subr.mxu0 0.0
    %3037 = vmatpush1.msra.mxu0 0.0
    %3038 = vmatprep.subr.mxu0 0.0
    %3039 = vmatpush1.msra.mxu0 0.0
    %3040 = vmatprep.subr.mxu0 0.0
    %3041 = vmatpush1.msra.mxu0 %v3005
    %3042 = vmatprep.subr.mxu0 0.0
    %3043 = vmatpush2.msra.mxu0 0.0
    %3044 = vmatprep.subr.mxu0 0.0
    %3045 = vmatpush2.msra.mxu0 0.0
    %3046 = vmatprep.subr.mxu0 0.0
    %3047 = vmatpush2.msra.mxu0 0.0
    %3048 = vmatprep.subr.mxu0 0.0
    %3049 = vmatpush2.msra.mxu0 0.0
    %3050 = vmatprep.subr.mxu0 0.0
    %3051 = vmatpush2.msra.mxu0 0.0
    %3052 = vmatprep.subr.mxu0 0.0
    %3053 = vmatpush2.msra.mxu0 0.0
    %3054 = vmatprep.subr.mxu0 0.0
    %3055 = vmatpush2.msra.mxu0 0.0
    %3056 = vmatprep.subr.mxu0 0.0
    %3057 = vmatpush2.msra.mxu0 0.0
    %3058 = vmatprep.subr.mxu0 0.0
    %3059 = vmatpush2.msra.mxu0 0.0
    %3060 = vmatprep.subr.mxu0 0.0
    %3061 = vmatpush2.msra.mxu0 0.0
    %3062 = vmatprep.subr.mxu0 0.0
    %3063 = vmatpush2.msra.mxu0 0.0
    %3064 = vmatprep.subr.mxu0 0.0
    %3065 = vmatpush2.msra.mxu0 0.0
    %3066 = vmatprep.subr.mxu0 0.0
    %3067 = vmatpush2.msra.mxu0 0.0
    %3068 = vmatprep.subr.mxu0 0.0
    %3069 = vmatpush2.msra.mxu0 0.0
    %3070 = vmatprep.subr.mxu0 0.0
    %3071 = vmatpush2.msra.mxu0 0.0
    %3072 = vmatprep.subr.mxu0 0.0
    %3073 = vmatpush2.msra.mxu0 0.0
    %3074 = vmatprep.mubr.f32.mxu0 0.0
    %3075 = vmatmul.mubr.f32.gmra.mxu0 %v3008
    %v3076 = vpop.f32.mrf.mxu0
    %v3077 = vadd.f32 0.0, %v3076
    %v3078 = vpop.f32.mrf.mxu0
    %3079 = vdwg.mxu0
    %3080 = vrot.lane.b32.xlu0 %v2161, 48
    %v3081 = vpop.permute.xlu0 %3080
    %v3084 = vsel %vm237, %v3003, 0
    %3086 = vmatprep.subr.mxu0 0.0
    %3087 = vmatpush1.msra.mxu0 0.0
    %3088 = vmatprep.subr.mxu0 0.0
    %3089 = vmatpush1.msra.mxu0 0.0
    %3090 = vmatprep.subr.mxu0 0.0
    %3091 = vmatpush1.msra.mxu0 0.0
    %3092 = vmatprep.subr.mxu0 0.0
    %3093 = vmatpush1.msra.mxu0 0.0
    %3094 = vmatprep.subr.mxu0 0.0
    %3095 = vmatpush1.msra.mxu0 0.0
    %3096 = vmatprep.subr.mxu0 0.0
    %3097 = vmatpush1.msra.mxu0 0.0
    %3098 = vmatprep.subr.mxu0 0.0
    %3099 = vmatpush1.msra.mxu0 0.0
    %3100 = vmatprep.subr.mxu0 0.0
    %3101 = vmatpush1.msra.mxu0 0.0
    %3102 = vmatprep.subr.mxu0 0.0
    %3103 = vmatpush1.msra.mxu0 0.0
    %3104 = vmatprep.subr.mxu0 0.0
    %3105 = vmatpush1.msra.mxu0 0.0
    %3106 = vmatprep.subr.mxu0 0.0
    %3107 = vmatpush1.msra.mxu0 0.0
    %3108 = vmatprep.subr.mxu0 0.0
    %3109 = vmatpush1.msra.mxu0 0.0
    %3110 = vmatprep.subr.mxu0 0.0
    %3111 = vmatpush1.msra.mxu0 0.0
    %3112 = vmatprep.subr.mxu0 0.0
    %3113 = vmatpush1.msra.mxu0 0.0
    %3114 = vmatprep.subr.mxu0 0.0
    %3115 = vmatpush1.msra.mxu0 0.0
    %3116 = vmatprep.subr.mxu0 0.0
    %3117 = vmatpush1.msra.mxu0 %v3081
    %3118 = vmatprep.subr.mxu0 0.0
    %3119 = vmatpush2.msra.mxu0 0.0
    %3120 = vmatprep.subr.mxu0 0.0
    %3121 = vmatpush2.msra.mxu0 0.0
    %3122 = vmatprep.subr.mxu0 0.0
    %3123 = vmatpush2.msra.mxu0 0.0
    %3124 = vmatprep.subr.mxu0 0.0
    %3125 = vmatpush2.msra.mxu0 0.0
    %3126 = vmatprep.subr.mxu0 0.0
    %3127 = vmatpush2.msra.mxu0 0.0
    %3128 = vmatprep.subr.mxu0 0.0
    %3129 = vmatpush2.msra.mxu0 0.0
    %3130 = vmatprep.subr.mxu0 0.0
    %3131 = vmatpush2.msra.mxu0 0.0
    %3132 = vmatprep.subr.mxu0 0.0
    %3133 = vmatpush2.msra.mxu0 0.0
    %3134 = vmatprep.subr.mxu0 0.0
    %3135 = vmatpush2.msra.mxu0 0.0
    %3136 = vmatprep.subr.mxu0 0.0
    %3137 = vmatpush2.msra.mxu0 0.0
    %3138 = vmatprep.subr.mxu0 0.0
    %3139 = vmatpush2.msra.mxu0 0.0
    %3140 = vmatprep.subr.mxu0 0.0
    %3141 = vmatpush2.msra.mxu0 0.0
    %3142 = vmatprep.subr.mxu0 0.0
    %3143 = vmatpush2.msra.mxu0 0.0
    %3144 = vmatprep.subr.mxu0 0.0
    %3145 = vmatpush2.msra.mxu0 0.0
    %3146 = vmatprep.subr.mxu0 0.0
    %3147 = vmatpush2.msra.mxu0 0.0
    %3148 = vmatprep.subr.mxu0 0.0
    %3149 = vmatpush2.msra.mxu0 0.0
    %3150 = vmatprep.mubr.f32.mxu0 0.0
    %3151 = vmatmul.mubr.f32.gmra.mxu0 %v3084
    %v3152 = vpop.f32.mrf.mxu0
    %v3153 = vadd.f32 0.0, %v3152
    %v3154 = vpop.f32.mrf.mxu0
    %3155 = vdwg.mxu0
    %3156 = vrot.lane.b32.xlu0 %v2164, 104
    %v3157 = vpop.permute.xlu0 %3156
    %3158 = vrot.lane.b32.xlu0 %v2156, 72
    %v3159 = vpop.permute.xlu0 %3158
    %v3160 = vsel %vm237, %v3157, 0
    %v3162 = vsel %vm237, %v3159, 0
    %3164 = vmatprep.subr.mxu0 0.0
    %3165 = vmatpush1.xpose.msra.mxu0 0.0
    %3166 = vmatprep.subr.mxu0 0.0
    %3167 = vmatpush1.xpose.msra.mxu0 0.0
    %3168 = vmatprep.subr.mxu0 0.0
    %3169 = vmatpush1.xpose.msra.mxu0 0.0
    %3170 = vmatprep.subr.mxu0 0.0
    %3171 = vmatpush1.xpose.msra.mxu0 0.0
    %3172 = vmatprep.subr.mxu0 0.0
    %3173 = vmatpush1.xpose.msra.mxu0 0.0
    %3174 = vmatprep.subr.mxu0 0.0
    %3175 = vmatpush1.xpose.msra.mxu0 0.0
    %3176 = vmatprep.subr.mxu0 0.0
    %3177 = vmatpush1.xpose.msra.mxu0 0.0
    %3178 = vmatprep.subr.mxu0 0.0
    %3179 = vmatpush1.xpose.msra.mxu0 0.0
    %3180 = vmatprep.subr.mxu0 0.0
    %3181 = vmatpush1.xpose.msra.mxu0 0.0
    %3182 = vmatprep.subr.mxu0 0.0
    %3183 = vmatpush1.xpose.msra.mxu0 0.0
    %3184 = vmatprep.subr.mxu0 0.0
    %3185 = vmatpush1.xpose.msra.mxu0 0.0
    %3186 = vmatprep.subr.mxu0 0.0
    %3187 = vmatpush1.xpose.msra.mxu0 0.0
    %3188 = vmatprep.subr.mxu0 0.0
    %3189 = vmatpush1.xpose.msra.mxu0 0.0
    %3190 = vmatprep.subr.mxu0 0.0
    %3191 = vmatpush1.xpose.msra.mxu0 0.0
    %3192 = vmatprep.subr.mxu0 0.0
    %3193 = vmatpush1.xpose.msra.mxu0 0.0
    %3194 = vmatprep.subr.mxu0 0.0
    %3195 = vmatpush1.xpose.msra.mxu0 %v3162
    %3196 = vmatprep.subr.mxu0 0.0
    %3197 = vmatpush2.xpose.msra.mxu0 0.0
    %3198 = vmatprep.subr.mxu0 0.0
    %3199 = vmatpush2.xpose.msra.mxu0 0.0
    %3200 = vmatprep.subr.mxu0 0.0
    %3201 = vmatpush2.xpose.msra.mxu0 0.0
    %3202 = vmatprep.subr.mxu0 0.0
    %3203 = vmatpush2.xpose.msra.mxu0 0.0
    %3204 = vmatprep.subr.mxu0 0.0
    %3205 = vmatpush2.xpose.msra.mxu0 0.0
    %3206 = vmatprep.subr.mxu0 0.0
    %3207 = vmatpush2.xpose.msra.mxu0 0.0
    %3208 = vmatprep.subr.mxu0 0.0
    %3209 = vmatpush2.xpose.msra.mxu0 0.0
    %3210 = vmatprep.subr.mxu0 0.0
    %3211 = vmatpush2.xpose.msra.mxu0 0.0
    %3212 = vmatprep.subr.mxu0 0.0
    %3213 = vmatpush2.xpose.msra.mxu0 0.0
    %3214 = vmatprep.subr.mxu0 0.0
    %3215 = vmatpush2.xpose.msra.mxu0 0.0
    %3216 = vmatprep.subr.mxu0 0.0
    %3217 = vmatpush2.xpose.msra.mxu0 0.0
    %3218 = vmatprep.subr.mxu0 0.0
    %3219 = vmatpush2.xpose.msra.mxu0 0.0
    %3220 = vmatprep.subr.mxu0 0.0
    %3221 = vmatpush2.xpose.msra.mxu0 0.0
    %3222 = vmatprep.subr.mxu0 0.0
    %3223 = vmatpush2.xpose.msra.mxu0 0.0
    %3224 = vmatprep.subr.mxu0 0.0
    %3225 = vmatpush2.xpose.msra.mxu0 0.0
    %3226 = vmatprep.subr.mxu0 0.0
    %3227 = vmatpush2.xpose.msra.mxu0 0.0
    %3228 = vmatprep.mubr.f32.mxu0 0.0
    %3229 = vmatmul.mubr.f32.gmra.mxu0 %v3160
    %v3230 = vpop.f32.mrf.mxu0
    %v3231 = vadd.f32 0.0, %v3230
    %v3232 = vpop.f32.mrf.mxu0
    %3233 = vdwg.mxu0
    %3234 = vrot.lane.b32.xlu0 %v2165, 104
    %v3235 = vpop.permute.xlu0 %3234
    %3236 = vrot.lane.b32.xlu0 %v2161, 72
    %v3237 = vpop.permute.xlu0 %3236
    %v3238 = vsel %vm237, %v3235, 0
    %v3240 = vsel %vm237, %v3237, 0
    %3242 = vmatprep.subr.mxu0 0.0
    %3243 = vmatpush1.xpose.msra.mxu0 0.0
    %3244 = vmatprep.subr.mxu0 0.0
    %3245 = vmatpush1.xpose.msra.mxu0 0.0
    %3246 = vmatprep.subr.mxu0 0.0
    %3247 = vmatpush1.xpose.msra.mxu0 0.0
    %3248 = vmatprep.subr.mxu0 0.0
    %3249 = vmatpush1.xpose.msra.mxu0 0.0
    %3250 = vmatprep.subr.mxu0 0.0
    %3251 = vmatpush1.xpose.msra.mxu0 0.0
    %3252 = vmatprep.subr.mxu0 0.0
    %3253 = vmatpush1.xpose.msra.mxu0 0.0
    %3254 = vmatprep.subr.mxu0 0.0
    %3255 = vmatpush1.xpose.msra.mxu0 0.0
    %3256 = vmatprep.subr.mxu0 0.0
    %3257 = vmatpush1.xpose.msra.mxu0 0.0
    %3258 = vmatprep.subr.mxu0 0.0
    %3259 = vmatpush1.xpose.msra.mxu0 0.0
    %3260 = vmatprep.subr.mxu0 0.0
    %3261 = vmatpush1.xpose.msra.mxu0 0.0
    %3262 = vmatprep.subr.mxu0 0.0
    %3263 = vmatpush1.xpose.msra.mxu0 0.0
    %3264 = vmatprep.subr.mxu0 0.0
    %3265 = vmatpush1.xpose.msra.mxu0 0.0
    %3266 = vmatprep.subr.mxu0 0.0
    %3267 = vmatpush1.xpose.msra.mxu0 0.0
    %3268 = vmatprep.subr.mxu0 0.0
    %3269 = vmatpush1.xpose.msra.mxu0 0.0
    %3270 = vmatprep.subr.mxu0 0.0
    %3271 = vmatpush1.xpose.msra.mxu0 0.0
    %3272 = vmatprep.subr.mxu0 0.0
    %3273 = vmatpush1.xpose.msra.mxu0 %v3240
    %3274 = vmatprep.subr.mxu0 0.0
    %3275 = vmatpush2.xpose.msra.mxu0 0.0
    %3276 = vmatprep.subr.mxu0 0.0
    %3277 = vmatpush2.xpose.msra.mxu0 0.0
    %3278 = vmatprep.subr.mxu0 0.0
    %3279 = vmatpush2.xpose.msra.mxu0 0.0
    %3280 = vmatprep.subr.mxu0 0.0
    %3281 = vmatpush2.xpose.msra.mxu0 0.0
    %3282 = vmatprep.subr.mxu0 0.0
    %3283 = vmatpush2.xpose.msra.mxu0 0.0
    %3284 = vmatprep.subr.mxu0 0.0
    %3285 = vmatpush2.xpose.msra.mxu0 0.0
    %3286 = vmatprep.subr.mxu0 0.0
    %3287 = vmatpush2.xpose.msra.mxu0 0.0
    %3288 = vmatprep.subr.mxu0 0.0
    %3289 = vmatpush2.xpose.msra.mxu0 0.0
    %3290 = vmatprep.subr.mxu0 0.0
    %3291 = vmatpush2.xpose.msra.mxu0 0.0
    %3292 = vmatprep.subr.mxu0 0.0
    %3293 = vmatpush2.xpose.msra.mxu0 0.0
    %3294 = vmatprep.subr.mxu0 0.0
    %3295 = vmatpush2.xpose.msra.mxu0 0.0
    %3296 = vmatprep.subr.mxu0 0.0
    %3297 = vmatpush2.xpose.msra.mxu0 0.0
    %3298 = vmatprep.subr.mxu0 0.0
    %3299 = vmatpush2.xpose.msra.mxu0 0.0
    %3300 = vmatprep.subr.mxu0 0.0
    %3301 = vmatpush2.xpose.msra.mxu0 0.0
    %3302 = vmatprep.subr.mxu0 0.0
    %3303 = vmatpush2.xpose.msra.mxu0 0.0
    %3304 = vmatprep.subr.mxu0 0.0
    %3305 = vmatpush2.xpose.msra.mxu0 0.0
    %3306 = vmatprep.mubr.f32.mxu0 0.0
    %3307 = vmatmul.mubr.f32.gmra.mxu0 %v3238
    %v3308 = vpop.f32.mrf.mxu0
    %v3309 = vadd.f32 0.0, %v3308
    %v3310 = vpop.f32.mrf.mxu0
    %3311 = vdwg.mxu0
    %v3312 = vsel %vm237, %v3231, -inf
    %3313 = vmax.xlane.f32.xlu0 %v3312
    %v3314 = vpop.xlane.xlu0 %3313
    %v3315 = vsel %vm237, %v3309, -inf
    %3316 = vmax.xlane.f32.xlu0 %v3315
    %v3317 = vpop.xlane.xlu0 %3316
    %v3318 = vsub.f32 %v3231, %v3314
    %v3319 = vsub.f32 %v3309, %v3317
    %v3320 = vmul.f32 %v3318, 1.442695
    %v3321 = vpow.pop %v3320
    %v3322 = vmul.f32 %v3319, 1.442695
    %v3323 = vpow.pop %v3322
    %v3324 = vsel %vm237, %v3321, 0.0
    %3325 = vadd.xlane.f32.xlu0 %v3324
    %v3326 = vpop.xlane.xlu0 %3325
    %v3327 = vsel %vm237, %v3323, 0.0
    %3328 = vadd.xlane.f32.xlu0 %v3327
    %v3329 = vpop.xlane.xlu0 %3328
    %v3330 = vrcp.pop %v3326
    %v3331 = vrcp.pop %v3329
    %v3332 = vmul.f32 %v3321, %v3330
    %v3333 = vmul.f32 %v3323, %v3331
    %3334 = vrot.lane.b32.xlu0 %v2156, 40
    %v3335 = vpop.permute.xlu0 %3334
    %v3338 = vsel %vm237, %v3332, 0
    %3340 = vmatprep.subr.mxu0 0.0
    %3341 = vmatpush1.msra.mxu0 0.0
    %3342 = vmatprep.subr.mxu0 0.0
    %3343 = vmatpush1.msra.mxu0 0.0
    %3344 = vmatprep.subr.mxu0 0.0
    %3345 = vmatpush1.msra.mxu0 0.0
    %3346 = vmatprep.subr.mxu0 0.0
    %3347 = vmatpush1.msra.mxu0 0.0
    %3348 = vmatprep.subr.mxu0 0.0
    %3349 = vmatpush1.msra.mxu0 0.0
    %3350 = vmatprep.subr.mxu0 0.0
    %3351 = vmatpush1.msra.mxu0 0.0
    %3352 = vmatprep.subr.mxu0 0.0
    %3353 = vmatpush1.msra.mxu0 0.0
    %3354 = vmatprep.subr.mxu0 0.0
    %3355 = vmatpush1.msra.mxu0 0.0
    %3356 = vmatprep.subr.mxu0 0.0
    %3357 = vmatpush1.msra.mxu0 0.0
    %3358 = vmatprep.subr.mxu0 0.0
    %3359 = vmatpush1.msra.mxu0 0.0
    %3360 = vmatprep.subr.mxu0 0.0
    %3361 = vmatpush1.msra.mxu0 0.0
    %3362 = vmatprep.subr.mxu0 0.0
    %3363 = vmatpush1.msra.mxu0 0.0
    %3364 = vmatprep.subr.mxu0 0.0
    %3365 = vmatpush1.msra.mxu0 0.0
    %3366 = vmatprep.subr.mxu0 0.0
    %3367 = vmatpush1.msra.mxu0 0.0
    %3368 = vmatprep.subr.mxu0 0.0
    %3369 = vmatpush1.msra.mxu0 0.0
    %3370 = vmatprep.subr.mxu0 0.0
    %3371 = vmatpush1.msra.mxu0 %v3335
    %3372 = vmatprep.subr.mxu0 0.0
    %3373 = vmatpush2.msra.mxu0 0.0
    %3374 = vmatprep.subr.mxu0 0.0
    %3375 = vmatpush2.msra.mxu0 0.0
    %3376 = vmatprep.subr.mxu0 0.0
    %3377 = vmatpush2.msra.mxu0 0.0
    %3378 = vmatprep.subr.mxu0 0.0
    %3379 = vmatpush2.msra.mxu0 0.0
    %3380 = vmatprep.subr.mxu0 0.0
    %3381 = vmatpush2.msra.mxu0 0.0
    %3382 = vmatprep.subr.mxu0 0.0
    %3383 = vmatpush2.msra.mxu0 0.0
    %3384 = vmatprep.subr.mxu0 0.0
    %3385 = vmatpush2.msra.mxu0 0.0
    %3386 = vmatprep.subr.mxu0 0.0
    %3387 = vmatpush2.msra.mxu0 0.0
    %3388 = vmatprep.subr.mxu0 0.0
    %3389 = vmatpush2.msra.mxu0 0.0
    %3390 = vmatprep.subr.mxu0 0.0
    %3391 = vmatpush2.msra.mxu0 0.0
    %3392 = vmatprep.subr.mxu0 0.0
    %3393 = vmatpush2.msra.mxu0 0.0
    %3394 = vmatprep.subr.mxu0 0.0
    %3395 = vmatpush2.msra.mxu0 0.0
    %3396 = vmatprep.subr.mxu0 0.0
    %3397 = vmatpush2.msra.mxu0 0.0
    %3398 = vmatprep.subr.mxu0 0.0
    %3399 = vmatpush2.msra.mxu0 0.0
    %3400 = vmatprep.subr.mxu0 0.0
    %3401 = vmatpush2.msra.mxu0 0.0
    %3402 = vmatprep.subr.mxu0 0.0
    %3403 = vmatpush2.msra.mxu0 0.0
    %3404 = vmatprep.mubr.f32.mxu0 0.0
    %3405 = vmatmul.mubr.f32.gmra.mxu0 %v3338
    %v3406 = vpop.f32.mrf.mxu0
    %v3407 = vadd.f32 0.0, %v3406
    %v3408 = vpop.f32.mrf.mxu0
    %3409 = vdwg.mxu0
    %3410 = vrot.lane.b32.xlu0 %v2161, 40
    %v3411 = vpop.permute.xlu0 %3410
    %v3414 = vsel %vm237, %v3333, 0
    %3416 = vmatprep.subr.mxu0 0.0
    %3417 = vmatpush1.msra.mxu0 0.0
    %3418 = vmatprep.subr.mxu0 0.0
    %3419 = vmatpush1.msra.mxu0 0.0
    %3420 = vmatprep.subr.mxu0 0.0
    %3421 = vmatpush1.msra.mxu0 0.0
    %3422 = vmatprep.subr.mxu0 0.0
    %3423 = vmatpush1.msra.mxu0 0.0
    %3424 = vmatprep.subr.mxu0 0.0
    %3425 = vmatpush1.msra.mxu0 0.0
    %3426 = vmatprep.subr.mxu0 0.0
    %3427 = vmatpush1.msra.mxu0 0.0
    %3428 = vmatprep.subr.mxu0 0.0
    %3429 = vmatpush1.msra.mxu0 0.0
    %3430 = vmatprep.subr.mxu0 0.0
    %3431 = vmatpush1.msra.mxu0 0.0
    %3432 = vmatprep.subr.mxu0 0.0
    %3433 = vmatpush1.msra.mxu0 0.0
    %3434 = vmatprep.subr.mxu0 0.0
    %3435 = vmatpush1.msra.mxu0 0.0
    %3436 = vmatprep.subr.mxu0 0.0
    %3437 = vmatpush1.msra.mxu0 0.0
    %3438 = vmatprep.subr.mxu0 0.0
    %3439 = vmatpush1.msra.mxu0 0.0
    %3440 = vmatprep.subr.mxu0 0.0
    %3441 = vmatpush1.msra.mxu0 0.0
    %3442 = vmatprep.subr.mxu0 0.0
    %3443 = vmatpush1.msra.mxu0 0.0
    %3444 = vmatprep.subr.mxu0 0.0
    %3445 = vmatpush1.msra.mxu0 0.0
    %3446 = vmatprep.subr.mxu0 0.0
    %3447 = vmatpush1.msra.mxu0 %v3411
    %3448 = vmatprep.subr.mxu0 0.0
    %3449 = vmatpush2.msra.mxu0 0.0
    %3450 = vmatprep.subr.mxu0 0.0
    %3451 = vmatpush2.msra.mxu0 0.0
    %3452 = vmatprep.subr.mxu0 0.0
    %3453 = vmatpush2.msra.mxu0 0.0
    %3454 = vmatprep.subr.mxu0 0.0
    %3455 = vmatpush2.msra.mxu0 0.0
    %3456 = vmatprep.subr.mxu0 0.0
    %3457 = vmatpush2.msra.mxu0 0.0
    %3458 = vmatprep.subr.mxu0 0.0
    %3459 = vmatpush2.msra.mxu0 0.0
    %3460 = vmatprep.subr.mxu0 0.0
    %3461 = vmatpush2.msra.mxu0 0.0
    %3462 = vmatprep.subr.mxu0 0.0
    %3463 = vmatpush2.msra.mxu0 0.0
    %3464 = vmatprep.subr.mxu0 0.0
    %3465 = vmatpush2.msra.mxu0 0.0
    %3466 = vmatprep.subr.mxu0 0.0
    %3467 = vmatpush2.msra.mxu0 0.0
    %3468 = vmatprep.subr.mxu0 0.0
    %3469 = vmatpush2.msra.mxu0 0.0
    %3470 = vmatprep.subr.mxu0 0.0
    %3471 = vmatpush2.msra.mxu0 0.0
    %3472 = vmatprep.subr.mxu0 0.0
    %3473 = vmatpush2.msra.mxu0 0.0
    %3474 = vmatprep.subr.mxu0 0.0
    %3475 = vmatpush2.msra.mxu0 0.0
    %3476 = vmatprep.subr.mxu0 0.0
    %3477 = vmatpush2.msra.mxu0 0.0
    %3478 = vmatprep.subr.mxu0 0.0
    %3479 = vmatpush2.msra.mxu0 0.0
    %3480 = vmatprep.mubr.f32.mxu0 0.0
    %3481 = vmatmul.mubr.f32.gmra.mxu0 %v3414
    %v3482 = vpop.f32.mrf.mxu0
    %v3483 = vadd.f32 0.0, %v3482
    %v3484 = vpop.f32.mrf.mxu0
    %3485 = vdwg.mxu0
    %3488 = vrot.lane.b32.xlu0 %v2747, 8
    %v3489 = vpop.permute.xlu0 %3488
    %3490 = vrot.lane.b32.xlu0 %v2823, 8
    %v3491 = vpop.permute.xlu0 %3490
    %3496 = vrot.lane.b32.xlu0 %v3077, 16
    %v3497 = vpop.permute.xlu0 %3496
    %3498 = vrot.lane.b32.xlu0 %v3153, 16
    %v3499 = vpop.permute.xlu0 %3498
    %3504 = vrot.lane.b32.xlu0 %v3407, 24
    %v3505 = vpop.permute.xlu0 %3504
    %3506 = vrot.lane.b32.xlu0 %v3483, 24
    %v3507 = vpop.permute.xlu0 %3506
    %v3510 = vsel %vm237, %v2417, %v3489
    %v3511 = vsel %vm237, %v2493, %v3491
    %v3512 = vsel %vm1581, %v3510, %v3497
    %v3513 = vsel %vm1581, %v3511, %v3499
    %v3514 = vsel %vm1584, %v3512, %v3505
    %v3515 = vsel %vm1584, %v3513, %v3507
    %s3516 = scalar_lea.vmem %s5, 32
    %v3517 = vld [vmem:[%s3516] sm:$0xff]
    %v3518 = vld [vmem:[%s3516 + $0x8] sm:$0xff]
    %v3519 = vld [vmem:[%s3516 + $0x10] sm:$0xff]
    %v3520 = vld [vmem:[%s3516 + $0x18] sm:$0xff]
    %s3521 = scalar_lea.vmem %s6, 1
    %v3522 = vld [vmem:[%s3521] sm:$0x1]
    %v3524 = vlaneseq
    %v3525 = vshrl.u32 %v3524, 7
    %v3526 = vsub.s32 0, %v3525
    %v3527 = vrot.slane %v3522, %v3526
    %v3530 = vsel %vm96, %v3514, 0
    %v3533 = vsel %vm96, %v3515, 0
    %3535 = vmatprep.subr.mxu0 0.0
    %3536 = vmatpush1.msra.mxu0 0.0
    %3537 = vmatprep.subr.mxu0 0.0
    %3538 = vmatpush1.msra.mxu0 0.0
    %3539 = vmatprep.subr.mxu0 0.0
    %3540 = vmatpush1.msra.mxu0 0.0
    %3541 = vmatprep.subr.mxu0 0.0
    %3542 = vmatpush1.msra.mxu0 0.0
    %3543 = vmatprep.subr.mxu0 0.0
    %3544 = vmatpush1.msra.mxu0 0.0
    %3545 = vmatprep.subr.mxu0 0.0
    %3546 = vmatpush1.msra.mxu0 0.0
    %3547 = vmatprep.subr.mxu0 0.0
    %3548 = vmatpush1.msra.mxu0 0.0
    %3549 = vmatprep.subr.mxu0 0.0
    %3550 = vmatpush1.msra.mxu0 0.0
    %3551 = vmatprep.subr.mxu0 0.0
    %3552 = vmatpush1.msra.mxu0 0.0
    %3553 = vmatprep.subr.mxu0 0.0
    %3554 = vmatpush1.msra.mxu0 0.0
    %3555 = vmatprep.subr.mxu0 0.0
    %3556 = vmatpush1.msra.mxu0 0.0
    %3557 = vmatprep.subr.mxu0 0.0
    %3558 = vmatpush1.msra.mxu0 0.0
    %3559 = vmatprep.subr.mxu0 0.0
    %3560 = vmatpush1.msra.mxu0 %v3520
    %3561 = vmatprep.subr.mxu0 0.0
    %3562 = vmatpush1.msra.mxu0 %v3519
    %3563 = vmatprep.subr.mxu0 0.0
    %3564 = vmatpush1.msra.mxu0 %v3518
    %3565 = vmatprep.subr.mxu0 0.0
    %3566 = vmatpush1.msra.mxu0 %v3517
    %3567 = vmatprep.subr.mxu0 0.0
    %3568 = vmatpush2.msra.mxu0 0.0
    %3569 = vmatprep.subr.mxu0 0.0
    %3570 = vmatpush2.msra.mxu0 0.0
    %3571 = vmatprep.subr.mxu0 0.0
    %3572 = vmatpush2.msra.mxu0 0.0
    %3573 = vmatprep.subr.mxu0 0.0
    %3574 = vmatpush2.msra.mxu0 0.0
    %3575 = vmatprep.subr.mxu0 0.0
    %3576 = vmatpush2.msra.mxu0 0.0
    %3577 = vmatprep.subr.mxu0 0.0
    %3578 = vmatpush2.msra.mxu0 0.0
    %3579 = vmatprep.subr.mxu0 0.0
    %3580 = vmatpush2.msra.mxu0 0.0
    %3581 = vmatprep.subr.mxu0 0.0
    %3582 = vmatpush2.msra.mxu0 0.0
    %3583 = vmatprep.subr.mxu0 0.0
    %3584 = vmatpush2.msra.mxu0 0.0
    %3585 = vmatprep.subr.mxu0 0.0
    %3586 = vmatpush2.msra.mxu0 0.0
    %3587 = vmatprep.subr.mxu0 0.0
    %3588 = vmatpush2.msra.mxu0 0.0
    %3589 = vmatprep.subr.mxu0 0.0
    %3590 = vmatpush2.msra.mxu0 0.0
    %3591 = vmatprep.subr.mxu0 0.0
    %3592 = vmatpush2.msra.mxu0 0.0
    %3593 = vmatprep.subr.mxu0 0.0
    %3594 = vmatpush2.msra.mxu0 0.0
    %3595 = vmatprep.subr.mxu0 0.0
    %3596 = vmatpush2.msra.mxu0 0.0
    %3597 = vmatprep.subr.mxu0 0.0
    %3598 = vmatpush2.msra.mxu0 0.0
    %3599 = vmatprep.mubr.f32.mxu0 0.0
    %3600 = vmatmul.mubr.f32.gmra.mxu0 %v3530
    %v3601 = vpop.f32.mrf.mxu0
    %v3602 = vadd.f32 %v3527, %v3601
    %v3603 = vpop.f32.mrf.mxu0
    %3604 = vmatprep.mubr.f32.mxu0 0.0
    %3605 = vmatmul.mubr.f32.gmra.mxu0 %v3533
    %v3606 = vpop.f32.mrf.mxu0
    %v3607 = vadd.f32 %v3527, %v3606
    %v3608 = vpop.f32.mrf.mxu0
    %3609 = vdwg.mxu0
    %vm3610 = vcmp.gt.f32.partialorder %v3602, 0.0
    %vm3611 = vcmp.gt.f32.partialorder %v3607, 0.0
    %v3612 = vmul.f32 %v3602, 0.2
    %v3613 = vmul.f32 %v3607, 0.2
    %v3614 = vsel %vm3610, %v3602, %v3612
    %v3615 = vsel %vm3611, %v3607, %v3613
    %s3616 = scalar_lea.vmem %s7, 32
    %v3617 = vld [vmem:[%s3616] sm:$0xff]
    %v3618 = vld [vmem:[%s3616 + $0x8] sm:$0xff]
    %v3619 = vld [vmem:[%s3616 + $0x10] sm:$0xff]
    %v3620 = vld [vmem:[%s3616 + $0x18] sm:$0xff]
    %v3622 = vsel %vm96, %v3614, 0
    %v3625 = vsel %vm96, %v3615, 0
    %3627 = vmatprep.subr.mxu0 0.0
    %3628 = vmatpush1.msra.mxu0 0.0
    %3629 = vmatprep.subr.mxu0 0.0
    %3630 = vmatpush1.msra.mxu0 0.0
    %3631 = vmatprep.subr.mxu0 0.0
    %3632 = vmatpush1.msra.mxu0 0.0
    %3633 = vmatprep.subr.mxu0 0.0
    %3634 = vmatpush1.msra.mxu0 0.0
    %3635 = vmatprep.subr.mxu0 0.0
    %3636 = vmatpush1.msra.mxu0 0.0
    %3637 = vmatprep.subr.mxu0 0.0
    %3638 = vmatpush1.msra.mxu0 0.0
    %3639 = vmatprep.subr.mxu0 0.0
    %3640 = vmatpush1.msra.mxu0 0.0
    %3641 = vmatprep.subr.mxu0 0.0
    %3642 = vmatpush1.msra.mxu0 0.0
    %3643 = vmatprep.subr.mxu0 0.0
    %3644 = vmatpush1.msra.mxu0 0.0
    %3645 = vmatprep.subr.mxu0 0.0
    %3646 = vmatpush1.msra.mxu0 0.0
    %3647 = vmatprep.subr.mxu0 0.0
    %3648 = vmatpush1.msra.mxu0 0.0
    %3649 = vmatprep.subr.mxu0 0.0
    %3650 = vmatpush1.msra.mxu0 0.0
    %3651 = vmatprep.subr.mxu0 0.0
    %3652 = vmatpush1.msra.mxu0 %v3620
    %3653 = vmatprep.subr.mxu0 0.0
    %3654 = vmatpush1.msra.mxu0 %v3619
    %3655 = vmatprep.subr.mxu0 0.0
    %3656 = vmatpush1.msra.mxu0 %v3618
    %3657 = vmatprep.subr.mxu0 0.0
    %3658 = vmatpush1.msra.mxu0 %v3617
    %3659 = vmatprep.subr.mxu0 0.0
    %3660 = vmatpush2.msra.mxu0 0.0
    %3661 = vmatprep.subr.mxu0 0.0
    %3662 = vmatpush2.msra.mxu0 0.0
    %3663 = vmatprep.subr.mxu0 0.0
    %3664 = vmatpush2.msra.mxu0 0.0
    %3665 = vmatprep.subr.mxu0 0.0
    %3666 = vmatpush2.msra.mxu0 0.0
    %3667 = vmatprep.subr.mxu0 0.0
    %3668 = vmatpush2.msra.mxu0 0.0
    %3669 = vmatprep.subr.mxu0 0.0
    %3670 = vmatpush2.msra.mxu0 0.0
    %3671 = vmatprep.subr.mxu0 0.0
    %3672 = vmatpush2.msra.mxu0 0.0
    %3673 = vmatprep.subr.mxu0 0.0
    %3674 = vmatpush2.msra.mxu0 0.0
    %3675 = vmatprep.subr.mxu0 0.0
    %3676 = vmatpush2.msra.mxu0 0.0
    %3677 = vmatprep.subr.mxu0 0.0
    %3678 = vmatpush2.msra.mxu0 0.0
    %3679 = vmatprep.subr.mxu0 0.0
    %3680 = vmatpush2.msra.mxu0 0.0
    %3681 = vmatprep.subr.mxu0 0.0
    %3682 = vmatpush2.msra.mxu0 0.0
    %3683 = vmatprep.subr.mxu0 0.0
    %3684 = vmatpush2.msra.mxu0 0.0
    %3685 = vmatprep.subr.mxu0 0.0
    %3686 = vmatpush2.msra.mxu0 0.0
    %3687 = vmatprep.subr.mxu0 0.0
    %3688 = vmatpush2.msra.mxu0 0.0
    %3689 = vmatprep.subr.mxu0 0.0
    %3690 = vmatpush2.msra.mxu0 0.0
    %3691 = vmatprep.mubr.f32.mxu0 0.0
    %3692 = vmatmul.mubr.f32.gmra.mxu0 %v3622
    %v3693 = vpop.f32.mrf.mxu0
    %v3694 = vadd.f32 0.0, %v3693
    %v3695 = vpop.f32.mrf.mxu0
    %3696 = vmatprep.mubr.f32.mxu0 0.0
    %3697 = vmatmul.mubr.f32.gmra.mxu0 %v3625
    %v3698 = vpop.f32.mrf.mxu0
    %v3699 = vadd.f32 0.0, %v3698
    %v3700 = vpop.f32.mrf.mxu0
    %3701 = vdwg.mxu0
    %v3702 = vadd.f32 %v2022, %v3694
    %v3703 = vadd.f32 %v2023, %v3699
    %s3704 = scalar_lea.vmem %s8, 1
    %v3705 = vld [vmem:[%s3704] sm:$0x1]
    %v3707 = vlaneseq
    %v3708 = vshrl.u32 %v3707, 7
    %v3709 = vsub.s32 0, %v3708
    %v3710 = vrot.slane %v3705, %v3709
    %v3712 = vadd.f32 %v3702, %v3710
    %v3713 = vadd.f32 %v3703, %v3710
    %s3714 = scalar_lea.vmem %s9, 1
    %v3715 = vld [vmem:[%s3714] sm:$0x1]
    %s3716 = scalar_lea.vmem %s10, 1
    %v3717 = vld [vmem:[%s3716] sm:$0x1]
    %v3718 = vsel %vm96, %v3712, 0.0
    %3719 = vadd.xlane.f32.xlu0 %v3718
    %v3720 = vpop.xlane.xlu0 %3719
    %v3721 = vsel %vm96, %v3713, 0.0
    %3722 = vadd.xlane.f32.xlu0 %v3721
    %v3723 = vpop.xlane.xlu0 %3722
    %v3724 = vmul.f32 %v3720, %v103
    %v3725 = vmul.f32 %v3723, %v103
    %v3726 = vsub.f32 %v3712, %v3724
    %v3727 = vsub.f32 %v3713, %v3725
    %v3728 = vmul.f32 %v3726, %v3726
    %v3729 = vmul.f32 %v3727, %v3727
    %v3730 = vsel %vm96, %v3728, 0.0
    %3731 = vadd.xlane.f32.xlu0 %v3730
    %v3732 = vpop.xlane.xlu0 %3731
    %v3733 = vsel %vm96, %v3729, 0.0
    %3734 = vadd.xlane.f32.xlu0 %v3733
    %v3735 = vpop.xlane.xlu0 %3734
    %v3736 = vmul.f32 %v3732, %v103
    %v3737 = vmul.f32 %v3735, %v103
    %v3738 = vadd.f32 %v3736, 1e-05
    %v3739 = vadd.f32 %v3737, 1e-05
    %v3740 = vrsqrt.pop %v3738
    %v3741 = vrsqrt.pop %v3739
    %v3742 = vmul.f32 %v3726, %v3740
    %v3743 = vmul.f32 %v3727, %v3741
    %v3745 = vlaneseq
    %v3746 = vshrl.u32 %v3745, 7
    %v3747 = vsub.s32 0, %v3746
    %v3748 = vrot.slane %v3715, %v3747
    %v3750 = vmul.f32 %v3742, %v3748
    %v3751 = vmul.f32 %v3743, %v3748
    %v3753 = vlaneseq
    %v3754 = vshrl.u32 %v3753, 7
    %v3755 = vsub.s32 0, %v3754
    %v3756 = vrot.slane %v3717, %v3755
    %v3758 = vadd.f32 %v3750, %v3756
    %v3759 = vadd.f32 %v3751, %v3756
    %s3760 = scalar_lea.vmem [#allocation7], 32
    %v3761 = vld [vmem:[%s3760] sm:$0xff]
    %v3762 = vld [vmem:[%s3760 + $0x8] sm:$0xff]
    %v3763 = vld [vmem:[%s3760 + $0x10] sm:$0xff]
    %v3764 = vld [vmem:[%s3760 + $0x18] sm:$0xff]
    %s3765 = scalar_lea.vmem %s12, 1
    %v3766 = vld [vmem:[%s3765] sm:$0x1]
    %v3768 = vlaneseq
    %v3769 = vshrl.u32 %v3768, 7
    %v3770 = vsub.s32 0, %v3769
    %v3771 = vrot.slane %v3766, %v3770
    %v3774 = vsel %vm96, %v3758, 0
    %v3777 = vsel %vm96, %v3759, 0
    %3779 = vmatprep.subr.mxu0 0.0
    %3780 = vmatpush1.msra.mxu0 0.0
    %3781 = vmatprep.subr.mxu0 0.0
    %3782 = vmatpush1.msra.mxu0 0.0
    %3783 = vmatprep.subr.mxu0 0.0
    %3784 = vmatpush1.msra.mxu0 0.0
    %3785 = vmatprep.subr.mxu0 0.0
    %3786 = vmatpush1.msra.mxu0 0.0
    %3787 = vmatprep.subr.mxu0 0.0
    %3788 = vmatpush1.msra.mxu0 0.0
    %3789 = vmatprep.subr.mxu0 0.0
    %3790 = vmatpush1.msra.mxu0 0.0
    %3791 = vmatprep.subr.mxu0 0.0
    %3792 = vmatpush1.msra.mxu0 0.0
    %3793 = vmatprep.subr.mxu0 0.0
    %3794 = vmatpush1.msra.mxu0 0.0
    %3795 = vmatprep.subr.mxu0 0.0
    %3796 = vmatpush1.msra.mxu0 0.0
    %3797 = vmatprep.subr.mxu0 0.0
    %3798 = vmatpush1.msra.mxu0 0.0
    %3799 = vmatprep.subr.mxu0 0.0
    %3800 = vmatpush1.msra.mxu0 0.0
    %3801 = vmatprep.subr.mxu0 0.0
    %3802 = vmatpush1.msra.mxu0 0.0
    %3803 = vmatprep.subr.mxu0 0.0
    %3804 = vmatpush1.msra.mxu0 %v3764
    %3805 = vmatprep.subr.mxu0 0.0
    %3806 = vmatpush1.msra.mxu0 %v3763
    %3807 = vmatprep.subr.mxu0 0.0
    %3808 = vmatpush1.msra.mxu0 %v3762
    %3809 = vmatprep.subr.mxu0 0.0
    %3810 = vmatpush1.msra.mxu0 %v3761
    %3811 = vmatprep.subr.mxu0 0.0
    %3812 = vmatpush2.msra.mxu0 0.0
    %3813 = vmatprep.subr.mxu0 0.0
    %3814 = vmatpush2.msra.mxu0 0.0
    %3815 = vmatprep.subr.mxu0 0.0
    %3816 = vmatpush2.msra.mxu0 0.0
    %3817 = vmatprep.subr.mxu0 0.0
    %3818 = vmatpush2.msra.mxu0 0.0
    %3819 = vmatprep.subr.mxu0 0.0
    %3820 = vmatpush2.msra.mxu0 0.0
    %3821 = vmatprep.subr.mxu0 0.0
    %3822 = vmatpush2.msra.mxu0 0.0
    %3823 = vmatprep.subr.mxu0 0.0
    %3824 = vmatpush2.msra.mxu0 0.0
    %3825 = vmatprep.subr.mxu0 0.0
    %3826 = vmatpush2.msra.mxu0 0.0
    %3827 = vmatprep.subr.mxu0 0.0
    %3828 = vmatpush2.msra.mxu0 0.0
    %3829 = vmatprep.subr.mxu0 0.0
    %3830 = vmatpush2.msra.mxu0 0.0
    %3831 = vmatprep.subr.mxu0 0.0
    %3832 = vmatpush2.msra.mxu0 0.0
    %3833 = vmatprep.subr.mxu0 0.0
    %3834 = vmatpush2.msra.mxu0 0.0
    %3835 = vmatprep.subr.mxu0 0.0
    %3836 = vmatpush2.msra.mxu0 0.0
    %3837 = vmatprep.subr.mxu0 0.0
    %3838 = vmatpush2.msra.mxu0 0.0
    %3839 = vmatprep.subr.mxu0 0.0
    %3840 = vmatpush2.msra.mxu0 0.0
    %3841 = vmatprep.subr.mxu0 0.0
    %3842 = vmatpush2.msra.mxu0 0.0
    %3843 = vmatprep.mubr.f32.mxu0 0.0
    %3844 = vmatmul.mubr.f32.gmra.mxu0 %v3774
    %v3845 = vpop.f32.mrf.mxu0
    %v3846 = vadd.f32 %v3771, %v3845
    %v3847 = vpop.f32.mrf.mxu0
    %3848 = vmatprep.mubr.f32.mxu0 0.0
    %3849 = vmatmul.mubr.f32.gmra.mxu0 %v3777
    %v3850 = vpop.f32.mrf.mxu0
    %v3851 = vadd.f32 %v3771, %v3850
    %v3852 = vpop.f32.mrf.mxu0
    %3853 = vdwg.mxu0
    %vm3854 = vcmp.gt.f32.partialorder %v3846, 0.0
    %vm3855 = vcmp.gt.f32.partialorder %v3851, 0.0
    %v3856 = vmul.f32 %v3846, 0.2
    %v3857 = vmul.f32 %v3851, 0.2
    %v3858 = vsel %vm3854, %v3846, %v3856
    %v3859 = vsel %vm3855, %v3851, %v3857
    %s3860 = scalar_lea.vmem %s13, 64
    %v3861 = vld [vmem:[%s3860] sm:$0xff]
    %v3862 = vld [vmem:[%s3860 + $0x8] sm:$0xff]
    %v3863 = vld [vmem:[%s3860 + $0x10] sm:$0xff]
    %v3864 = vld [vmem:[%s3860 + $0x18] sm:$0xff]
    %v3865 = vld [vmem:[%s3860 + $0x20] sm:$0xff]
    %v3866 = vld [vmem:[%s3860 + $0x28] sm:$0xff]
    %v3867 = vld [vmem:[%s3860 + $0x30] sm:$0xff]
    %v3868 = vld [vmem:[%s3860 + $0x38] sm:$0xff]
    %v3870 = vsel %vm1931, %v3858, 0
    %v3873 = vsel %vm1931, %v3859, 0
    %3875 = vmatprep.subr.mxu0 0.0
    %3876 = vmatpush1.msra.mxu0 0.0
    %3877 = vmatprep.subr.mxu0 0.0
    %3878 = vmatpush1.msra.mxu0 0.0
    %3879 = vmatprep.subr.mxu0 0.0
    %3880 = vmatpush1.msra.mxu0 0.0
    %3881 = vmatprep.subr.mxu0 0.0
    %3882 = vmatpush1.msra.mxu0 0.0
    %3883 = vmatprep.subr.mxu0 0.0
    %3884 = vmatpush1.msra.mxu0 0.0
    %3885 = vmatprep.subr.mxu0 0.0
    %3886 = vmatpush1.msra.mxu0 0.0
    %3887 = vmatprep.subr.mxu0 0.0
    %3888 = vmatpush1.msra.mxu0 0.0
    %3889 = vmatprep.subr.mxu0 0.0
    %3890 = vmatpush1.msra.mxu0 0.0
    %3891 = vmatprep.subr.mxu0 0.0
    %3892 = vmatpush1.msra.mxu0 %v3868
    %3893 = vmatprep.subr.mxu0 0.0
    %3894 = vmatpush1.msra.mxu0 %v3867
    %3895 = vmatprep.subr.mxu0 0.0
    %3896 = vmatpush1.msra.mxu0 %v3866
    %3897 = vmatprep.subr.mxu0 0.0
    %3898 = vmatpush1.msra.mxu0 %v3865
    %3899 = vmatprep.subr.mxu0 0.0
    %3900 = vmatpush1.msra.mxu0 %v3864
    %3901 = vmatprep.subr.mxu0 0.0
    %3902 = vmatpush1.msra.mxu0 %v3863
    %3903 = vmatprep.subr.mxu0 0.0
    %3904 = vmatpush1.msra.mxu0 %v3862
    %3905 = vmatprep.subr.mxu0 0.0
    %3906 = vmatpush1.msra.mxu0 %v3861
    %3907 = vmatprep.subr.mxu0 0.0
    %3908 = vmatpush2.msra.mxu0 0.0
    %3909 = vmatprep.subr.mxu0 0.0
    %3910 = vmatpush2.msra.mxu0 0.0
    %3911 = vmatprep.subr.mxu0 0.0
    %3912 = vmatpush2.msra.mxu0 0.0
    %3913 = vmatprep.subr.mxu0 0.0
    %3914 = vmatpush2.msra.mxu0 0.0
    %3915 = vmatprep.subr.mxu0 0.0
    %3916 = vmatpush2.msra.mxu0 0.0
    %3917 = vmatprep.subr.mxu0 0.0
    %3918 = vmatpush2.msra.mxu0 0.0
    %3919 = vmatprep.subr.mxu0 0.0
    %3920 = vmatpush2.msra.mxu0 0.0
    %3921 = vmatprep.subr.mxu0 0.0
    %3922 = vmatpush2.msra.mxu0 0.0
    %3923 = vmatprep.subr.mxu0 0.0
    %3924 = vmatpush2.msra.mxu0 0.0
    %3925 = vmatprep.subr.mxu0 0.0
    %3926 = vmatpush2.msra.mxu0 0.0
    %3927 = vmatprep.subr.mxu0 0.0
    %3928 = vmatpush2.msra.mxu0 0.0
    %3929 = vmatprep.subr.mxu0 0.0
    %3930 = vmatpush2.msra.mxu0 0.0
    %3931 = vmatprep.subr.mxu0 0.0
    %3932 = vmatpush2.msra.mxu0 0.0
    %3933 = vmatprep.subr.mxu0 0.0
    %3934 = vmatpush2.msra.mxu0 0.0
    %3935 = vmatprep.subr.mxu0 0.0
    %3936 = vmatpush2.msra.mxu0 0.0
    %3937 = vmatprep.subr.mxu0 0.0
    %3938 = vmatpush2.msra.mxu0 0.0
    %3939 = vmatprep.mubr.f32.mxu0 0.0
    %3940 = vmatmul.mubr.f32.gmra.mxu0 %v3870
    %v3941 = vpop.f32.mrf.mxu0
    %v3942 = vadd.f32 0.0, %v3941
    %v3943 = vpop.f32.mrf.mxu0
    %3944 = vmatprep.mubr.f32.mxu0 0.0
    %3945 = vmatmul.mubr.f32.gmra.mxu0 %v3873
    %v3946 = vpop.f32.mrf.mxu0
    %v3947 = vadd.f32 0.0, %v3946
    %v3948 = vpop.f32.mrf.mxu0
    %3949 = vdwg.mxu0
    %v3950 = vadd.f32 %v3712, %v3942
    %v3951 = vadd.f32 %v3713, %v3947
    %s3952 = scalar_lea.vmem %s14, 1
    %v3953 = vld [vmem:[%s3952] sm:$0x1]
    %v3955 = vlaneseq
    %v3956 = vshrl.u32 %v3955, 7
    %v3957 = vsub.s32 0, %v3956
    %v3958 = vrot.slane %v3953, %v3957
    %v3960 = vadd.f32 %v3950, %v3958
    %v3961 = vadd.f32 %v3951, %v3958
    %3962 = vst.msk [vmem:[#allocation8] sm:$0xff] %vm96, %v3960
    %3963 = vst.msk [vmem:[#allocation8 + $0x8] sm:$0xff] %vm96, %v3961
    // Predicated region
    $region74: #{tpu_custom_call.1} parent=1 // pred_check
      _
    $region75: #{tpu_custom_call.1} parent=1 // pred_check_branch
      %3965 = sbr.rel (0) target = $region77
    $region76: #{tpu_custom_call.1} parent=1 // pred_region
      %s3967 = ssub.s32 256, 256
      %3968 = vsyncadd [#allocation4], %s3967
      %s3969 = sshll.u32 [#allocation8], 4
      %s3970 = int_to_ptr.vmem [resolvable:$true] %s3969
      %3975 = dma.vmem_to_hbm [thread:$0]  %s3970, 256, %s15, [#allocation4], 128, 128, 8
    $region77: #{tpu_custom_call.1} parent=1 // pred_fallthru
      _
    // Predicated region
    $region78: #{tpu_custom_call.1} parent=1 // pred_check
      _
    $region79: #{tpu_custom_call.1} parent=1 // pred_check_branch
      %3977 = sbr.rel (0) target = $region81
    $region80: #{tpu_custom_call.1} parent=1 // pred_region
      %3978 = dma.done [#allocation4], 256
    $region81: #{tpu_custom_call.1} parent=1 // pred_fallthru
      _
    %3979 = vsyncpa [#allocation3], 1
    %3980 = vsyncpa [#allocation6], 1
    %3981 = vsyncpa [#allocation4], 1

</llo_original>
